<compile_context>
chip_gen: v7x
topology: tpu7x:2x2x1
jax: 0.10.0
libtpu: 0.0.40
codegen_flags: <defaults>
</compile_context>

<pallas_src>
import functools

import jax
import jax.numpy as jnp
from jax.experimental import pallas as pl
from jax.experimental.pallas import tpu as pltpu


def _spatial_attn_kernel(x_ref, w_ref, o_ref, slab_ref, *,
                         Nb, C, H, W, K, P, ROW_OFF):
    """One grid step: Nb batch elements.

    x_ref:    VMEM (Nb, C, H, W)           input block
    w_ref:    SMEM (2*K*K + 1,)            conv weight (ci, kh, kw) row-major, then bias
    o_ref:    VMEM (Nb, H, W)              output attention maps
    slab_ref: VMEM (2*K, H + 2*ROW_OFF, W) f32 scratch with
              slab_ref[ci*K + kw, ROW_OFF + r, c] = feat[ci, r, c + kw - P]
              (zero where out of range), so the 7x7 conv only ever needs
              sublane-offset loads (free addressing, no lane rotates).
    """
    bias = w_ref[2 * K * K]

    # Refresh the zero row-halo (rows [0, ROW_OFF) and [ROW_OFF+H, end)); the
    # interior rows are fully overwritten for every batch element below.
    # Done every grid step (not just step 0) so it stays correct when the
    # "parallel" batch axis is sharded across TensorCores.
    halo = jnp.zeros((2 * K, ROW_OFF, W), jnp.float32)
    slab_ref[:, :ROW_OFF, :] = halo
    slab_ref[:, ROW_OFF + H:, :] = halo

    col_pad = jnp.zeros((H, P), jnp.float32)

    for nb in range(Nb):                # static unroll: Nb is small
        # ---- channel mean / max, one channel at a time (bounded vreg pressure,
        # ---- no full (C, H, W) f32 intermediate) ----
        x0 = x_ref[nb, 0, :, :].astype(jnp.float32)
        csum = x0
        cmax = x0
        for c in range(1, C):           # TODO(synk): for very large C, switch to lax.fori_loop
            xc = x_ref[nb, c, :, :].astype(jnp.float32)
            csum = csum + xc
            cmax = jnp.maximum(cmax, xc)
        cavg = csum * (1.0 / C)

        # ---- build the 2*K lane-shifted slabs: one lane rotate per (ci, kw),
        # ---- stored with a sublane-aligned (offset 8) full-width store ----
        for ci, feat in enumerate((cavg, cmax)):
            featw = jnp.concatenate([col_pad, feat, col_pad], axis=1)  # (H, W + 2P)
            for kw in range(K):
                data = feat if kw == P else featw[:, kw:kw + W]
                slab_ref[ci * K + kw, ROW_OFF:ROW_OFF + H, :] = data

        # ---- 7x7 conv: sublane-offset loads + vector-scalar MACs (VPU only) ----
        acc = jnp.full((H, W), bias, dtype=jnp.float32)
        for ci in range(2):
            for kw in range(K):
                idx = ci * K + kw
                for kh in range(K):
                    wv = w_ref[ci * K * K + kh * K + kw]     # scalar from SMEM
                    r0 = ROW_OFF - P + kh                    # sublane offset only
                    acc = acc + wv * slab_ref[idx, r0:r0 + H, :]

        o_ref[nb, :, :] = jax.nn.sigmoid(acc).astype(o_ref.dtype)


def _pick_block_n(n, max_nb=8):
    """Largest divisor of n that is <= max_nb (amortizes per-step overhead)."""
    best = 1
    for cand in range(1, min(n, max_nb) + 1):
        if n % cand == 0:
            best = cand
    return best


def spatial_attention(x, weight, bias, kernel_size=7, block_n=None):
    """x: (N, C, H, W); weight: (1, 2, K, K); bias: (1,). Returns (N, 1, H, W)."""
    N, C, H, W = x.shape
    K = kernel_size
    P = K // 2
    ROW_OFF = 8                         # sublane-aligned row halo (multiple of 8, >= P)
    assert ROW_OFF >= P

    if block_n is None:
        block_n = _pick_block_n(N)
    assert N % block_n == 0

    # Flattened conv weight (ci, kh, kw) row-major with the bias appended; SMEM.
    w_all = jnp.concatenate([weight.reshape(-1).astype(jnp.float32),
                             bias.reshape(-1).astype(jnp.float32)])

    kernel = functools.partial(_spatial_attn_kernel, Nb=block_n, C=C, H=H, W=W,
                               K=K, P=P, ROW_OFF=ROW_OFF)

    out = pl.pallas_call(
        kernel,
        out_shape=jax.ShapeDtypeStruct((N, H, W), x.dtype),
        grid_spec=pltpu.PrefetchScalarGridSpec(
            num_scalar_prefetch=0,
            grid=(N // block_n,),
            in_specs=[
                pl.BlockSpec((block_n, C, H, W), lambda n: (n, 0, 0, 0)),
                pl.BlockSpec(memory_space=pltpu.MemorySpace.SMEM),
            ],
            out_specs=pl.BlockSpec((block_n, H, W), lambda n: (n, 0, 0)),
            scratch_shapes=[
                pltpu.VMEM((2 * K, H + 2 * ROW_OFF, W), jnp.float32)],
        ),
        compiler_params=pltpu.CompilerParams(
            dimension_semantics=("parallel",)),
    )(x, w_all)

    # Reshape back to NCHW (free metadata op in the wrapper).
    return out.reshape(N, 1, H, W)


def _reference(x, weight, bias):
    avg = jnp.mean(x, axis=1, keepdims=True)
    mx = jnp.max(x, axis=1, keepdims=True)
    f = jnp.concatenate([avg, mx], axis=1)
    y = jax.lax.conv_general_dilated(
        f, weight, window_strides=(1, 1), padding=[(3, 3), (3, 3)],
        dimension_numbers=("NCHW", "OIHW", "NCHW"))
    return jax.nn.sigmoid(y + bias.reshape(1, 1, 1, 1))


if __name__ == "__main__":
    key = jax.random.PRNGKey(0)
    kx, kw, kb = jax.random.split(key, 3)

    N, C, H, W = 2, 4, 16, 16
    K = 7
    x = jax.random.normal(kx, (N, C, H, W), dtype=jnp.float32)

    # Deterministic Conv2d(2, 1, 7, padding=3) params, PyTorch-style uniform init.
    fan_in = 2 * K * K
    bound = 1.0 / jnp.sqrt(fan_in)
    weight = jax.random.uniform(kw, (1, 2, K, K), jnp.float32, -bound, bound)
    bias = jax.random.uniform(kb, (1,), jnp.float32, -bound, bound)

    out = spatial_attention(x, weight, bias, kernel_size=K)
    out = jax.block_until_ready(out)

    ref = _reference(x, weight, bias)
    assert out.shape == (N, 1, H, W), out.shape
    assert jnp.allclose(out, ref, atol=1e-5, rtol=1e-5), float(
        jnp.max(jnp.abs(out - ref)))

    print("KERNEL_OK")
</pallas_src>

<mosaic_0001>
module attributes {stable_mosaic.version = 11 : i64} {
  func.func @_spatial_attn_kernel(%arg0: i32, %arg1: memref<2x4x16x16xf32, #tpu.memory_space<vmem>>, %arg2: memref<99xf32, #tpu.memory_space<smem>>, %arg3: memref<2x16x16xf32, #tpu.memory_space<vmem>>, %arg4: memref<14x32x16xf32, #tpu.memory_space<vmem>>) attributes {dimension_semantics = [#tpu.dimension_semantics<parallel>], iteration_bounds = array<i64: 1>, scalar_prefetch = 0 : i64, scratch_operands = 1 : i64, tpu.core_type = #tpu.core_type<tc>, window_params = [{transform_indices = @transform_0, window_bounds = array<i64: 2, 4, 16, 16>}, {transform_indices = @transform_1, window_bounds = array<i64: 99>}, {transform_indices = @transform_2, window_bounds = array<i64: 2, 16, 16>}]} {
    %c98 = arith.constant 98 : index
    %0 = memref.load %arg2[%c98] : memref<99xf32, #tpu.memory_space<smem>>
    %cst = arith.constant 0.000000e+00 : f32
    %1 = vector.broadcast %cst : f32 to vector<14x8x16xf32>
    %c0 = arith.constant 0 : index
    %c0_0 = arith.constant 0 : index
    %c0_1 = arith.constant 0 : index
    %2 = vector.load %arg4[%c0, %c0_0, %c0_1] : memref<14x32x16xf32, #tpu.memory_space<vmem>>, vector<14x8x16xf32>
    tpu.vector_store %arg4[%c0, %c0_0, %c0_1], %1 {strides = array<i32>} : memref<14x32x16xf32, #tpu.memory_space<vmem>>, vector<14x8x16xf32>,
    %c0_2 = arith.constant 0 : index
    %c24 = arith.constant 24 : index
    %c0_3 = arith.constant 0 : index
    %3 = vector.load %arg4[%c0_2, %c24, %c0_3] : memref<14x32x16xf32, #tpu.memory_space<vmem>>, vector<14x8x16xf32>
    tpu.vector_store %arg4[%c0_2, %c24, %c0_3], %1 {strides = array<i32>} : memref<14x32x16xf32, #tpu.memory_space<vmem>>, vector<14x8x16xf32>,
    %cst_4 = arith.constant 0.000000e+00 : f32
    %4 = vector.broadcast %cst_4 : f32 to vector<16x3xf32>
    %c0_5 = arith.constant 0 : index
    %c0_6 = arith.constant 0 : index
    %c0_7 = arith.constant 0 : index
    %c0_8 = arith.constant 0 : index
    %5 = vector.load %arg1[%c0_5, %c0_6, %c0_7, %c0_8] : memref<2x4x16x16xf32, #tpu.memory_space<vmem>>, vector<1x1x16x16xf32>
    %6 = vector.shape_cast %5 : vector<1x1x16x16xf32> to vector<16x16xf32>
    %c0_9 = arith.constant 0 : index
    %c1 = arith.constant 1 : index
    %c0_10 = arith.constant 0 : index
    %c0_11 = arith.constant 0 : index
    %7 = vector.load %arg1[%c0_9, %c1, %c0_10, %c0_11] : memref<2x4x16x16xf32, #tpu.memory_space<vmem>>, vector<1x1x16x16xf32>
    %8 = vector.shape_cast %7 : vector<1x1x16x16xf32> to vector<16x16xf32>
    %9 = arith.addf %6, %8 : vector<16x16xf32>
    %10 = arith.maximumf %6, %8 : vector<16x16xf32>
    %c0_12 = arith.constant 0 : index
    %c2 = arith.constant 2 : index
    %c0_13 = arith.constant 0 : index
    %c0_14 = arith.constant 0 : index
    %11 = vector.load %arg1[%c0_12, %c2, %c0_13, %c0_14] : memref<2x4x16x16xf32, #tpu.memory_space<vmem>>, vector<1x1x16x16xf32>
    %12 = vector.shape_cast %11 : vector<1x1x16x16xf32> to vector<16x16xf32>
    %13 = arith.addf %9, %12 : vector<16x16xf32>
    %14 = arith.maximumf %10, %12 : vector<16x16xf32>
    %c0_15 = arith.constant 0 : index
    %c3 = arith.constant 3 : index
    %c0_16 = arith.constant 0 : index
    %c0_17 = arith.constant 0 : index
    %15 = vector.load %arg1[%c0_15, %c3, %c0_16, %c0_17] : memref<2x4x16x16xf32, #tpu.memory_space<vmem>>, vector<1x1x16x16xf32>
    %16 = vector.shape_cast %15 : vector<1x1x16x16xf32> to vector<16x16xf32>
    %17 = arith.addf %13, %16 : vector<16x16xf32>
    %18 = arith.maximumf %14, %16 : vector<16x16xf32>
    %cst_18 = arith.constant 2.500000e-01 : f32
    %19 = vector.broadcast %cst_18 : f32 to vector<16x16xf32>
    %20 = arith.mulf %17, %19 : vector<16x16xf32>
    %21 = tpu.concatenate %4, %20, %4 in 1 : vector<16x3xf32>, vector<16x16xf32>, vector<16x3xf32> -> vector<16x22xf32>
    %22 = vector.extract_strided_slice %21 {offsets = [0, 0], sizes = [16, 16], strides = [1, 1]} : vector<16x22xf32> to vector<16x16xf32>
    %c0_19 = arith.constant 0 : index
    %c8 = arith.constant 8 : index
    %c0_20 = arith.constant 0 : index
    %23 = vector.load %arg4[%c0_19, %c8, %c0_20] : memref<14x32x16xf32, #tpu.memory_space<vmem>>, vector<1x16x16xf32>
    %24 = vector.shape_cast %23 : vector<1x16x16xf32> to vector<16x16xf32>
    %25 = vector.shape_cast %22 : vector<16x16xf32> to vector<1x16x16xf32>
    tpu.vector_store %arg4[%c0_19, %c8, %c0_20], %25 {strides = array<i32>} : memref<14x32x16xf32, #tpu.memory_space<vmem>>, vector<1x16x16xf32>,
    %26 = vector.extract_strided_slice %21 {offsets = [0, 1], sizes = [16, 16], strides = [1, 1]} : vector<16x22xf32> to vector<16x16xf32>
    %c1_21 = arith.constant 1 : index
    %c8_22 = arith.constant 8 : index
    %c0_23 = arith.constant 0 : index
    %27 = vector.load %arg4[%c1_21, %c8_22, %c0_23] : memref<14x32x16xf32, #tpu.memory_space<vmem>>, vector<1x16x16xf32>
    %28 = vector.shape_cast %27 : vector<1x16x16xf32> to vector<16x16xf32>
    %29 = vector.shape_cast %26 : vector<16x16xf32> to vector<1x16x16xf32>
    tpu.vector_store %arg4[%c1_21, %c8_22, %c0_23], %29 {strides = array<i32>} : memref<14x32x16xf32, #tpu.memory_space<vmem>>, vector<1x16x16xf32>,
    %30 = vector.extract_strided_slice %21 {offsets = [0, 2], sizes = [16, 16], strides = [1, 1]} : vector<16x22xf32> to vector<16x16xf32>
    %c2_24 = arith.constant 2 : index
    %c8_25 = arith.constant 8 : index
    %c0_26 = arith.constant 0 : index
    %31 = vector.load %arg4[%c2_24, %c8_25, %c0_26] : memref<14x32x16xf32, #tpu.memory_space<vmem>>, vector<1x16x16xf32>
    %32 = vector.shape_cast %31 : vector<1x16x16xf32> to vector<16x16xf32>
    %33 = vector.shape_cast %30 : vector<16x16xf32> to vector<1x16x16xf32>
    tpu.vector_store %arg4[%c2_24, %c8_25, %c0_26], %33 {strides = array<i32>} : memref<14x32x16xf32, #tpu.memory_space<vmem>>, vector<1x16x16xf32>,
    %c3_27 = arith.constant 3 : index
    %c8_28 = arith.constant 8 : index
    %c0_29 = arith.constant 0 : index
    %34 = vector.load %arg4[%c3_27, %c8_28, %c0_29] : memref<14x32x16xf32, #tpu.memory_space<vmem>>, vector<1x16x16xf32>
    %35 = vector.shape_cast %34 : vector<1x16x16xf32> to vector<16x16xf32>
    %36 = vector.shape_cast %20 : vector<16x16xf32> to vector<1x16x16xf32>
    tpu.vector_store %arg4[%c3_27, %c8_28, %c0_29], %36 {strides = array<i32>} : memref<14x32x16xf32, #tpu.memory_space<vmem>>, vector<1x16x16xf32>,
    %37 = vector.extract_strided_slice %21 {offsets = [0, 4], sizes = [16, 16], strides = [1, 1]} : vector<16x22xf32> to vector<16x16xf32>
    %c4 = arith.constant 4 : index
    %c8_30 = arith.constant 8 : index
    %c0_31 = arith.constant 0 : index
    %38 = vector.load %arg4[%c4, %c8_30, %c0_31] : memref<14x32x16xf32, #tpu.memory_space<vmem>>, vector<1x16x16xf32>
    %39 = vector.shape_cast %38 : vector<1x16x16xf32> to vector<16x16xf32>
    %40 = vector.shape_cast %37 : vector<16x16xf32> to vector<1x16x16xf32>
    tpu.vector_store %arg4[%c4, %c8_30, %c0_31], %40 {strides = array<i32>} : memref<14x32x16xf32, #tpu.memory_space<vmem>>, vector<1x16x16xf32>,
    %41 = vector.extract_strided_slice %21 {offsets = [0, 5], sizes = [16, 16], strides = [1, 1]} : vector<16x22xf32> to vector<16x16xf32>
    %c5 = arith.constant 5 : index
    %c8_32 = arith.constant 8 : index
    %c0_33 = arith.constant 0 : index
    %42 = vector.load %arg4[%c5, %c8_32, %c0_33] : memref<14x32x16xf32, #tpu.memory_space<vmem>>, vector<1x16x16xf32>
    %43 = vector.shape_cast %42 : vector<1x16x16xf32> to vector<16x16xf32>
    %44 = vector.shape_cast %41 : vector<16x16xf32> to vector<1x16x16xf32>
    tpu.vector_store %arg4[%c5, %c8_32, %c0_33], %44 {strides = array<i32>} : memref<14x32x16xf32, #tpu.memory_space<vmem>>, vector<1x16x16xf32>,
    %45 = vector.extract_strided_slice %21 {offsets = [0, 6], sizes = [16, 16], strides = [1, 1]} : vector<16x22xf32> to vector<16x16xf32>
    %c6 = arith.constant 6 : index
    %c8_34 = arith.constant 8 : index
    %c0_35 = arith.constant 0 : index
    %46 = vector.load %arg4[%c6, %c8_34, %c0_35] : memref<14x32x16xf32, #tpu.memory_space<vmem>>, vector<1x16x16xf32>
    %47 = vector.shape_cast %46 : vector<1x16x16xf32> to vector<16x16xf32>
    %48 = vector.shape_cast %45 : vector<16x16xf32> to vector<1x16x16xf32>
    tpu.vector_store %arg4[%c6, %c8_34, %c0_35], %48 {strides = array<i32>} : memref<14x32x16xf32, #tpu.memory_space<vmem>>, vector<1x16x16xf32>,
    %49 = tpu.concatenate %4, %18, %4 in 1 : vector<16x3xf32>, vector<16x16xf32>, vector<16x3xf32> -> vector<16x22xf32>
    %50 = vector.extract_strided_slice %49 {offsets = [0, 0], sizes = [16, 16], strides = [1, 1]} : vector<16x22xf32> to vector<16x16xf32>
    %c7 = arith.constant 7 : index
    %c8_36 = arith.constant 8 : index
    %c0_37 = arith.constant 0 : index
    %51 = vector.load %arg4[%c7, %c8_36, %c0_37] : memref<14x32x16xf32, #tpu.memory_space<vmem>>, vector<1x16x16xf32>
    %52 = vector.shape_cast %51 : vector<1x16x16xf32> to vector<16x16xf32>
    %53 = vector.shape_cast %50 : vector<16x16xf32> to vector<1x16x16xf32>
    tpu.vector_store %arg4[%c7, %c8_36, %c0_37], %53 {strides = array<i32>} : memref<14x32x16xf32, #tpu.memory_space<vmem>>, vector<1x16x16xf32>,
    %54 = vector.extract_strided_slice %49 {offsets = [0, 1], sizes = [16, 16], strides = [1, 1]} : vector<16x22xf32> to vector<16x16xf32>
    %c8_38 = arith.constant 8 : index
    %c8_39 = arith.constant 8 : index
    %c0_40 = arith.constant 0 : index
    %55 = vector.load %arg4[%c8_38, %c8_39, %c0_40] : memref<14x32x16xf32, #tpu.memory_space<vmem>>, vector<1x16x16xf32>
    %56 = vector.shape_cast %55 : vector<1x16x16xf32> to vector<16x16xf32>
    %57 = vector.shape_cast %54 : vector<16x16xf32> to vector<1x16x16xf32>
    tpu.vector_store %arg4[%c8_38, %c8_39, %c0_40], %57 {strides = array<i32>} : memref<14x32x16xf32, #tpu.memory_space<vmem>>, vector<1x16x16xf32>,
    %58 = vector.extract_strided_slice %49 {offsets = [0, 2], sizes = [16, 16], strides = [1, 1]} : vector<16x22xf32> to vector<16x16xf32>
    %c9 = arith.constant 9 : index
    %c8_41 = arith.constant 8 : index
    %c0_42 = arith.constant 0 : index
    %59 = vector.load %arg4[%c9, %c8_41, %c0_42] : memref<14x32x16xf32, #tpu.memory_space<vmem>>, vector<1x16x16xf32>
    %60 = vector.shape_cast %59 : vector<1x16x16xf32> to vector<16x16xf32>
    %61 = vector.shape_cast %58 : vector<16x16xf32> to vector<1x16x16xf32>
    tpu.vector_store %arg4[%c9, %c8_41, %c0_42], %61 {strides = array<i32>} : memref<14x32x16xf32, #tpu.memory_space<vmem>>, vector<1x16x16xf32>,
    %c10 = arith.constant 10 : index
    %c8_43 = arith.constant 8 : index
    %c0_44 = arith.constant 0 : index
    %62 = vector.load %arg4[%c10, %c8_43, %c0_44] : memref<14x32x16xf32, #tpu.memory_space<vmem>>, vector<1x16x16xf32>
    %63 = vector.shape_cast %62 : vector<1x16x16xf32> to vector<16x16xf32>
    %64 = vector.shape_cast %18 : vector<16x16xf32> to vector<1x16x16xf32>
    tpu.vector_store %arg4[%c10, %c8_43, %c0_44], %64 {strides = array<i32>} : memref<14x32x16xf32, #tpu.memory_space<vmem>>, vector<1x16x16xf32>,
    %65 = vector.extract_strided_slice %49 {offsets = [0, 4], sizes = [16, 16], strides = [1, 1]} : vector<16x22xf32> to vector<16x16xf32>
    %c11 = arith.constant 11 : index
    %c8_45 = arith.constant 8 : index
    %c0_46 = arith.constant 0 : index
    %66 = vector.load %arg4[%c11, %c8_45, %c0_46] : memref<14x32x16xf32, #tpu.memory_space<vmem>>, vector<1x16x16xf32>
    %67 = vector.shape_cast %66 : vector<1x16x16xf32> to vector<16x16xf32>
    %68 = vector.shape_cast %65 : vector<16x16xf32> to vector<1x16x16xf32>
    tpu.vector_store %arg4[%c11, %c8_45, %c0_46], %68 {strides = array<i32>} : memref<14x32x16xf32, #tpu.memory_space<vmem>>, vector<1x16x16xf32>,
    %69 = vector.extract_strided_slice %49 {offsets = [0, 5], sizes = [16, 16], strides = [1, 1]} : vector<16x22xf32> to vector<16x16xf32>
    %c12 = arith.constant 12 : index
    %c8_47 = arith.constant 8 : index
    %c0_48 = arith.constant 0 : index
    %70 = vector.load %arg4[%c12, %c8_47, %c0_48] : memref<14x32x16xf32, #tpu.memory_space<vmem>>, vector<1x16x16xf32>
    %71 = vector.shape_cast %70 : vector<1x16x16xf32> to vector<16x16xf32>
    %72 = vector.shape_cast %69 : vector<16x16xf32> to vector<1x16x16xf32>
    tpu.vector_store %arg4[%c12, %c8_47, %c0_48], %72 {strides = array<i32>} : memref<14x32x16xf32, #tpu.memory_space<vmem>>, vector<1x16x16xf32>,
    %73 = vector.extract_strided_slice %49 {offsets = [0, 6], sizes = [16, 16], strides = [1, 1]} : vector<16x22xf32> to vector<16x16xf32>
    %c13 = arith.constant 13 : index
    %c8_49 = arith.constant 8 : index
    %c0_50 = arith.constant 0 : index
    %74 = vector.load %arg4[%c13, %c8_49, %c0_50] : memref<14x32x16xf32, #tpu.memory_space<vmem>>, vector<1x16x16xf32>
    %75 = vector.shape_cast %74 : vector<1x16x16xf32> to vector<16x16xf32>
    %76 = vector.shape_cast %73 : vector<16x16xf32> to vector<1x16x16xf32>
    tpu.vector_store %arg4[%c13, %c8_49, %c0_50], %76 {strides = array<i32>} : memref<14x32x16xf32, #tpu.memory_space<vmem>>, vector<1x16x16xf32>,
    %77 = vector.broadcast %0 : f32 to vector<16x16xf32>
    %c0_51 = arith.constant 0 : index
    %78 = memref.load %arg2[%c0_51] : memref<99xf32, #tpu.memory_space<smem>>
    %c0_52 = arith.constant 0 : index
    %c5_53 = arith.constant 5 : index
    %c0_54 = arith.constant 0 : index
    %79 = vector.load %arg4[%c0_52, %c5_53, %c0_54] : memref<14x32x16xf32, #tpu.memory_space<vmem>>, vector<1x16x16xf32>
    %80 = vector.shape_cast %79 : vector<1x16x16xf32> to vector<16x16xf32>
    %81 = vector.broadcast %78 : f32 to vector<16x16xf32>
    %82 = arith.mulf %81, %80 : vector<16x16xf32>
    %83 = arith.addf %77, %82 : vector<16x16xf32>
    %c7_55 = arith.constant 7 : index
    %84 = memref.load %arg2[%c7_55] : memref<99xf32, #tpu.memory_space<smem>>
    %c0_56 = arith.constant 0 : index
    %c6_57 = arith.constant 6 : index
    %c0_58 = arith.constant 0 : index
    %85 = vector.load %arg4[%c0_56, %c6_57, %c0_58] : memref<14x32x16xf32, #tpu.memory_space<vmem>>, vector<1x16x16xf32>
    %86 = vector.shape_cast %85 : vector<1x16x16xf32> to vector<16x16xf32>
    %87 = vector.broadcast %84 : f32 to vector<16x16xf32>
    %88 = arith.mulf %87, %86 : vector<16x16xf32>
    %89 = arith.addf %83, %88 : vector<16x16xf32>
    %c14 = arith.constant 14 : index
    %90 = memref.load %arg2[%c14] : memref<99xf32, #tpu.memory_space<smem>>
    %c0_59 = arith.constant 0 : index
    %c7_60 = arith.constant 7 : index
    %c0_61 = arith.constant 0 : index
    %91 = vector.load %arg4[%c0_59, %c7_60, %c0_61] : memref<14x32x16xf32, #tpu.memory_space<vmem>>, vector<1x16x16xf32>
    %92 = vector.shape_cast %91 : vector<1x16x16xf32> to vector<16x16xf32>
    %93 = vector.broadcast %90 : f32 to vector<16x16xf32>
    %94 = arith.mulf %93, %92 : vector<16x16xf32>
    %95 = arith.addf %89, %94 : vector<16x16xf32>
    %c21 = arith.constant 21 : index
    %96 = memref.load %arg2[%c21] : memref<99xf32, #tpu.memory_space<smem>>
    %c0_62 = arith.constant 0 : index
    %c8_63 = arith.constant 8 : index
    %c0_64 = arith.constant 0 : index
    %97 = vector.load %arg4[%c0_62, %c8_63, %c0_64] : memref<14x32x16xf32, #tpu.memory_space<vmem>>, vector<1x16x16xf32>
    %98 = vector.shape_cast %97 : vector<1x16x16xf32> to vector<16x16xf32>
    %99 = vector.broadcast %96 : f32 to vector<16x16xf32>
    %100 = arith.mulf %99, %98 : vector<16x16xf32>
    %101 = arith.addf %95, %100 : vector<16x16xf32>
    %c28 = arith.constant 28 : index
    %102 = memref.load %arg2[%c28] : memref<99xf32, #tpu.memory_space<smem>>
    %c0_65 = arith.constant 0 : index
    %c9_66 = arith.constant 9 : index
    %c0_67 = arith.constant 0 : index
    %103 = vector.load %arg4[%c0_65, %c9_66, %c0_67] : memref<14x32x16xf32, #tpu.memory_space<vmem>>, vector<1x16x16xf32>
    %104 = vector.shape_cast %103 : vector<1x16x16xf32> to vector<16x16xf32>
    %105 = vector.broadcast %102 : f32 to vector<16x16xf32>
    %106 = arith.mulf %105, %104 : vector<16x16xf32>
    %107 = arith.addf %101, %106 : vector<16x16xf32>
    %c35 = arith.constant 35 : index
    %108 = memref.load %arg2[%c35] : memref<99xf32, #tpu.memory_space<smem>>
    %c0_68 = arith.constant 0 : index
    %c10_69 = arith.constant 10 : index
    %c0_70 = arith.constant 0 : index
    %109 = vector.load %arg4[%c0_68, %c10_69, %c0_70] : memref<14x32x16xf32, #tpu.memory_space<vmem>>, vector<1x16x16xf32>
    %110 = vector.shape_cast %109 : vector<1x16x16xf32> to vector<16x16xf32>
    %111 = vector.broadcast %108 : f32 to vector<16x16xf32>
    %112 = arith.mulf %111, %110 : vector<16x16xf32>
    %113 = arith.addf %107, %112 : vector<16x16xf32>
    %c42 = arith.constant 42 : index
    %114 = memref.load %arg2[%c42] : memref<99xf32, #tpu.memory_space<smem>>
    %c0_71 = arith.constant 0 : index
    %c11_72 = arith.constant 11 : index
    %c0_73 = arith.constant 0 : index
    %115 = vector.load %arg4[%c0_71, %c11_72, %c0_73] : memref<14x32x16xf32, #tpu.memory_space<vmem>>, vector<1x16x16xf32>
    %116 = vector.shape_cast %115 : vector<1x16x16xf32> to vector<16x16xf32>
    %117 = vector.broadcast %114 : f32 to vector<16x16xf32>
    %118 = arith.mulf %117, %116 : vector<16x16xf32>
    %119 = arith.addf %113, %118 : vector<16x16xf32>
    %c1_74 = arith.constant 1 : index
    %120 = memref.load %arg2[%c1_74] : memref<99xf32, #tpu.memory_space<smem>>
    %c1_75 = arith.constant 1 : index
    %c5_76 = arith.constant 5 : index
    %c0_77 = arith.constant 0 : index
    %121 = vector.load %arg4[%c1_75, %c5_76, %c0_77] : memref<14x32x16xf32, #tpu.memory_space<vmem>>, vector<1x16x16xf32>
    %122 = vector.shape_cast %121 : vector<1x16x16xf32> to vector<16x16xf32>
    %123 = vector.broadcast %120 : f32 to vector<16x16xf32>
    %124 = arith.mulf %123, %122 : vector<16x16xf32>
    %125 = arith.addf %119, %124 : vector<16x16xf32>
    %c8_78 = arith.constant 8 : index
    %126 = memref.load %arg2[%c8_78] : memref<99xf32, #tpu.memory_space<smem>>
    %c1_79 = arith.constant 1 : index
    %c6_80 = arith.constant 6 : index
    %c0_81 = arith.constant 0 : index
    %127 = vector.load %arg4[%c1_79, %c6_80, %c0_81] : memref<14x32x16xf32, #tpu.memory_space<vmem>>, vector<1x16x16xf32>
    %128 = vector.shape_cast %127 : vector<1x16x16xf32> to vector<16x16xf32>
    %129 = vector.broadcast %126 : f32 to vector<16x16xf32>
    %130 = arith.mulf %129, %128 : vector<16x16xf32>
    %131 = arith.addf %125, %130 : vector<16x16xf32>
    %c15 = arith.constant 15 : index
    %132 = memref.load %arg2[%c15] : memref<99xf32, #tpu.memory_space<smem>>
    %c1_82 = arith.constant 1 : index
    %c7_83 = arith.constant 7 : index
    %c0_84 = arith.constant 0 : index
    %133 = vector.load %arg4[%c1_82, %c7_83, %c0_84] : memref<14x32x16xf32, #tpu.memory_space<vmem>>, vector<1x16x16xf32>
    %134 = vector.shape_cast %133 : vector<1x16x16xf32> to vector<16x16xf32>
    %135 = vector.broadcast %132 : f32 to vector<16x16xf32>
    %136 = arith.mulf %135, %134 : vector<16x16xf32>
    %137 = arith.addf %131, %136 : vector<16x16xf32>
    %c22 = arith.constant 22 : index
    %138 = memref.load %arg2[%c22] : memref<99xf32, #tpu.memory_space<smem>>
    %c1_85 = arith.constant 1 : index
    %c8_86 = arith.constant 8 : index
    %c0_87 = arith.constant 0 : index
    %139 = vector.load %arg4[%c1_85, %c8_86, %c0_87] : memref<14x32x16xf32, #tpu.memory_space<vmem>>, vector<1x16x16xf32>
    %140 = vector.shape_cast %139 : vector<1x16x16xf32> to vector<16x16xf32>
    %141 = vector.broadcast %138 : f32 to vector<16x16xf32>
    %142 = arith.mulf %141, %140 : vector<16x16xf32>
    %143 = arith.addf %137, %142 : vector<16x16xf32>
    %c29 = arith.constant 29 : index
    %144 = memref.load %arg2[%c29] : memref<99xf32, #tpu.memory_space<smem>>
    %c1_88 = arith.constant 1 : index
    %c9_89 = arith.constant 9 : index
    %c0_90 = arith.constant 0 : index
    %145 = vector.load %arg4[%c1_88, %c9_89, %c0_90] : memref<14x32x16xf32, #tpu.memory_space<vmem>>, vector<1x16x16xf32>
    %146 = vector.shape_cast %145 : vector<1x16x16xf32> to vector<16x16xf32>
    %147 = vector.broadcast %144 : f32 to vector<16x16xf32>
    %148 = arith.mulf %147, %146 : vector<16x16xf32>
    %149 = arith.addf %143, %148 : vector<16x16xf32>
    %c36 = arith.constant 36 : index
    %150 = memref.load %arg2[%c36] : memref<99xf32, #tpu.memory_space<smem>>
    %c1_91 = arith.constant 1 : index
    %c10_92 = arith.constant 10 : index
    %c0_93 = arith.constant 0 : index
    %151 = vector.load %arg4[%c1_91, %c10_92, %c0_93] : memref<14x32x16xf32, #tpu.memory_space<vmem>>, vector<1x16x16xf32>
    %152 = vector.shape_cast %151 : vector<1x16x16xf32> to vector<16x16xf32>
    %153 = vector.broadcast %150 : f32 to vector<16x16xf32>
    %154 = arith.mulf %153, %152 : vector<16x16xf32>
    %155 = arith.addf %149, %154 : vector<16x16xf32>
    %c43 = arith.constant 43 : index
    %156 = memref.load %arg2[%c43] : memref<99xf32, #tpu.memory_space<smem>>
    %c1_94 = arith.constant 1 : index
    %c11_95 = arith.constant 11 : index
    %c0_96 = arith.constant 0 : index
    %157 = vector.load %arg4[%c1_94, %c11_95, %c0_96] : memref<14x32x16xf32, #tpu.memory_space<vmem>>, vector<1x16x16xf32>
    %158 = vector.shape_cast %157 : vector<1x16x16xf32> to vector<16x16xf32>
    %159 = vector.broadcast %156 : f32 to vector<16x16xf32>
    %160 = arith.mulf %159, %158 : vector<16x16xf32>
    %161 = arith.addf %155, %160 : vector<16x16xf32>
    %c2_97 = arith.constant 2 : index
    %162 = memref.load %arg2[%c2_97] : memref<99xf32, #tpu.memory_space<smem>>
    %c2_98 = arith.constant 2 : index
    %c5_99 = arith.constant 5 : index
    %c0_100 = arith.constant 0 : index
    %163 = vector.load %arg4[%c2_98, %c5_99, %c0_100] : memref<14x32x16xf32, #tpu.memory_space<vmem>>, vector<1x16x16xf32>
    %164 = vector.shape_cast %163 : vector<1x16x16xf32> to vector<16x16xf32>
    %165 = vector.broadcast %162 : f32 to vector<16x16xf32>
    %166 = arith.mulf %165, %164 : vector<16x16xf32>
    %167 = arith.addf %161, %166 : vector<16x16xf32>
    %c9_101 = arith.constant 9 : index
    %168 = memref.load %arg2[%c9_101] : memref<99xf32, #tpu.memory_space<smem>>
    %c2_102 = arith.constant 2 : index
    %c6_103 = arith.constant 6 : index
    %c0_104 = arith.constant 0 : index
    %169 = vector.load %arg4[%c2_102, %c6_103, %c0_104] : memref<14x32x16xf32, #tpu.memory_space<vmem>>, vector<1x16x16xf32>
    %170 = vector.shape_cast %169 : vector<1x16x16xf32> to vector<16x16xf32>
    %171 = vector.broadcast %168 : f32 to vector<16x16xf32>
    %172 = arith.mulf %171, %170 : vector<16x16xf32>
    %173 = arith.addf %167, %172 : vector<16x16xf32>
    %c16 = arith.constant 16 : index
    %174 = memref.load %arg2[%c16] : memref<99xf32, #tpu.memory_space<smem>>
    %c2_105 = arith.constant 2 : index
    %c7_106 = arith.constant 7 : index
    %c0_107 = arith.constant 0 : index
    %175 = vector.load %arg4[%c2_105, %c7_106, %c0_107] : memref<14x32x16xf32, #tpu.memory_space<vmem>>, vector<1x16x16xf32>
    %176 = vector.shape_cast %175 : vector<1x16x16xf32> to vector<16x16xf32>
    %177 = vector.broadcast %174 : f32 to vector<16x16xf32>
    %178 = arith.mulf %177, %176 : vector<16x16xf32>
    %179 = arith.addf %173, %178 : vector<16x16xf32>
    %c23 = arith.constant 23 : index
    %180 = memref.load %arg2[%c23] : memref<99xf32, #tpu.memory_space<smem>>
    %c2_108 = arith.constant 2 : index
    %c8_109 = arith.constant 8 : index
    %c0_110 = arith.constant 0 : index
    %181 = vector.load %arg4[%c2_108, %c8_109, %c0_110] : memref<14x32x16xf32, #tpu.memory_space<vmem>>, vector<1x16x16xf32>
    %182 = vector.shape_cast %181 : vector<1x16x16xf32> to vector<16x16xf32>
    %183 = vector.broadcast %180 : f32 to vector<16x16xf32>
    %184 = arith.mulf %183, %182 : vector<16x16xf32>
    %185 = arith.addf %179, %184 : vector<16x16xf32>
    %c30 = arith.constant 30 : index
    %186 = memref.load %arg2[%c30] : memref<99xf32, #tpu.memory_space<smem>>
    %c2_111 = arith.constant 2 : index
    %c9_112 = arith.constant 9 : index
    %c0_113 = arith.constant 0 : index
    %187 = vector.load %arg4[%c2_111, %c9_112, %c0_113] : memref<14x32x16xf32, #tpu.memory_space<vmem>>, vector<1x16x16xf32>
    %188 = vector.shape_cast %187 : vector<1x16x16xf32> to vector<16x16xf32>
    %189 = vector.broadcast %186 : f32 to vector<16x16xf32>
    %190 = arith.mulf %189, %188 : vector<16x16xf32>
    %191 = arith.addf %185, %190 : vector<16x16xf32>
    %c37 = arith.constant 37 : index
    %192 = memref.load %arg2[%c37] : memref<99xf32, #tpu.memory_space<smem>>
    %c2_114 = arith.constant 2 : index
    %c10_115 = arith.constant 10 : index
    %c0_116 = arith.constant 0 : index
    %193 = vector.load %arg4[%c2_114, %c10_115, %c0_116] : memref<14x32x16xf32, #tpu.memory_space<vmem>>, vector<1x16x16xf32>
    %194 = vector.shape_cast %193 : vector<1x16x16xf32> to vector<16x16xf32>
    %195 = vector.broadcast %192 : f32 to vector<16x16xf32>
    %196 = arith.mulf %195, %194 : vector<16x16xf32>
    %197 = arith.addf %191, %196 : vector<16x16xf32>
    %c44 = arith.constant 44 : index
    %198 = memref.load %arg2[%c44] : memref<99xf32, #tpu.memory_space<smem>>
    %c2_117 = arith.constant 2 : index
    %c11_118 = arith.constant 11 : index
    %c0_119 = arith.constant 0 : index
    %199 = vector.load %arg4[%c2_117, %c11_118, %c0_119] : memref<14x32x16xf32, #tpu.memory_space<vmem>>, vector<1x16x16xf32>
    %200 = vector.shape_cast %199 : vector<1x16x16xf32> to vector<16x16xf32>
    %201 = vector.broadcast %198 : f32 to vector<16x16xf32>
    %202 = arith.mulf %201, %200 : vector<16x16xf32>
    %203 = arith.addf %197, %202 : vector<16x16xf32>
    %c3_120 = arith.constant 3 : index
    %204 = memref.load %arg2[%c3_120] : memref<99xf32, #tpu.memory_space<smem>>
    %c3_121 = arith.constant 3 : index
    %c5_122 = arith.constant 5 : index
    %c0_123 = arith.constant 0 : index
    %205 = vector.load %arg4[%c3_121, %c5_122, %c0_123] : memref<14x32x16xf32, #tpu.memory_space<vmem>>, vector<1x16x16xf32>
    %206 = vector.shape_cast %205 : vector<1x16x16xf32> to vector<16x16xf32>
    %207 = vector.broadcast %204 : f32 to vector<16x16xf32>
    %208 = arith.mulf %207, %206 : vector<16x16xf32>
    %209 = arith.addf %203, %208 : vector<16x16xf32>
    %c10_124 = arith.constant 10 : index
    %210 = memref.load %arg2[%c10_124] : memref<99xf32, #tpu.memory_space<smem>>
    %c3_125 = arith.constant 3 : index
    %c6_126 = arith.constant 6 : index
    %c0_127 = arith.constant 0 : index
    %211 = vector.load %arg4[%c3_125, %c6_126, %c0_127] : memref<14x32x16xf32, #tpu.memory_space<vmem>>, vector<1x16x16xf32>
    %212 = vector.shape_cast %211 : vector<1x16x16xf32> to vector<16x16xf32>
    %213 = vector.broadcast %210 : f32 to vector<16x16xf32>
    %214 = arith.mulf %213, %212 : vector<16x16xf32>
    %215 = arith.addf %209, %214 : vector<16x16xf32>
    %c17 = arith.constant 17 : index
    %216 = memref.load %arg2[%c17] : memref<99xf32, #tpu.memory_space<smem>>
    %c3_128 = arith.constant 3 : index
    %c7_129 = arith.constant 7 : index
    %c0_130 = arith.constant 0 : index
    %217 = vector.load %arg4[%c3_128, %c7_129, %c0_130] : memref<14x32x16xf32, #tpu.memory_space<vmem>>, vector<1x16x16xf32>
    %218 = vector.shape_cast %217 : vector<1x16x16xf32> to vector<16x16xf32>
    %219 = vector.broadcast %216 : f32 to vector<16x16xf32>
    %220 = arith.mulf %219, %218 : vector<16x16xf32>
    %221 = arith.addf %215, %220 : vector<16x16xf32>
    %c24_131 = arith.constant 24 : index
    %222 = memref.load %arg2[%c24_131] : memref<99xf32, #tpu.memory_space<smem>>
    %c3_132 = arith.constant 3 : index
    %c8_133 = arith.constant 8 : index
    %c0_134 = arith.constant 0 : index
    %223 = vector.load %arg4[%c3_132, %c8_133, %c0_134] : memref<14x32x16xf32, #tpu.memory_space<vmem>>, vector<1x16x16xf32>
    %224 = vector.shape_cast %223 : vector<1x16x16xf32> to vector<16x16xf32>
    %225 = vector.broadcast %222 : f32 to vector<16x16xf32>
    %226 = arith.mulf %225, %224 : vector<16x16xf32>
    %227 = arith.addf %221, %226 : vector<16x16xf32>
    %c31 = arith.constant 31 : index
    %228 = memref.load %arg2[%c31] : memref<99xf32, #tpu.memory_space<smem>>
    %c3_135 = arith.constant 3 : index
    %c9_136 = arith.constant 9 : index
    %c0_137 = arith.constant 0 : index
    %229 = vector.load %arg4[%c3_135, %c9_136, %c0_137] : memref<14x32x16xf32, #tpu.memory_space<vmem>>, vector<1x16x16xf32>
    %230 = vector.shape_cast %229 : vector<1x16x16xf32> to vector<16x16xf32>
    %231 = vector.broadcast %228 : f32 to vector<16x16xf32>
    %232 = arith.mulf %231, %230 : vector<16x16xf32>
    %233 = arith.addf %227, %232 : vector<16x16xf32>
    %c38 = arith.constant 38 : index
    %234 = memref.load %arg2[%c38] : memref<99xf32, #tpu.memory_space<smem>>
    %c3_138 = arith.constant 3 : index
    %c10_139 = arith.constant 10 : index
    %c0_140 = arith.constant 0 : index
    %235 = vector.load %arg4[%c3_138, %c10_139, %c0_140] : memref<14x32x16xf32, #tpu.memory_space<vmem>>, vector<1x16x16xf32>
    %236 = vector.shape_cast %235 : vector<1x16x16xf32> to vector<16x16xf32>
    %237 = vector.broadcast %234 : f32 to vector<16x16xf32>
    %238 = arith.mulf %237, %236 : vector<16x16xf32>
    %239 = arith.addf %233, %238 : vector<16x16xf32>
    %c45 = arith.constant 45 : index
    %240 = memref.load %arg2[%c45] : memref<99xf32, #tpu.memory_space<smem>>
    %c3_141 = arith.constant 3 : index
    %c11_142 = arith.constant 11 : index
    %c0_143 = arith.constant 0 : index
    %241 = vector.load %arg4[%c3_141, %c11_142, %c0_143] : memref<14x32x16xf32, #tpu.memory_space<vmem>>, vector<1x16x16xf32>
    %242 = vector.shape_cast %241 : vector<1x16x16xf32> to vector<16x16xf32>
    %243 = vector.broadcast %240 : f32 to vector<16x16xf32>
    %244 = arith.mulf %243, %242 : vector<16x16xf32>
    %245 = arith.addf %239, %244 : vector<16x16xf32>
    %c4_144 = arith.constant 4 : index
    %246 = memref.load %arg2[%c4_144] : memref<99xf32, #tpu.memory_space<smem>>
    %c4_145 = arith.constant 4 : index
    %c5_146 = arith.constant 5 : index
    %c0_147 = arith.constant 0 : index
    %247 = vector.load %arg4[%c4_145, %c5_146, %c0_147] : memref<14x32x16xf32, #tpu.memory_space<vmem>>, vector<1x16x16xf32>
    %248 = vector.shape_cast %247 : vector<1x16x16xf32> to vector<16x16xf32>
    %249 = vector.broadcast %246 : f32 to vector<16x16xf32>
    %250 = arith.mulf %249, %248 : vector<16x16xf32>
    %251 = arith.addf %245, %250 : vector<16x16xf32>
    %c11_148 = arith.constant 11 : index
    %252 = memref.load %arg2[%c11_148] : memref<99xf32, #tpu.memory_space<smem>>
    %c4_149 = arith.constant 4 : index
    %c6_150 = arith.constant 6 : index
    %c0_151 = arith.constant 0 : index
    %253 = vector.load %arg4[%c4_149, %c6_150, %c0_151] : memref<14x32x16xf32, #tpu.memory_space<vmem>>, vector<1x16x16xf32>
    %254 = vector.shape_cast %253 : vector<1x16x16xf32> to vector<16x16xf32>
    %255 = vector.broadcast %252 : f32 to vector<16x16xf32>
    %256 = arith.mulf %255, %254 : vector<16x16xf32>
    %257 = arith.addf %251, %256 : vector<16x16xf32>
    %c18 = arith.constant 18 : index
    %258 = memref.load %arg2[%c18] : memref<99xf32, #tpu.memory_space<smem>>
    %c4_152 = arith.constant 4 : index
    %c7_153 = arith.constant 7 : index
    %c0_154 = arith.constant 0 : index
    %259 = vector.load %arg4[%c4_152, %c7_153, %c0_154] : memref<14x32x16xf32, #tpu.memory_space<vmem>>, vector<1x16x16xf32>
    %260 = vector.shape_cast %259 : vector<1x16x16xf32> to vector<16x16xf32>
    %261 = vector.broadcast %258 : f32 to vector<16x16xf32>
    %262 = arith.mulf %261, %260 : vector<16x16xf32>
    %263 = arith.addf %257, %262 : vector<16x16xf32>
    %c25 = arith.constant 25 : index
    %264 = memref.load %arg2[%c25] : memref<99xf32, #tpu.memory_space<smem>>
    %c4_155 = arith.constant 4 : index
    %c8_156 = arith.constant 8 : index
    %c0_157 = arith.constant 0 : index
    %265 = vector.load %arg4[%c4_155, %c8_156, %c0_157] : memref<14x32x16xf32, #tpu.memory_space<vmem>>, vector<1x16x16xf32>
    %266 = vector.shape_cast %265 : vector<1x16x16xf32> to vector<16x16xf32>
    %267 = vector.broadcast %264 : f32 to vector<16x16xf32>
    %268 = arith.mulf %267, %266 : vector<16x16xf32>
    %269 = arith.addf %263, %268 : vector<16x16xf32>
    %c32 = arith.constant 32 : index
    %270 = memref.load %arg2[%c32] : memref<99xf32, #tpu.memory_space<smem>>
    %c4_158 = arith.constant 4 : index
    %c9_159 = arith.constant 9 : index
    %c0_160 = arith.constant 0 : index
    %271 = vector.load %arg4[%c4_158, %c9_159, %c0_160] : memref<14x32x16xf32, #tpu.memory_space<vmem>>, vector<1x16x16xf32>
    %272 = vector.shape_cast %271 : vector<1x16x16xf32> to vector<16x16xf32>
    %273 = vector.broadcast %270 : f32 to vector<16x16xf32>
    %274 = arith.mulf %273, %272 : vector<16x16xf32>
    %275 = arith.addf %269, %274 : vector<16x16xf32>
    %c39 = arith.constant 39 : index
    %276 = memref.load %arg2[%c39] : memref<99xf32, #tpu.memory_space<smem>>
    %c4_161 = arith.constant 4 : index
    %c10_162 = arith.constant 10 : index
    %c0_163 = arith.constant 0 : index
    %277 = vector.load %arg4[%c4_161, %c10_162, %c0_163] : memref<14x32x16xf32, #tpu.memory_space<vmem>>, vector<1x16x16xf32>
    %278 = vector.shape_cast %277 : vector<1x16x16xf32> to vector<16x16xf32>
    %279 = vector.broadcast %276 : f32 to vector<16x16xf32>
    %280 = arith.mulf %279, %278 : vector<16x16xf32>
    %281 = arith.addf %275, %280 : vector<16x16xf32>
    %c46 = arith.constant 46 : index
    %282 = memref.load %arg2[%c46] : memref<99xf32, #tpu.memory_space<smem>>
    %c4_164 = arith.constant 4 : index
    %c11_165 = arith.constant 11 : index
    %c0_166 = arith.constant 0 : index
    %283 = vector.load %arg4[%c4_164, %c11_165, %c0_166] : memref<14x32x16xf32, #tpu.memory_space<vmem>>, vector<1x16x16xf32>
    %284 = vector.shape_cast %283 : vector<1x16x16xf32> to vector<16x16xf32>
    %285 = vector.broadcast %282 : f32 to vector<16x16xf32>
    %286 = arith.mulf %285, %284 : vector<16x16xf32>
    %287 = arith.addf %281, %286 : vector<16x16xf32>
    %c5_167 = arith.constant 5 : index
    %288 = memref.load %arg2[%c5_167] : memref<99xf32, #tpu.memory_space<smem>>
    %c5_168 = arith.constant 5 : index
    %c5_169 = arith.constant 5 : index
    %c0_170 = arith.constant 0 : index
    %289 = vector.load %arg4[%c5_168, %c5_169, %c0_170] : memref<14x32x16xf32, #tpu.memory_space<vmem>>, vector<1x16x16xf32>
    %290 = vector.shape_cast %289 : vector<1x16x16xf32> to vector<16x16xf32>
    %291 = vector.broadcast %288 : f32 to vector<16x16xf32>
    %292 = arith.mulf %291, %290 : vector<16x16xf32>
    %293 = arith.addf %287, %292 : vector<16x16xf32>
    %c12_171 = arith.constant 12 : index
    %294 = memref.load %arg2[%c12_171] : memref<99xf32, #tpu.memory_space<smem>>
    %c5_172 = arith.constant 5 : index
    %c6_173 = arith.constant 6 : index
    %c0_174 = arith.constant 0 : index
    %295 = vector.load %arg4[%c5_172, %c6_173, %c0_174] : memref<14x32x16xf32, #tpu.memory_space<vmem>>, vector<1x16x16xf32>
    %296 = vector.shape_cast %295 : vector<1x16x16xf32> to vector<16x16xf32>
    %297 = vector.broadcast %294 : f32 to vector<16x16xf32>
    %298 = arith.mulf %297, %296 : vector<16x16xf32>
    %299 = arith.addf %293, %298 : vector<16x16xf32>
    %c19 = arith.constant 19 : index
    %300 = memref.load %arg2[%c19] : memref<99xf32, #tpu.memory_space<smem>>
    %c5_175 = arith.constant 5 : index
    %c7_176 = arith.constant 7 : index
    %c0_177 = arith.constant 0 : index
    %301 = vector.load %arg4[%c5_175, %c7_176, %c0_177] : memref<14x32x16xf32, #tpu.memory_space<vmem>>, vector<1x16x16xf32>
    %302 = vector.shape_cast %301 : vector<1x16x16xf32> to vector<16x16xf32>
    %303 = vector.broadcast %300 : f32 to vector<16x16xf32>
    %304 = arith.mulf %303, %302 : vector<16x16xf32>
    %305 = arith.addf %299, %304 : vector<16x16xf32>
    %c26 = arith.constant 26 : index
    %306 = memref.load %arg2[%c26] : memref<99xf32, #tpu.memory_space<smem>>
    %c5_178 = arith.constant 5 : index
    %c8_179 = arith.constant 8 : index
    %c0_180 = arith.constant 0 : index
    %307 = vector.load %arg4[%c5_178, %c8_179, %c0_180] : memref<14x32x16xf32, #tpu.memory_space<vmem>>, vector<1x16x16xf32>
    %308 = vector.shape_cast %307 : vector<1x16x16xf32> to vector<16x16xf32>
    %309 = vector.broadcast %306 : f32 to vector<16x16xf32>
    %310 = arith.mulf %309, %308 : vector<16x16xf32>
    %311 = arith.addf %305, %310 : vector<16x16xf32>
    %c33 = arith.constant 33 : index
    %312 = memref.load %arg2[%c33] : memref<99xf32, #tpu.memory_space<smem>>
    %c5_181 = arith.constant 5 : index
    %c9_182 = arith.constant 9 : index
    %c0_183 = arith.constant 0 : index
    %313 = vector.load %arg4[%c5_181, %c9_182, %c0_183] : memref<14x32x16xf32, #tpu.memory_space<vmem>>, vector<1x16x16xf32>
    %314 = vector.shape_cast %313 : vector<1x16x16xf32> to vector<16x16xf32>
    %315 = vector.broadcast %312 : f32 to vector<16x16xf32>
    %316 = arith.mulf %315, %314 : vector<16x16xf32>
    %317 = arith.addf %311, %316 : vector<16x16xf32>
    %c40 = arith.constant 40 : index
    %318 = memref.load %arg2[%c40] : memref<99xf32, #tpu.memory_space<smem>>
    %c5_184 = arith.constant 5 : index
    %c10_185 = arith.constant 10 : index
    %c0_186 = arith.constant 0 : index
    %319 = vector.load %arg4[%c5_184, %c10_185, %c0_186] : memref<14x32x16xf32, #tpu.memory_space<vmem>>, vector<1x16x16xf32>
    %320 = vector.shape_cast %319 : vector<1x16x16xf32> to vector<16x16xf32>
    %321 = vector.broadcast %318 : f32 to vector<16x16xf32>
    %322 = arith.mulf %321, %320 : vector<16x16xf32>
    %323 = arith.addf %317, %322 : vector<16x16xf32>
    %c47 = arith.constant 47 : index
    %324 = memref.load %arg2[%c47] : memref<99xf32, #tpu.memory_space<smem>>
    %c5_187 = arith.constant 5 : index
    %c11_188 = arith.constant 11 : index
    %c0_189 = arith.constant 0 : index
    %325 = vector.load %arg4[%c5_187, %c11_188, %c0_189] : memref<14x32x16xf32, #tpu.memory_space<vmem>>, vector<1x16x16xf32>
    %326 = vector.shape_cast %325 : vector<1x16x16xf32> to vector<16x16xf32>
    %327 = vector.broadcast %324 : f32 to vector<16x16xf32>
    %328 = arith.mulf %327, %326 : vector<16x16xf32>
    %329 = arith.addf %323, %328 : vector<16x16xf32>
    %c6_190 = arith.constant 6 : index
    %330 = memref.load %arg2[%c6_190] : memref<99xf32, #tpu.memory_space<smem>>
    %c6_191 = arith.constant 6 : index
    %c5_192 = arith.constant 5 : index
    %c0_193 = arith.constant 0 : index
    %331 = vector.load %arg4[%c6_191, %c5_192, %c0_193] : memref<14x32x16xf32, #tpu.memory_space<vmem>>, vector<1x16x16xf32>
    %332 = vector.shape_cast %331 : vector<1x16x16xf32> to vector<16x16xf32>
    %333 = vector.broadcast %330 : f32 to vector<16x16xf32>
    %334 = arith.mulf %333, %332 : vector<16x16xf32>
    %335 = arith.addf %329, %334 : vector<16x16xf32>
    %c13_194 = arith.constant 13 : index
    %336 = memref.load %arg2[%c13_194] : memref<99xf32, #tpu.memory_space<smem>>
    %c6_195 = arith.constant 6 : index
    %c6_196 = arith.constant 6 : index
    %c0_197 = arith.constant 0 : index
    %337 = vector.load %arg4[%c6_195, %c6_196, %c0_197] : memref<14x32x16xf32, #tpu.memory_space<vmem>>, vector<1x16x16xf32>
    %338 = vector.shape_cast %337 : vector<1x16x16xf32> to vector<16x16xf32>
    %339 = vector.broadcast %336 : f32 to vector<16x16xf32>
    %340 = arith.mulf %339, %338 : vector<16x16xf32>
    %341 = arith.addf %335, %340 : vector<16x16xf32>
    %c20 = arith.constant 20 : index
    %342 = memref.load %arg2[%c20] : memref<99xf32, #tpu.memory_space<smem>>
    %c6_198 = arith.constant 6 : index
    %c7_199 = arith.constant 7 : index
    %c0_200 = arith.constant 0 : index
    %343 = vector.load %arg4[%c6_198, %c7_199, %c0_200] : memref<14x32x16xf32, #tpu.memory_space<vmem>>, vector<1x16x16xf32>
    %344 = vector.shape_cast %343 : vector<1x16x16xf32> to vector<16x16xf32>
    %345 = vector.broadcast %342 : f32 to vector<16x16xf32>
    %346 = arith.mulf %345, %344 : vector<16x16xf32>
    %347 = arith.addf %341, %346 : vector<16x16xf32>
    %c27 = arith.constant 27 : index
    %348 = memref.load %arg2[%c27] : memref<99xf32, #tpu.memory_space<smem>>
    %c6_201 = arith.constant 6 : index
    %c8_202 = arith.constant 8 : index
    %c0_203 = arith.constant 0 : index
    %349 = vector.load %arg4[%c6_201, %c8_202, %c0_203] : memref<14x32x16xf32, #tpu.memory_space<vmem>>, vector<1x16x16xf32>
    %350 = vector.shape_cast %349 : vector<1x16x16xf32> to vector<16x16xf32>
    %351 = vector.broadcast %348 : f32 to vector<16x16xf32>
    %352 = arith.mulf %351, %350 : vector<16x16xf32>
    %353 = arith.addf %347, %352 : vector<16x16xf32>
    %c34 = arith.constant 34 : index
    %354 = memref.load %arg2[%c34] : memref<99xf32, #tpu.memory_space<smem>>
    %c6_204 = arith.constant 6 : index
    %c9_205 = arith.constant 9 : index
    %c0_206 = arith.constant 0 : index
    %355 = vector.load %arg4[%c6_204, %c9_205, %c0_206] : memref<14x32x16xf32, #tpu.memory_space<vmem>>, vector<1x16x16xf32>
    %356 = vector.shape_cast %355 : vector<1x16x16xf32> to vector<16x16xf32>
    %357 = vector.broadcast %354 : f32 to vector<16x16xf32>
    %358 = arith.mulf %357, %356 : vector<16x16xf32>
    %359 = arith.addf %353, %358 : vector<16x16xf32>
    %c41 = arith.constant 41 : index
    %360 = memref.load %arg2[%c41] : memref<99xf32, #tpu.memory_space<smem>>
    %c6_207 = arith.constant 6 : index
    %c10_208 = arith.constant 10 : index
    %c0_209 = arith.constant 0 : index
    %361 = vector.load %arg4[%c6_207, %c10_208, %c0_209] : memref<14x32x16xf32, #tpu.memory_space<vmem>>, vector<1x16x16xf32>
    %362 = vector.shape_cast %361 : vector<1x16x16xf32> to vector<16x16xf32>
    %363 = vector.broadcast %360 : f32 to vector<16x16xf32>
    %364 = arith.mulf %363, %362 : vector<16x16xf32>
    %365 = arith.addf %359, %364 : vector<16x16xf32>
    %c48 = arith.constant 48 : index
    %366 = memref.load %arg2[%c48] : memref<99xf32, #tpu.memory_space<smem>>
    %c6_210 = arith.constant 6 : index
    %c11_211 = arith.constant 11 : index
    %c0_212 = arith.constant 0 : index
    %367 = vector.load %arg4[%c6_210, %c11_211, %c0_212] : memref<14x32x16xf32, #tpu.memory_space<vmem>>, vector<1x16x16xf32>
    %368 = vector.shape_cast %367 : vector<1x16x16xf32> to vector<16x16xf32>
    %369 = vector.broadcast %366 : f32 to vector<16x16xf32>
    %370 = arith.mulf %369, %368 : vector<16x16xf32>
    %371 = arith.addf %365, %370 : vector<16x16xf32>
    %c49 = arith.constant 49 : index
    %372 = memref.load %arg2[%c49] : memref<99xf32, #tpu.memory_space<smem>>
    %c7_213 = arith.constant 7 : index
    %c5_214 = arith.constant 5 : index
    %c0_215 = arith.constant 0 : index
    %373 = vector.load %arg4[%c7_213, %c5_214, %c0_215] : memref<14x32x16xf32, #tpu.memory_space<vmem>>, vector<1x16x16xf32>
    %374 = vector.shape_cast %373 : vector<1x16x16xf32> to vector<16x16xf32>
    %375 = vector.broadcast %372 : f32 to vector<16x16xf32>
    %376 = arith.mulf %375, %374 : vector<16x16xf32>
    %377 = arith.addf %371, %376 : vector<16x16xf32>
    %c56 = arith.constant 56 : index
    %378 = memref.load %arg2[%c56] : memref<99xf32, #tpu.memory_space<smem>>
    %c7_216 = arith.constant 7 : index
    %c6_217 = arith.constant 6 : index
    %c0_218 = arith.constant 0 : index
    %379 = vector.load %arg4[%c7_216, %c6_217, %c0_218] : memref<14x32x16xf32, #tpu.memory_space<vmem>>, vector<1x16x16xf32>
    %380 = vector.shape_cast %379 : vector<1x16x16xf32> to vector<16x16xf32>
    %381 = vector.broadcast %378 : f32 to vector<16x16xf32>
    %382 = arith.mulf %381, %380 : vector<16x16xf32>
    %383 = arith.addf %377, %382 : vector<16x16xf32>
    %c63 = arith.constant 63 : index
    %384 = memref.load %arg2[%c63] : memref<99xf32, #tpu.memory_space<smem>>
    %c7_219 = arith.constant 7 : index
    %c7_220 = arith.constant 7 : index
    %c0_221 = arith.constant 0 : index
    %385 = vector.load %arg4[%c7_219, %c7_220, %c0_221] : memref<14x32x16xf32, #tpu.memory_space<vmem>>, vector<1x16x16xf32>
    %386 = vector.shape_cast %385 : vector<1x16x16xf32> to vector<16x16xf32>
    %387 = vector.broadcast %384 : f32 to vector<16x16xf32>
    %388 = arith.mulf %387, %386 : vector<16x16xf32>
    %389 = arith.addf %383, %388 : vector<16x16xf32>
    %c70 = arith.constant 70 : index
    %390 = memref.load %arg2[%c70] : memref<99xf32, #tpu.memory_space<smem>>
    %c7_222 = arith.constant 7 : index
    %c8_223 = arith.constant 8 : index
    %c0_224 = arith.constant 0 : index
    %391 = vector.load %arg4[%c7_222, %c8_223, %c0_224] : memref<14x32x16xf32, #tpu.memory_space<vmem>>, vector<1x16x16xf32>
    %392 = vector.shape_cast %391 : vector<1x16x16xf32> to vector<16x16xf32>
    %393 = vector.broadcast %390 : f32 to vector<16x16xf32>
    %394 = arith.mulf %393, %392 : vector<16x16xf32>
    %395 = arith.addf %389, %394 : vector<16x16xf32>
    %c77 = arith.constant 77 : index
    %396 = memref.load %arg2[%c77] : memref<99xf32, #tpu.memory_space<smem>>
    %c7_225 = arith.constant 7 : index
    %c9_226 = arith.constant 9 : index
    %c0_227 = arith.constant 0 : index
    %397 = vector.load %arg4[%c7_225, %c9_226, %c0_227] : memref<14x32x16xf32, #tpu.memory_space<vmem>>, vector<1x16x16xf32>
    %398 = vector.shape_cast %397 : vector<1x16x16xf32> to vector<16x16xf32>
    %399 = vector.broadcast %396 : f32 to vector<16x16xf32>
    %400 = arith.mulf %399, %398 : vector<16x16xf32>
    %401 = arith.addf %395, %400 : vector<16x16xf32>
    %c84 = arith.constant 84 : index
    %402 = memref.load %arg2[%c84] : memref<99xf32, #tpu.memory_space<smem>>
    %c7_228 = arith.constant 7 : index
    %c10_229 = arith.constant 10 : index
    %c0_230 = arith.constant 0 : index
    %403 = vector.load %arg4[%c7_228, %c10_229, %c0_230] : memref<14x32x16xf32, #tpu.memory_space<vmem>>, vector<1x16x16xf32>
    %404 = vector.shape_cast %403 : vector<1x16x16xf32> to vector<16x16xf32>
    %405 = vector.broadcast %402 : f32 to vector<16x16xf32>
    %406 = arith.mulf %405, %404 : vector<16x16xf32>
    %407 = arith.addf %401, %406 : vector<16x16xf32>
    %c91 = arith.constant 91 : index
    %408 = memref.load %arg2[%c91] : memref<99xf32, #tpu.memory_space<smem>>
    %c7_231 = arith.constant 7 : index
    %c11_232 = arith.constant 11 : index
    %c0_233 = arith.constant 0 : index
    %409 = vector.load %arg4[%c7_231, %c11_232, %c0_233] : memref<14x32x16xf32, #tpu.memory_space<vmem>>, vector<1x16x16xf32>
    %410 = vector.shape_cast %409 : vector<1x16x16xf32> to vector<16x16xf32>
    %411 = vector.broadcast %408 : f32 to vector<16x16xf32>
    %412 = arith.mulf %411, %410 : vector<16x16xf32>
    %413 = arith.addf %407, %412 : vector<16x16xf32>
    %c50 = arith.constant 50 : index
    %414 = memref.load %arg2[%c50] : memref<99xf32, #tpu.memory_space<smem>>
    %c8_234 = arith.constant 8 : index
    %c5_235 = arith.constant 5 : index
    %c0_236 = arith.constant 0 : index
    %415 = vector.load %arg4[%c8_234, %c5_235, %c0_236] : memref<14x32x16xf32, #tpu.memory_space<vmem>>, vector<1x16x16xf32>
    %416 = vector.shape_cast %415 : vector<1x16x16xf32> to vector<16x16xf32>
    %417 = vector.broadcast %414 : f32 to vector<16x16xf32>
    %418 = arith.mulf %417, %416 : vector<16x16xf32>
    %419 = arith.addf %413, %418 : vector<16x16xf32>
    %c57 = arith.constant 57 : index
    %420 = memref.load %arg2[%c57] : memref<99xf32, #tpu.memory_space<smem>>
    %c8_237 = arith.constant 8 : index
    %c6_238 = arith.constant 6 : index
    %c0_239 = arith.constant 0 : index
    %421 = vector.load %arg4[%c8_237, %c6_238, %c0_239] : memref<14x32x16xf32, #tpu.memory_space<vmem>>, vector<1x16x16xf32>
    %422 = vector.shape_cast %421 : vector<1x16x16xf32> to vector<16x16xf32>
    %423 = vector.broadcast %420 : f32 to vector<16x16xf32>
    %424 = arith.mulf %423, %422 : vector<16x16xf32>
    %425 = arith.addf %419, %424 : vector<16x16xf32>
    %c64 = arith.constant 64 : index
    %426 = memref.load %arg2[%c64] : memref<99xf32, #tpu.memory_space<smem>>
    %c8_240 = arith.constant 8 : index
    %c7_241 = arith.constant 7 : index
    %c0_242 = arith.constant 0 : index
    %427 = vector.load %arg4[%c8_240, %c7_241, %c0_242] : memref<14x32x16xf32, #tpu.memory_space<vmem>>, vector<1x16x16xf32>
    %428 = vector.shape_cast %427 : vector<1x16x16xf32> to vector<16x16xf32>
    %429 = vector.broadcast %426 : f32 to vector<16x16xf32>
    %430 = arith.mulf %429, %428 : vector<16x16xf32>
    %431 = arith.addf %425, %430 : vector<16x16xf32>
    %c71 = arith.constant 71 : index
    %432 = memref.load %arg2[%c71] : memref<99xf32, #tpu.memory_space<smem>>
    %c8_243 = arith.constant 8 : index
    %c8_244 = arith.constant 8 : index
    %c0_245 = arith.constant 0 : index
    %433 = vector.load %arg4[%c8_243, %c8_244, %c0_245] : memref<14x32x16xf32, #tpu.memory_space<vmem>>, vector<1x16x16xf32>
    %434 = vector.shape_cast %433 : vector<1x16x16xf32> to vector<16x16xf32>
    %435 = vector.broadcast %432 : f32 to vector<16x16xf32>
    %436 = arith.mulf %435, %434 : vector<16x16xf32>
    %437 = arith.addf %431, %436 : vector<16x16xf32>
    %c78 = arith.constant 78 : index
    %438 = memref.load %arg2[%c78] : memref<99xf32, #tpu.memory_space<smem>>
    %c8_246 = arith.constant 8 : index
    %c9_247 = arith.constant 9 : index
    %c0_248 = arith.constant 0 : index
    %439 = vector.load %arg4[%c8_246, %c9_247, %c0_248] : memref<14x32x16xf32, #tpu.memory_space<vmem>>, vector<1x16x16xf32>
    %440 = vector.shape_cast %439 : vector<1x16x16xf32> to vector<16x16xf32>
    %441 = vector.broadcast %438 : f32 to vector<16x16xf32>
    %442 = arith.mulf %441, %440 : vector<16x16xf32>
    %443 = arith.addf %437, %442 : vector<16x16xf32>
    %c85 = arith.constant 85 : index
    %444 = memref.load %arg2[%c85] : memref<99xf32, #tpu.memory_space<smem>>
    %c8_249 = arith.constant 8 : index
    %c10_250 = arith.constant 10 : index
    %c0_251 = arith.constant 0 : index
    %445 = vector.load %arg4[%c8_249, %c10_250, %c0_251] : memref<14x32x16xf32, #tpu.memory_space<vmem>>, vector<1x16x16xf32>
    %446 = vector.shape_cast %445 : vector<1x16x16xf32> to vector<16x16xf32>
    %447 = vector.broadcast %444 : f32 to vector<16x16xf32>
    %448 = arith.mulf %447, %446 : vector<16x16xf32>
    %449 = arith.addf %443, %448 : vector<16x16xf32>
    %c92 = arith.constant 92 : index
    %450 = memref.load %arg2[%c92] : memref<99xf32, #tpu.memory_space<smem>>
    %c8_252 = arith.constant 8 : index
    %c11_253 = arith.constant 11 : index
    %c0_254 = arith.constant 0 : index
    %451 = vector.load %arg4[%c8_252, %c11_253, %c0_254] : memref<14x32x16xf32, #tpu.memory_space<vmem>>, vector<1x16x16xf32>
    %452 = vector.shape_cast %451 : vector<1x16x16xf32> to vector<16x16xf32>
    %453 = vector.broadcast %450 : f32 to vector<16x16xf32>
    %454 = arith.mulf %453, %452 : vector<16x16xf32>
    %455 = arith.addf %449, %454 : vector<16x16xf32>
    %c51 = arith.constant 51 : index
    %456 = memref.load %arg2[%c51] : memref<99xf32, #tpu.memory_space<smem>>
    %c9_255 = arith.constant 9 : index
    %c5_256 = arith.constant 5 : index
    %c0_257 = arith.constant 0 : index
    %457 = vector.load %arg4[%c9_255, %c5_256, %c0_257] : memref<14x32x16xf32, #tpu.memory_space<vmem>>, vector<1x16x16xf32>
    %458 = vector.shape_cast %457 : vector<1x16x16xf32> to vector<16x16xf32>
    %459 = vector.broadcast %456 : f32 to vector<16x16xf32>
    %460 = arith.mulf %459, %458 : vector<16x16xf32>
    %461 = arith.addf %455, %460 : vector<16x16xf32>
    %c58 = arith.constant 58 : index
    %462 = memref.load %arg2[%c58] : memref<99xf32, #tpu.memory_space<smem>>
    %c9_258 = arith.constant 9 : index
    %c6_259 = arith.constant 6 : index
    %c0_260 = arith.constant 0 : index
    %463 = vector.load %arg4[%c9_258, %c6_259, %c0_260] : memref<14x32x16xf32, #tpu.memory_space<vmem>>, vector<1x16x16xf32>
    %464 = vector.shape_cast %463 : vector<1x16x16xf32> to vector<16x16xf32>
    %465 = vector.broadcast %462 : f32 to vector<16x16xf32>
    %466 = arith.mulf %465, %464 : vector<16x16xf32>
    %467 = arith.addf %461, %466 : vector<16x16xf32>
    %c65 = arith.constant 65 : index
    %468 = memref.load %arg2[%c65] : memref<99xf32, #tpu.memory_space<smem>>
    %c9_261 = arith.constant 9 : index
    %c7_262 = arith.constant 7 : index
    %c0_263 = arith.constant 0 : index
    %469 = vector.load %arg4[%c9_261, %c7_262, %c0_263] : memref<14x32x16xf32, #tpu.memory_space<vmem>>, vector<1x16x16xf32>
    %470 = vector.shape_cast %469 : vector<1x16x16xf32> to vector<16x16xf32>
    %471 = vector.broadcast %468 : f32 to vector<16x16xf32>
    %472 = arith.mulf %471, %470 : vector<16x16xf32>
    %473 = arith.addf %467, %472 : vector<16x16xf32>
    %c72 = arith.constant 72 : index
    %474 = memref.load %arg2[%c72] : memref<99xf32, #tpu.memory_space<smem>>
    %c9_264 = arith.constant 9 : index
    %c8_265 = arith.constant 8 : index
    %c0_266 = arith.constant 0 : index
    %475 = vector.load %arg4[%c9_264, %c8_265, %c0_266] : memref<14x32x16xf32, #tpu.memory_space<vmem>>, vector<1x16x16xf32>
    %476 = vector.shape_cast %475 : vector<1x16x16xf32> to vector<16x16xf32>
    %477 = vector.broadcast %474 : f32 to vector<16x16xf32>
    %478 = arith.mulf %477, %476 : vector<16x16xf32>
    %479 = arith.addf %473, %478 : vector<16x16xf32>
    %c79 = arith.constant 79 : index
    %480 = memref.load %arg2[%c79] : memref<99xf32, #tpu.memory_space<smem>>
    %c9_267 = arith.constant 9 : index
    %c9_268 = arith.constant 9 : index
    %c0_269 = arith.constant 0 : index
    %481 = vector.load %arg4[%c9_267, %c9_268, %c0_269] : memref<14x32x16xf32, #tpu.memory_space<vmem>>, vector<1x16x16xf32>
    %482 = vector.shape_cast %481 : vector<1x16x16xf32> to vector<16x16xf32>
    %483 = vector.broadcast %480 : f32 to vector<16x16xf32>
    %484 = arith.mulf %483, %482 : vector<16x16xf32>
    %485 = arith.addf %479, %484 : vector<16x16xf32>
    %c86 = arith.constant 86 : index
    %486 = memref.load %arg2[%c86] : memref<99xf32, #tpu.memory_space<smem>>
    %c9_270 = arith.constant 9 : index
    %c10_271 = arith.constant 10 : index
    %c0_272 = arith.constant 0 : index
    %487 = vector.load %arg4[%c9_270, %c10_271, %c0_272] : memref<14x32x16xf32, #tpu.memory_space<vmem>>, vector<1x16x16xf32>
    %488 = vector.shape_cast %487 : vector<1x16x16xf32> to vector<16x16xf32>
    %489 = vector.broadcast %486 : f32 to vector<16x16xf32>
    %490 = arith.mulf %489, %488 : vector<16x16xf32>
    %491 = arith.addf %485, %490 : vector<16x16xf32>
    %c93 = arith.constant 93 : index
    %492 = memref.load %arg2[%c93] : memref<99xf32, #tpu.memory_space<smem>>
    %c9_273 = arith.constant 9 : index
    %c11_274 = arith.constant 11 : index
    %c0_275 = arith.constant 0 : index
    %493 = vector.load %arg4[%c9_273, %c11_274, %c0_275] : memref<14x32x16xf32, #tpu.memory_space<vmem>>, vector<1x16x16xf32>
    %494 = vector.shape_cast %493 : vector<1x16x16xf32> to vector<16x16xf32>
    %495 = vector.broadcast %492 : f32 to vector<16x16xf32>
    %496 = arith.mulf %495, %494 : vector<16x16xf32>
    %497 = arith.addf %491, %496 : vector<16x16xf32>
    %c52 = arith.constant 52 : index
    %498 = memref.load %arg2[%c52] : memref<99xf32, #tpu.memory_space<smem>>
    %c10_276 = arith.constant 10 : index
    %c5_277 = arith.constant 5 : index
    %c0_278 = arith.constant 0 : index
    %499 = vector.load %arg4[%c10_276, %c5_277, %c0_278] : memref<14x32x16xf32, #tpu.memory_space<vmem>>, vector<1x16x16xf32>
    %500 = vector.shape_cast %499 : vector<1x16x16xf32> to vector<16x16xf32>
    %501 = vector.broadcast %498 : f32 to vector<16x16xf32>
    %502 = arith.mulf %501, %500 : vector<16x16xf32>
    %503 = arith.addf %497, %502 : vector<16x16xf32>
    %c59 = arith.constant 59 : index
    %504 = memref.load %arg2[%c59] : memref<99xf32, #tpu.memory_space<smem>>
    %c10_279 = arith.constant 10 : index
    %c6_280 = arith.constant 6 : index
    %c0_281 = arith.constant 0 : index
    %505 = vector.load %arg4[%c10_279, %c6_280, %c0_281] : memref<14x32x16xf32, #tpu.memory_space<vmem>>, vector<1x16x16xf32>
    %506 = vector.shape_cast %505 : vector<1x16x16xf32> to vector<16x16xf32>
    %507 = vector.broadcast %504 : f32 to vector<16x16xf32>
    %508 = arith.mulf %507, %506 : vector<16x16xf32>
    %509 = arith.addf %503, %508 : vector<16x16xf32>
    %c66 = arith.constant 66 : index
    %510 = memref.load %arg2[%c66] : memref<99xf32, #tpu.memory_space<smem>>
    %c10_282 = arith.constant 10 : index
    %c7_283 = arith.constant 7 : index
    %c0_284 = arith.constant 0 : index
    %511 = vector.load %arg4[%c10_282, %c7_283, %c0_284] : memref<14x32x16xf32, #tpu.memory_space<vmem>>, vector<1x16x16xf32>
    %512 = vector.shape_cast %511 : vector<1x16x16xf32> to vector<16x16xf32>
    %513 = vector.broadcast %510 : f32 to vector<16x16xf32>
    %514 = arith.mulf %513, %512 : vector<16x16xf32>
    %515 = arith.addf %509, %514 : vector<16x16xf32>
    %c73 = arith.constant 73 : index
    %516 = memref.load %arg2[%c73] : memref<99xf32, #tpu.memory_space<smem>>
    %c10_285 = arith.constant 10 : index
    %c8_286 = arith.constant 8 : index
    %c0_287 = arith.constant 0 : index
    %517 = vector.load %arg4[%c10_285, %c8_286, %c0_287] : memref<14x32x16xf32, #tpu.memory_space<vmem>>, vector<1x16x16xf32>
    %518 = vector.shape_cast %517 : vector<1x16x16xf32> to vector<16x16xf32>
    %519 = vector.broadcast %516 : f32 to vector<16x16xf32>
    %520 = arith.mulf %519, %518 : vector<16x16xf32>
    %521 = arith.addf %515, %520 : vector<16x16xf32>
    %c80 = arith.constant 80 : index
    %522 = memref.load %arg2[%c80] : memref<99xf32, #tpu.memory_space<smem>>
    %c10_288 = arith.constant 10 : index
    %c9_289 = arith.constant 9 : index
    %c0_290 = arith.constant 0 : index
    %523 = vector.load %arg4[%c10_288, %c9_289, %c0_290] : memref<14x32x16xf32, #tpu.memory_space<vmem>>, vector<1x16x16xf32>
    %524 = vector.shape_cast %523 : vector<1x16x16xf32> to vector<16x16xf32>
    %525 = vector.broadcast %522 : f32 to vector<16x16xf32>
    %526 = arith.mulf %525, %524 : vector<16x16xf32>
    %527 = arith.addf %521, %526 : vector<16x16xf32>
    %c87 = arith.constant 87 : index
    %528 = memref.load %arg2[%c87] : memref<99xf32, #tpu.memory_space<smem>>
    %c10_291 = arith.constant 10 : index
    %c10_292 = arith.constant 10 : index
    %c0_293 = arith.constant 0 : index
    %529 = vector.load %arg4[%c10_291, %c10_292, %c0_293] : memref<14x32x16xf32, #tpu.memory_space<vmem>>, vector<1x16x16xf32>
    %530 = vector.shape_cast %529 : vector<1x16x16xf32> to vector<16x16xf32>
    %531 = vector.broadcast %528 : f32 to vector<16x16xf32>
    %532 = arith.mulf %531, %530 : vector<16x16xf32>
    %533 = arith.addf %527, %532 : vector<16x16xf32>
    %c94 = arith.constant 94 : index
    %534 = memref.load %arg2[%c94] : memref<99xf32, #tpu.memory_space<smem>>
    %c10_294 = arith.constant 10 : index
    %c11_295 = arith.constant 11 : index
    %c0_296 = arith.constant 0 : index
    %535 = vector.load %arg4[%c10_294, %c11_295, %c0_296] : memref<14x32x16xf32, #tpu.memory_space<vmem>>, vector<1x16x16xf32>
    %536 = vector.shape_cast %535 : vector<1x16x16xf32> to vector<16x16xf32>
    %537 = vector.broadcast %534 : f32 to vector<16x16xf32>
    %538 = arith.mulf %537, %536 : vector<16x16xf32>
    %539 = arith.addf %533, %538 : vector<16x16xf32>
    %c53 = arith.constant 53 : index
    %540 = memref.load %arg2[%c53] : memref<99xf32, #tpu.memory_space<smem>>
    %c11_297 = arith.constant 11 : index
    %c5_298 = arith.constant 5 : index
    %c0_299 = arith.constant 0 : index
    %541 = vector.load %arg4[%c11_297, %c5_298, %c0_299] : memref<14x32x16xf32, #tpu.memory_space<vmem>>, vector<1x16x16xf32>
    %542 = vector.shape_cast %541 : vector<1x16x16xf32> to vector<16x16xf32>
    %543 = vector.broadcast %540 : f32 to vector<16x16xf32>
    %544 = arith.mulf %543, %542 : vector<16x16xf32>
    %545 = arith.addf %539, %544 : vector<16x16xf32>
    %c60 = arith.constant 60 : index
    %546 = memref.load %arg2[%c60] : memref<99xf32, #tpu.memory_space<smem>>
    %c11_300 = arith.constant 11 : index
    %c6_301 = arith.constant 6 : index
    %c0_302 = arith.constant 0 : index
    %547 = vector.load %arg4[%c11_300, %c6_301, %c0_302] : memref<14x32x16xf32, #tpu.memory_space<vmem>>, vector<1x16x16xf32>
    %548 = vector.shape_cast %547 : vector<1x16x16xf32> to vector<16x16xf32>
    %549 = vector.broadcast %546 : f32 to vector<16x16xf32>
    %550 = arith.mulf %549, %548 : vector<16x16xf32>
    %551 = arith.addf %545, %550 : vector<16x16xf32>
    %c67 = arith.constant 67 : index
    %552 = memref.load %arg2[%c67] : memref<99xf32, #tpu.memory_space<smem>>
    %c11_303 = arith.constant 11 : index
    %c7_304 = arith.constant 7 : index
    %c0_305 = arith.constant 0 : index
    %553 = vector.load %arg4[%c11_303, %c7_304, %c0_305] : memref<14x32x16xf32, #tpu.memory_space<vmem>>, vector<1x16x16xf32>
    %554 = vector.shape_cast %553 : vector<1x16x16xf32> to vector<16x16xf32>
    %555 = vector.broadcast %552 : f32 to vector<16x16xf32>
    %556 = arith.mulf %555, %554 : vector<16x16xf32>
    %557 = arith.addf %551, %556 : vector<16x16xf32>
    %c74 = arith.constant 74 : index
    %558 = memref.load %arg2[%c74] : memref<99xf32, #tpu.memory_space<smem>>
    %c11_306 = arith.constant 11 : index
    %c8_307 = arith.constant 8 : index
    %c0_308 = arith.constant 0 : index
    %559 = vector.load %arg4[%c11_306, %c8_307, %c0_308] : memref<14x32x16xf32, #tpu.memory_space<vmem>>, vector<1x16x16xf32>
    %560 = vector.shape_cast %559 : vector<1x16x16xf32> to vector<16x16xf32>
    %561 = vector.broadcast %558 : f32 to vector<16x16xf32>
    %562 = arith.mulf %561, %560 : vector<16x16xf32>
    %563 = arith.addf %557, %562 : vector<16x16xf32>
    %c81 = arith.constant 81 : index
    %564 = memref.load %arg2[%c81] : memref<99xf32, #tpu.memory_space<smem>>
    %c11_309 = arith.constant 11 : index
    %c9_310 = arith.constant 9 : index
    %c0_311 = arith.constant 0 : index
    %565 = vector.load %arg4[%c11_309, %c9_310, %c0_311] : memref<14x32x16xf32, #tpu.memory_space<vmem>>, vector<1x16x16xf32>
    %566 = vector.shape_cast %565 : vector<1x16x16xf32> to vector<16x16xf32>
    %567 = vector.broadcast %564 : f32 to vector<16x16xf32>
    %568 = arith.mulf %567, %566 : vector<16x16xf32>
    %569 = arith.addf %563, %568 : vector<16x16xf32>
    %c88 = arith.constant 88 : index
    %570 = memref.load %arg2[%c88] : memref<99xf32, #tpu.memory_space<smem>>
    %c11_312 = arith.constant 11 : index
    %c10_313 = arith.constant 10 : index
    %c0_314 = arith.constant 0 : index
    %571 = vector.load %arg4[%c11_312, %c10_313, %c0_314] : memref<14x32x16xf32, #tpu.memory_space<vmem>>, vector<1x16x16xf32>
    %572 = vector.shape_cast %571 : vector<1x16x16xf32> to vector<16x16xf32>
    %573 = vector.broadcast %570 : f32 to vector<16x16xf32>
    %574 = arith.mulf %573, %572 : vector<16x16xf32>
    %575 = arith.addf %569, %574 : vector<16x16xf32>
    %c95 = arith.constant 95 : index
    %576 = memref.load %arg2[%c95] : memref<99xf32, #tpu.memory_space<smem>>
    %c11_315 = arith.constant 11 : index
    %c11_316 = arith.constant 11 : index
    %c0_317 = arith.constant 0 : index
    %577 = vector.load %arg4[%c11_315, %c11_316, %c0_317] : memref<14x32x16xf32, #tpu.memory_space<vmem>>, vector<1x16x16xf32>
    %578 = vector.shape_cast %577 : vector<1x16x16xf32> to vector<16x16xf32>
    %579 = vector.broadcast %576 : f32 to vector<16x16xf32>
    %580 = arith.mulf %579, %578 : vector<16x16xf32>
    %581 = arith.addf %575, %580 : vector<16x16xf32>
    %c54 = arith.constant 54 : index
    %582 = memref.load %arg2[%c54] : memref<99xf32, #tpu.memory_space<smem>>
    %c12_318 = arith.constant 12 : index
    %c5_319 = arith.constant 5 : index
    %c0_320 = arith.constant 0 : index
    %583 = vector.load %arg4[%c12_318, %c5_319, %c0_320] : memref<14x32x16xf32, #tpu.memory_space<vmem>>, vector<1x16x16xf32>
    %584 = vector.shape_cast %583 : vector<1x16x16xf32> to vector<16x16xf32>
    %585 = vector.broadcast %582 : f32 to vector<16x16xf32>
    %586 = arith.mulf %585, %584 : vector<16x16xf32>
    %587 = arith.addf %581, %586 : vector<16x16xf32>
    %c61 = arith.constant 61 : index
    %588 = memref.load %arg2[%c61] : memref<99xf32, #tpu.memory_space<smem>>
    %c12_321 = arith.constant 12 : index
    %c6_322 = arith.constant 6 : index
    %c0_323 = arith.constant 0 : index
    %589 = vector.load %arg4[%c12_321, %c6_322, %c0_323] : memref<14x32x16xf32, #tpu.memory_space<vmem>>, vector<1x16x16xf32>
    %590 = vector.shape_cast %589 : vector<1x16x16xf32> to vector<16x16xf32>
    %591 = vector.broadcast %588 : f32 to vector<16x16xf32>
    %592 = arith.mulf %591, %590 : vector<16x16xf32>
    %593 = arith.addf %587, %592 : vector<16x16xf32>
    %c68 = arith.constant 68 : index
    %594 = memref.load %arg2[%c68] : memref<99xf32, #tpu.memory_space<smem>>
    %c12_324 = arith.constant 12 : index
    %c7_325 = arith.constant 7 : index
    %c0_326 = arith.constant 0 : index
    %595 = vector.load %arg4[%c12_324, %c7_325, %c0_326] : memref<14x32x16xf32, #tpu.memory_space<vmem>>, vector<1x16x16xf32>
    %596 = vector.shape_cast %595 : vector<1x16x16xf32> to vector<16x16xf32>
    %597 = vector.broadcast %594 : f32 to vector<16x16xf32>
    %598 = arith.mulf %597, %596 : vector<16x16xf32>
    %599 = arith.addf %593, %598 : vector<16x16xf32>
    %c75 = arith.constant 75 : index
    %600 = memref.load %arg2[%c75] : memref<99xf32, #tpu.memory_space<smem>>
    %c12_327 = arith.constant 12 : index
    %c8_328 = arith.constant 8 : index
    %c0_329 = arith.constant 0 : index
    %601 = vector.load %arg4[%c12_327, %c8_328, %c0_329] : memref<14x32x16xf32, #tpu.memory_space<vmem>>, vector<1x16x16xf32>
    %602 = vector.shape_cast %601 : vector<1x16x16xf32> to vector<16x16xf32>
    %603 = vector.broadcast %600 : f32 to vector<16x16xf32>
    %604 = arith.mulf %603, %602 : vector<16x16xf32>
    %605 = arith.addf %599, %604 : vector<16x16xf32>
    %c82 = arith.constant 82 : index
    %606 = memref.load %arg2[%c82] : memref<99xf32, #tpu.memory_space<smem>>
    %c12_330 = arith.constant 12 : index
    %c9_331 = arith.constant 9 : index
    %c0_332 = arith.constant 0 : index
    %607 = vector.load %arg4[%c12_330, %c9_331, %c0_332] : memref<14x32x16xf32, #tpu.memory_space<vmem>>, vector<1x16x16xf32>
    %608 = vector.shape_cast %607 : vector<1x16x16xf32> to vector<16x16xf32>
    %609 = vector.broadcast %606 : f32 to vector<16x16xf32>
    %610 = arith.mulf %609, %608 : vector<16x16xf32>
    %611 = arith.addf %605, %610 : vector<16x16xf32>
    %c89 = arith.constant 89 : index
    %612 = memref.load %arg2[%c89] : memref<99xf32, #tpu.memory_space<smem>>
    %c12_333 = arith.constant 12 : index
    %c10_334 = arith.constant 10 : index
    %c0_335 = arith.constant 0 : index
    %613 = vector.load %arg4[%c12_333, %c10_334, %c0_335] : memref<14x32x16xf32, #tpu.memory_space<vmem>>, vector<1x16x16xf32>
    %614 = vector.shape_cast %613 : vector<1x16x16xf32> to vector<16x16xf32>
    %615 = vector.broadcast %612 : f32 to vector<16x16xf32>
    %616 = arith.mulf %615, %614 : vector<16x16xf32>
    %617 = arith.addf %611, %616 : vector<16x16xf32>
    %c96 = arith.constant 96 : index
    %618 = memref.load %arg2[%c96] : memref<99xf32, #tpu.memory_space<smem>>
    %c12_336 = arith.constant 12 : index
    %c11_337 = arith.constant 11 : index
    %c0_338 = arith.constant 0 : index
    %619 = vector.load %arg4[%c12_336, %c11_337, %c0_338] : memref<14x32x16xf32, #tpu.memory_space<vmem>>, vector<1x16x16xf32>
    %620 = vector.shape_cast %619 : vector<1x16x16xf32> to vector<16x16xf32>
    %621 = vector.broadcast %618 : f32 to vector<16x16xf32>
    %622 = arith.mulf %621, %620 : vector<16x16xf32>
    %623 = arith.addf %617, %622 : vector<16x16xf32>
    %c55 = arith.constant 55 : index
    %624 = memref.load %arg2[%c55] : memref<99xf32, #tpu.memory_space<smem>>
    %c13_339 = arith.constant 13 : index
    %c5_340 = arith.constant 5 : index
    %c0_341 = arith.constant 0 : index
    %625 = vector.load %arg4[%c13_339, %c5_340, %c0_341] : memref<14x32x16xf32, #tpu.memory_space<vmem>>, vector<1x16x16xf32>
    %626 = vector.shape_cast %625 : vector<1x16x16xf32> to vector<16x16xf32>
    %627 = vector.broadcast %624 : f32 to vector<16x16xf32>
    %628 = arith.mulf %627, %626 : vector<16x16xf32>
    %629 = arith.addf %623, %628 : vector<16x16xf32>
    %c62 = arith.constant 62 : index
    %630 = memref.load %arg2[%c62] : memref<99xf32, #tpu.memory_space<smem>>
    %c13_342 = arith.constant 13 : index
    %c6_343 = arith.constant 6 : index
    %c0_344 = arith.constant 0 : index
    %631 = vector.load %arg4[%c13_342, %c6_343, %c0_344] : memref<14x32x16xf32, #tpu.memory_space<vmem>>, vector<1x16x16xf32>
    %632 = vector.shape_cast %631 : vector<1x16x16xf32> to vector<16x16xf32>
    %633 = vector.broadcast %630 : f32 to vector<16x16xf32>
    %634 = arith.mulf %633, %632 : vector<16x16xf32>
    %635 = arith.addf %629, %634 : vector<16x16xf32>
    %c69 = arith.constant 69 : index
    %636 = memref.load %arg2[%c69] : memref<99xf32, #tpu.memory_space<smem>>
    %c13_345 = arith.constant 13 : index
    %c7_346 = arith.constant 7 : index
    %c0_347 = arith.constant 0 : index
    %637 = vector.load %arg4[%c13_345, %c7_346, %c0_347] : memref<14x32x16xf32, #tpu.memory_space<vmem>>, vector<1x16x16xf32>
    %638 = vector.shape_cast %637 : vector<1x16x16xf32> to vector<16x16xf32>
    %639 = vector.broadcast %636 : f32 to vector<16x16xf32>
    %640 = arith.mulf %639, %638 : vector<16x16xf32>
    %641 = arith.addf %635, %640 : vector<16x16xf32>
    %c76 = arith.constant 76 : index
    %642 = memref.load %arg2[%c76] : memref<99xf32, #tpu.memory_space<smem>>
    %c13_348 = arith.constant 13 : index
    %c8_349 = arith.constant 8 : index
    %c0_350 = arith.constant 0 : index
    %643 = vector.load %arg4[%c13_348, %c8_349, %c0_350] : memref<14x32x16xf32, #tpu.memory_space<vmem>>, vector<1x16x16xf32>
    %644 = vector.shape_cast %643 : vector<1x16x16xf32> to vector<16x16xf32>
    %645 = vector.broadcast %642 : f32 to vector<16x16xf32>
    %646 = arith.mulf %645, %644 : vector<16x16xf32>
    %647 = arith.addf %641, %646 : vector<16x16xf32>
    %c83 = arith.constant 83 : index
    %648 = memref.load %arg2[%c83] : memref<99xf32, #tpu.memory_space<smem>>
    %c13_351 = arith.constant 13 : index
    %c9_352 = arith.constant 9 : index
    %c0_353 = arith.constant 0 : index
    %649 = vector.load %arg4[%c13_351, %c9_352, %c0_353] : memref<14x32x16xf32, #tpu.memory_space<vmem>>, vector<1x16x16xf32>
    %650 = vector.shape_cast %649 : vector<1x16x16xf32> to vector<16x16xf32>
    %651 = vector.broadcast %648 : f32 to vector<16x16xf32>
    %652 = arith.mulf %651, %650 : vector<16x16xf32>
    %653 = arith.addf %647, %652 : vector<16x16xf32>
    %c90 = arith.constant 90 : index
    %654 = memref.load %arg2[%c90] : memref<99xf32, #tpu.memory_space<smem>>
    %c13_354 = arith.constant 13 : index
    %c10_355 = arith.constant 10 : index
    %c0_356 = arith.constant 0 : index
    %655 = vector.load %arg4[%c13_354, %c10_355, %c0_356] : memref<14x32x16xf32, #tpu.memory_space<vmem>>, vector<1x16x16xf32>
    %656 = vector.shape_cast %655 : vector<1x16x16xf32> to vector<16x16xf32>
    %657 = vector.broadcast %654 : f32 to vector<16x16xf32>
    %658 = arith.mulf %657, %656 : vector<16x16xf32>
    %659 = arith.addf %653, %658 : vector<16x16xf32>
    %c97 = arith.constant 97 : index
    %660 = memref.load %arg2[%c97] : memref<99xf32, #tpu.memory_space<smem>>
    %c13_357 = arith.constant 13 : index
    %c11_358 = arith.constant 11 : index
    %c0_359 = arith.constant 0 : index
    %661 = vector.load %arg4[%c13_357, %c11_358, %c0_359] : memref<14x32x16xf32, #tpu.memory_space<vmem>>, vector<1x16x16xf32>
    %662 = vector.shape_cast %661 : vector<1x16x16xf32> to vector<16x16xf32>
    %663 = vector.broadcast %660 : f32 to vector<16x16xf32>
    %664 = arith.mulf %663, %662 : vector<16x16xf32>
    %665 = arith.addf %659, %664 : vector<16x16xf32>
    %666 = arith.negf %665 : vector<16x16xf32>
    %667 = math.exp %666 : vector<16x16xf32>
    %cst_360 = arith.constant 1.000000e+00 : f32
    %668 = vector.broadcast %cst_360 : f32 to vector<16x16xf32>
    %669 = arith.addf %668, %667 : vector<16x16xf32>
    %670 = arith.divf %668, %669 : vector<16x16xf32>
    %c0_361 = arith.constant 0 : index
    %c0_362 = arith.constant 0 : index
    %c0_363 = arith.constant 0 : index
    %671 = vector.load %arg3[%c0_361, %c0_362, %c0_363] : memref<2x16x16xf32, #tpu.memory_space<vmem>>, vector<1x16x16xf32>
    %672 = vector.shape_cast %671 : vector<1x16x16xf32> to vector<16x16xf32>
    %673 = vector.shape_cast %670 : vector<16x16xf32> to vector<1x16x16xf32>
    tpu.vector_store %arg3[%c0_361, %c0_362, %c0_363], %673 {strides = array<i32>} : memref<2x16x16xf32, #tpu.memory_space<vmem>>, vector<1x16x16xf32>,
    %c1_364 = arith.constant 1 : index
    %c0_365 = arith.constant 0 : index
    %c0_366 = arith.constant 0 : index
    %c0_367 = arith.constant 0 : index
    %674 = vector.load %arg1[%c1_364, %c0_365, %c0_366, %c0_367] : memref<2x4x16x16xf32, #tpu.memory_space<vmem>>, vector<1x1x16x16xf32>
    %675 = vector.shape_cast %674 : vector<1x1x16x16xf32> to vector<16x16xf32>
    %c1_368 = arith.constant 1 : index
    %c1_369 = arith.constant 1 : index
    %c0_370 = arith.constant 0 : index
    %c0_371 = arith.constant 0 : index
    %676 = vector.load %arg1[%c1_368, %c1_369, %c0_370, %c0_371] : memref<2x4x16x16xf32, #tpu.memory_space<vmem>>, vector<1x1x16x16xf32>
    %677 = vector.shape_cast %676 : vector<1x1x16x16xf32> to vector<16x16xf32>
    %678 = arith.addf %675, %677 : vector<16x16xf32>
    %679 = arith.maximumf %675, %677 : vector<16x16xf32>
    %c1_372 = arith.constant 1 : index
    %c2_373 = arith.constant 2 : index
    %c0_374 = arith.constant 0 : index
    %c0_375 = arith.constant 0 : index
    %680 = vector.load %arg1[%c1_372, %c2_373, %c0_374, %c0_375] : memref<2x4x16x16xf32, #tpu.memory_space<vmem>>, vector<1x1x16x16xf32>
    %681 = vector.shape_cast %680 : vector<1x1x16x16xf32> to vector<16x16xf32>
    %682 = arith.addf %678, %681 : vector<16x16xf32>
    %683 = arith.maximumf %679, %681 : vector<16x16xf32>
    %c1_376 = arith.constant 1 : index
    %c3_377 = arith.constant 3 : index
    %c0_378 = arith.constant 0 : index
    %c0_379 = arith.constant 0 : index
    %684 = vector.load %arg1[%c1_376, %c3_377, %c0_378, %c0_379] : memref<2x4x16x16xf32, #tpu.memory_space<vmem>>, vector<1x1x16x16xf32>
    %685 = vector.shape_cast %684 : vector<1x1x16x16xf32> to vector<16x16xf32>
    %686 = arith.addf %682, %685 : vector<16x16xf32>
    %687 = arith.maximumf %683, %685 : vector<16x16xf32>
    %cst_380 = arith.constant 2.500000e-01 : f32
    %688 = vector.broadcast %cst_380 : f32 to vector<16x16xf32>
    %689 = arith.mulf %686, %688 : vector<16x16xf32>
    %690 = tpu.concatenate %4, %689, %4 in 1 : vector<16x3xf32>, vector<16x16xf32>, vector<16x3xf32> -> vector<16x22xf32>
    %691 = vector.extract_strided_slice %690 {offsets = [0, 0], sizes = [16, 16], strides = [1, 1]} : vector<16x22xf32> to vector<16x16xf32>
    %c0_381 = arith.constant 0 : index
    %c8_382 = arith.constant 8 : index
    %c0_383 = arith.constant 0 : index
    %692 = vector.load %arg4[%c0_381, %c8_382, %c0_383] : memref<14x32x16xf32, #tpu.memory_space<vmem>>, vector<1x16x16xf32>
    %693 = vector.shape_cast %692 : vector<1x16x16xf32> to vector<16x16xf32>
    %694 = vector.shape_cast %691 : vector<16x16xf32> to vector<1x16x16xf32>
    tpu.vector_store %arg4[%c0_381, %c8_382, %c0_383], %694 {strides = array<i32>} : memref<14x32x16xf32, #tpu.memory_space<vmem>>, vector<1x16x16xf32>,
    %695 = vector.extract_strided_slice %690 {offsets = [0, 1], sizes = [16, 16], strides = [1, 1]} : vector<16x22xf32> to vector<16x16xf32>
    %c1_384 = arith.constant 1 : index
    %c8_385 = arith.constant 8 : index
    %c0_386 = arith.constant 0 : index
    %696 = vector.load %arg4[%c1_384, %c8_385, %c0_386] : memref<14x32x16xf32, #tpu.memory_space<vmem>>, vector<1x16x16xf32>
    %697 = vector.shape_cast %696 : vector<1x16x16xf32> to vector<16x16xf32>
    %698 = vector.shape_cast %695 : vector<16x16xf32> to vector<1x16x16xf32>
    tpu.vector_store %arg4[%c1_384, %c8_385, %c0_386], %698 {strides = array<i32>} : memref<14x32x16xf32, #tpu.memory_space<vmem>>, vector<1x16x16xf32>,
    %699 = vector.extract_strided_slice %690 {offsets = [0, 2], sizes = [16, 16], strides = [1, 1]} : vector<16x22xf32> to vector<16x16xf32>
    %c2_387 = arith.constant 2 : index
    %c8_388 = arith.constant 8 : index
    %c0_389 = arith.constant 0 : index
    %700 = vector.load %arg4[%c2_387, %c8_388, %c0_389] : memref<14x32x16xf32, #tpu.memory_space<vmem>>, vector<1x16x16xf32>
    %701 = vector.shape_cast %700 : vector<1x16x16xf32> to vector<16x16xf32>
    %702 = vector.shape_cast %699 : vector<16x16xf32> to vector<1x16x16xf32>
    tpu.vector_store %arg4[%c2_387, %c8_388, %c0_389], %702 {strides = array<i32>} : memref<14x32x16xf32, #tpu.memory_space<vmem>>, vector<1x16x16xf32>,
    %c3_390 = arith.constant 3 : index
    %c8_391 = arith.constant 8 : index
    %c0_392 = arith.constant 0 : index
    %703 = vector.load %arg4[%c3_390, %c8_391, %c0_392] : memref<14x32x16xf32, #tpu.memory_space<vmem>>, vector<1x16x16xf32>
    %704 = vector.shape_cast %703 : vector<1x16x16xf32> to vector<16x16xf32>
    %705 = vector.shape_cast %689 : vector<16x16xf32> to vector<1x16x16xf32>
    tpu.vector_store %arg4[%c3_390, %c8_391, %c0_392], %705 {strides = array<i32>} : memref<14x32x16xf32, #tpu.memory_space<vmem>>, vector<1x16x16xf32>,
    %706 = vector.extract_strided_slice %690 {offsets = [0, 4], sizes = [16, 16], strides = [1, 1]} : vector<16x22xf32> to vector<16x16xf32>
    %c4_393 = arith.constant 4 : index
    %c8_394 = arith.constant 8 : index
    %c0_395 = arith.constant 0 : index
    %707 = vector.load %arg4[%c4_393, %c8_394, %c0_395] : memref<14x32x16xf32, #tpu.memory_space<vmem>>, vector<1x16x16xf32>
    %708 = vector.shape_cast %707 : vector<1x16x16xf32> to vector<16x16xf32>
    %709 = vector.shape_cast %706 : vector<16x16xf32> to vector<1x16x16xf32>
    tpu.vector_store %arg4[%c4_393, %c8_394, %c0_395], %709 {strides = array<i32>} : memref<14x32x16xf32, #tpu.memory_space<vmem>>, vector<1x16x16xf32>,
    %710 = vector.extract_strided_slice %690 {offsets = [0, 5], sizes = [16, 16], strides = [1, 1]} : vector<16x22xf32> to vector<16x16xf32>
    %c5_396 = arith.constant 5 : index
    %c8_397 = arith.constant 8 : index
    %c0_398 = arith.constant 0 : index
    %711 = vector.load %arg4[%c5_396, %c8_397, %c0_398] : memref<14x32x16xf32, #tpu.memory_space<vmem>>, vector<1x16x16xf32>
    %712 = vector.shape_cast %711 : vector<1x16x16xf32> to vector<16x16xf32>
    %713 = vector.shape_cast %710 : vector<16x16xf32> to vector<1x16x16xf32>
    tpu.vector_store %arg4[%c5_396, %c8_397, %c0_398], %713 {strides = array<i32>} : memref<14x32x16xf32, #tpu.memory_space<vmem>>, vector<1x16x16xf32>,
    %714 = vector.extract_strided_slice %690 {offsets = [0, 6], sizes = [16, 16], strides = [1, 1]} : vector<16x22xf32> to vector<16x16xf32>
    %c6_399 = arith.constant 6 : index
    %c8_400 = arith.constant 8 : index
    %c0_401 = arith.constant 0 : index
    %715 = vector.load %arg4[%c6_399, %c8_400, %c0_401] : memref<14x32x16xf32, #tpu.memory_space<vmem>>, vector<1x16x16xf32>
    %716 = vector.shape_cast %715 : vector<1x16x16xf32> to vector<16x16xf32>
    %717 = vector.shape_cast %714 : vector<16x16xf32> to vector<1x16x16xf32>
    tpu.vector_store %arg4[%c6_399, %c8_400, %c0_401], %717 {strides = array<i32>} : memref<14x32x16xf32, #tpu.memory_space<vmem>>, vector<1x16x16xf32>,
    %718 = tpu.concatenate %4, %687, %4 in 1 : vector<16x3xf32>, vector<16x16xf32>, vector<16x3xf32> -> vector<16x22xf32>
    %719 = vector.extract_strided_slice %718 {offsets = [0, 0], sizes = [16, 16], strides = [1, 1]} : vector<16x22xf32> to vector<16x16xf32>
    %c7_402 = arith.constant 7 : index
    %c8_403 = arith.constant 8 : index
    %c0_404 = arith.constant 0 : index
    %720 = vector.load %arg4[%c7_402, %c8_403, %c0_404] : memref<14x32x16xf32, #tpu.memory_space<vmem>>, vector<1x16x16xf32>
    %721 = vector.shape_cast %720 : vector<1x16x16xf32> to vector<16x16xf32>
    %722 = vector.shape_cast %719 : vector<16x16xf32> to vector<1x16x16xf32>
    tpu.vector_store %arg4[%c7_402, %c8_403, %c0_404], %722 {strides = array<i32>} : memref<14x32x16xf32, #tpu.memory_space<vmem>>, vector<1x16x16xf32>,
    %723 = vector.extract_strided_slice %718 {offsets = [0, 1], sizes = [16, 16], strides = [1, 1]} : vector<16x22xf32> to vector<16x16xf32>
    %c8_405 = arith.constant 8 : index
    %c8_406 = arith.constant 8 : index
    %c0_407 = arith.constant 0 : index
    %724 = vector.load %arg4[%c8_405, %c8_406, %c0_407] : memref<14x32x16xf32, #tpu.memory_space<vmem>>, vector<1x16x16xf32>
    %725 = vector.shape_cast %724 : vector<1x16x16xf32> to vector<16x16xf32>
    %726 = vector.shape_cast %723 : vector<16x16xf32> to vector<1x16x16xf32>
    tpu.vector_store %arg4[%c8_405, %c8_406, %c0_407], %726 {strides = array<i32>} : memref<14x32x16xf32, #tpu.memory_space<vmem>>, vector<1x16x16xf32>,
    %727 = vector.extract_strided_slice %718 {offsets = [0, 2], sizes = [16, 16], strides = [1, 1]} : vector<16x22xf32> to vector<16x16xf32>
    %c9_408 = arith.constant 9 : index
    %c8_409 = arith.constant 8 : index
    %c0_410 = arith.constant 0 : index
    %728 = vector.load %arg4[%c9_408, %c8_409, %c0_410] : memref<14x32x16xf32, #tpu.memory_space<vmem>>, vector<1x16x16xf32>
    %729 = vector.shape_cast %728 : vector<1x16x16xf32> to vector<16x16xf32>
    %730 = vector.shape_cast %727 : vector<16x16xf32> to vector<1x16x16xf32>
    tpu.vector_store %arg4[%c9_408, %c8_409, %c0_410], %730 {strides = array<i32>} : memref<14x32x16xf32, #tpu.memory_space<vmem>>, vector<1x16x16xf32>,
    %c10_411 = arith.constant 10 : index
    %c8_412 = arith.constant 8 : index
    %c0_413 = arith.constant 0 : index
    %731 = vector.load %arg4[%c10_411, %c8_412, %c0_413] : memref<14x32x16xf32, #tpu.memory_space<vmem>>, vector<1x16x16xf32>
    %732 = vector.shape_cast %731 : vector<1x16x16xf32> to vector<16x16xf32>
    %733 = vector.shape_cast %687 : vector<16x16xf32> to vector<1x16x16xf32>
    tpu.vector_store %arg4[%c10_411, %c8_412, %c0_413], %733 {strides = array<i32>} : memref<14x32x16xf32, #tpu.memory_space<vmem>>, vector<1x16x16xf32>,
    %734 = vector.extract_strided_slice %718 {offsets = [0, 4], sizes = [16, 16], strides = [1, 1]} : vector<16x22xf32> to vector<16x16xf32>
    %c11_414 = arith.constant 11 : index
    %c8_415 = arith.constant 8 : index
    %c0_416 = arith.constant 0 : index
    %735 = vector.load %arg4[%c11_414, %c8_415, %c0_416] : memref<14x32x16xf32, #tpu.memory_space<vmem>>, vector<1x16x16xf32>
    %736 = vector.shape_cast %735 : vector<1x16x16xf32> to vector<16x16xf32>
    %737 = vector.shape_cast %734 : vector<16x16xf32> to vector<1x16x16xf32>
    tpu.vector_store %arg4[%c11_414, %c8_415, %c0_416], %737 {strides = array<i32>} : memref<14x32x16xf32, #tpu.memory_space<vmem>>, vector<1x16x16xf32>,
    %738 = vector.extract_strided_slice %718 {offsets = [0, 5], sizes = [16, 16], strides = [1, 1]} : vector<16x22xf32> to vector<16x16xf32>
    %c12_417 = arith.constant 12 : index
    %c8_418 = arith.constant 8 : index
    %c0_419 = arith.constant 0 : index
    %739 = vector.load %arg4[%c12_417, %c8_418, %c0_419] : memref<14x32x16xf32, #tpu.memory_space<vmem>>, vector<1x16x16xf32>
    %740 = vector.shape_cast %739 : vector<1x16x16xf32> to vector<16x16xf32>
    %741 = vector.shape_cast %738 : vector<16x16xf32> to vector<1x16x16xf32>
    tpu.vector_store %arg4[%c12_417, %c8_418, %c0_419], %741 {strides = array<i32>} : memref<14x32x16xf32, #tpu.memory_space<vmem>>, vector<1x16x16xf32>,
    %742 = vector.extract_strided_slice %718 {offsets = [0, 6], sizes = [16, 16], strides = [1, 1]} : vector<16x22xf32> to vector<16x16xf32>
    %c13_420 = arith.constant 13 : index
    %c8_421 = arith.constant 8 : index
    %c0_422 = arith.constant 0 : index
    %743 = vector.load %arg4[%c13_420, %c8_421, %c0_422] : memref<14x32x16xf32, #tpu.memory_space<vmem>>, vector<1x16x16xf32>
    %744 = vector.shape_cast %743 : vector<1x16x16xf32> to vector<16x16xf32>
    %745 = vector.shape_cast %742 : vector<16x16xf32> to vector<1x16x16xf32>
    tpu.vector_store %arg4[%c13_420, %c8_421, %c0_422], %745 {strides = array<i32>} : memref<14x32x16xf32, #tpu.memory_space<vmem>>, vector<1x16x16xf32>,
    %746 = vector.broadcast %0 : f32 to vector<16x16xf32>
    %c0_423 = arith.constant 0 : index
    %747 = memref.load %arg2[%c0_423] : memref<99xf32, #tpu.memory_space<smem>>
    %c0_424 = arith.constant 0 : index
    %c5_425 = arith.constant 5 : index
    %c0_426 = arith.constant 0 : index
    %748 = vector.load %arg4[%c0_424, %c5_425, %c0_426] : memref<14x32x16xf32, #tpu.memory_space<vmem>>, vector<1x16x16xf32>
    %749 = vector.shape_cast %748 : vector<1x16x16xf32> to vector<16x16xf32>
    %750 = vector.broadcast %747 : f32 to vector<16x16xf32>
    %751 = arith.mulf %750, %749 : vector<16x16xf32>
    %752 = arith.addf %746, %751 : vector<16x16xf32>
    %c7_427 = arith.constant 7 : index
    %753 = memref.load %arg2[%c7_427] : memref<99xf32, #tpu.memory_space<smem>>
    %c0_428 = arith.constant 0 : index
    %c6_429 = arith.constant 6 : index
    %c0_430 = arith.constant 0 : index
    %754 = vector.load %arg4[%c0_428, %c6_429, %c0_430] : memref<14x32x16xf32, #tpu.memory_space<vmem>>, vector<1x16x16xf32>
    %755 = vector.shape_cast %754 : vector<1x16x16xf32> to vector<16x16xf32>
    %756 = vector.broadcast %753 : f32 to vector<16x16xf32>
    %757 = arith.mulf %756, %755 : vector<16x16xf32>
    %758 = arith.addf %752, %757 : vector<16x16xf32>
    %c14_431 = arith.constant 14 : index
    %759 = memref.load %arg2[%c14_431] : memref<99xf32, #tpu.memory_space<smem>>
    %c0_432 = arith.constant 0 : index
    %c7_433 = arith.constant 7 : index
    %c0_434 = arith.constant 0 : index
    %760 = vector.load %arg4[%c0_432, %c7_433, %c0_434] : memref<14x32x16xf32, #tpu.memory_space<vmem>>, vector<1x16x16xf32>
    %761 = vector.shape_cast %760 : vector<1x16x16xf32> to vector<16x16xf32>
    %762 = vector.broadcast %759 : f32 to vector<16x16xf32>
    %763 = arith.mulf %762, %761 : vector<16x16xf32>
    %764 = arith.addf %758, %763 : vector<16x16xf32>
    %c21_435 = arith.constant 21 : index
    %765 = memref.load %arg2[%c21_435] : memref<99xf32, #tpu.memory_space<smem>>
    %c0_436 = arith.constant 0 : index
    %c8_437 = arith.constant 8 : index
    %c0_438 = arith.constant 0 : index
    %766 = vector.load %arg4[%c0_436, %c8_437, %c0_438] : memref<14x32x16xf32, #tpu.memory_space<vmem>>, vector<1x16x16xf32>
    %767 = vector.shape_cast %766 : vector<1x16x16xf32> to vector<16x16xf32>
    %768 = vector.broadcast %765 : f32 to vector<16x16xf32>
    %769 = arith.mulf %768, %767 : vector<16x16xf32>
    %770 = arith.addf %764, %769 : vector<16x16xf32>
    %c28_439 = arith.constant 28 : index
    %771 = memref.load %arg2[%c28_439] : memref<99xf32, #tpu.memory_space<smem>>
    %c0_440 = arith.constant 0 : index
    %c9_441 = arith.constant 9 : index
    %c0_442 = arith.constant 0 : index
    %772 = vector.load %arg4[%c0_440, %c9_441, %c0_442] : memref<14x32x16xf32, #tpu.memory_space<vmem>>, vector<1x16x16xf32>
    %773 = vector.shape_cast %772 : vector<1x16x16xf32> to vector<16x16xf32>
    %774 = vector.broadcast %771 : f32 to vector<16x16xf32>
    %775 = arith.mulf %774, %773 : vector<16x16xf32>
    %776 = arith.addf %770, %775 : vector<16x16xf32>
    %c35_443 = arith.constant 35 : index
    %777 = memref.load %arg2[%c35_443] : memref<99xf32, #tpu.memory_space<smem>>
    %c0_444 = arith.constant 0 : index
    %c10_445 = arith.constant 10 : index
    %c0_446 = arith.constant 0 : index
    %778 = vector.load %arg4[%c0_444, %c10_445, %c0_446] : memref<14x32x16xf32, #tpu.memory_space<vmem>>, vector<1x16x16xf32>
    %779 = vector.shape_cast %778 : vector<1x16x16xf32> to vector<16x16xf32>
    %780 = vector.broadcast %777 : f32 to vector<16x16xf32>
    %781 = arith.mulf %780, %779 : vector<16x16xf32>
    %782 = arith.addf %776, %781 : vector<16x16xf32>
    %c42_447 = arith.constant 42 : index
    %783 = memref.load %arg2[%c42_447] : memref<99xf32, #tpu.memory_space<smem>>
    %c0_448 = arith.constant 0 : index
    %c11_449 = arith.constant 11 : index
    %c0_450 = arith.constant 0 : index
    %784 = vector.load %arg4[%c0_448, %c11_449, %c0_450] : memref<14x32x16xf32, #tpu.memory_space<vmem>>, vector<1x16x16xf32>
    %785 = vector.shape_cast %784 : vector<1x16x16xf32> to vector<16x16xf32>
    %786 = vector.broadcast %783 : f32 to vector<16x16xf32>
    %787 = arith.mulf %786, %785 : vector<16x16xf32>
    %788 = arith.addf %782, %787 : vector<16x16xf32>
    %c1_451 = arith.constant 1 : index
    %789 = memref.load %arg2[%c1_451] : memref<99xf32, #tpu.memory_space<smem>>
    %c1_452 = arith.constant 1 : index
    %c5_453 = arith.constant 5 : index
    %c0_454 = arith.constant 0 : index
    %790 = vector.load %arg4[%c1_452, %c5_453, %c0_454] : memref<14x32x16xf32, #tpu.memory_space<vmem>>, vector<1x16x16xf32>
    %791 = vector.shape_cast %790 : vector<1x16x16xf32> to vector<16x16xf32>
    %792 = vector.broadcast %789 : f32 to vector<16x16xf32>
    %793 = arith.mulf %792, %791 : vector<16x16xf32>
    %794 = arith.addf %788, %793 : vector<16x16xf32>
    %c8_455 = arith.constant 8 : index
    %795 = memref.load %arg2[%c8_455] : memref<99xf32, #tpu.memory_space<smem>>
    %c1_456 = arith.constant 1 : index
    %c6_457 = arith.constant 6 : index
    %c0_458 = arith.constant 0 : index
    %796 = vector.load %arg4[%c1_456, %c6_457, %c0_458] : memref<14x32x16xf32, #tpu.memory_space<vmem>>, vector<1x16x16xf32>
    %797 = vector.shape_cast %796 : vector<1x16x16xf32> to vector<16x16xf32>
    %798 = vector.broadcast %795 : f32 to vector<16x16xf32>
    %799 = arith.mulf %798, %797 : vector<16x16xf32>
    %800 = arith.addf %794, %799 : vector<16x16xf32>
    %c15_459 = arith.constant 15 : index
    %801 = memref.load %arg2[%c15_459] : memref<99xf32, #tpu.memory_space<smem>>
    %c1_460 = arith.constant 1 : index
    %c7_461 = arith.constant 7 : index
    %c0_462 = arith.constant 0 : index
    %802 = vector.load %arg4[%c1_460, %c7_461, %c0_462] : memref<14x32x16xf32, #tpu.memory_space<vmem>>, vector<1x16x16xf32>
    %803 = vector.shape_cast %802 : vector<1x16x16xf32> to vector<16x16xf32>
    %804 = vector.broadcast %801 : f32 to vector<16x16xf32>
    %805 = arith.mulf %804, %803 : vector<16x16xf32>
    %806 = arith.addf %800, %805 : vector<16x16xf32>
    %c22_463 = arith.constant 22 : index
    %807 = memref.load %arg2[%c22_463] : memref<99xf32, #tpu.memory_space<smem>>
    %c1_464 = arith.constant 1 : index
    %c8_465 = arith.constant 8 : index
    %c0_466 = arith.constant 0 : index
    %808 = vector.load %arg4[%c1_464, %c8_465, %c0_466] : memref<14x32x16xf32, #tpu.memory_space<vmem>>, vector<1x16x16xf32>
    %809 = vector.shape_cast %808 : vector<1x16x16xf32> to vector<16x16xf32>
    %810 = vector.broadcast %807 : f32 to vector<16x16xf32>
    %811 = arith.mulf %810, %809 : vector<16x16xf32>
    %812 = arith.addf %806, %811 : vector<16x16xf32>
    %c29_467 = arith.constant 29 : index
    %813 = memref.load %arg2[%c29_467] : memref<99xf32, #tpu.memory_space<smem>>
    %c1_468 = arith.constant 1 : index
    %c9_469 = arith.constant 9 : index
    %c0_470 = arith.constant 0 : index
    %814 = vector.load %arg4[%c1_468, %c9_469, %c0_470] : memref<14x32x16xf32, #tpu.memory_space<vmem>>, vector<1x16x16xf32>
    %815 = vector.shape_cast %814 : vector<1x16x16xf32> to vector<16x16xf32>
    %816 = vector.broadcast %813 : f32 to vector<16x16xf32>
    %817 = arith.mulf %816, %815 : vector<16x16xf32>
    %818 = arith.addf %812, %817 : vector<16x16xf32>
    %c36_471 = arith.constant 36 : index
    %819 = memref.load %arg2[%c36_471] : memref<99xf32, #tpu.memory_space<smem>>
    %c1_472 = arith.constant 1 : index
    %c10_473 = arith.constant 10 : index
    %c0_474 = arith.constant 0 : index
    %820 = vector.load %arg4[%c1_472, %c10_473, %c0_474] : memref<14x32x16xf32, #tpu.memory_space<vmem>>, vector<1x16x16xf32>
    %821 = vector.shape_cast %820 : vector<1x16x16xf32> to vector<16x16xf32>
    %822 = vector.broadcast %819 : f32 to vector<16x16xf32>
    %823 = arith.mulf %822, %821 : vector<16x16xf32>
    %824 = arith.addf %818, %823 : vector<16x16xf32>
    %c43_475 = arith.constant 43 : index
    %825 = memref.load %arg2[%c43_475] : memref<99xf32, #tpu.memory_space<smem>>
    %c1_476 = arith.constant 1 : index
    %c11_477 = arith.constant 11 : index
    %c0_478 = arith.constant 0 : index
    %826 = vector.load %arg4[%c1_476, %c11_477, %c0_478] : memref<14x32x16xf32, #tpu.memory_space<vmem>>, vector<1x16x16xf32>
    %827 = vector.shape_cast %826 : vector<1x16x16xf32> to vector<16x16xf32>
    %828 = vector.broadcast %825 : f32 to vector<16x16xf32>
    %829 = arith.mulf %828, %827 : vector<16x16xf32>
    %830 = arith.addf %824, %829 : vector<16x16xf32>
    %c2_479 = arith.constant 2 : index
    %831 = memref.load %arg2[%c2_479] : memref<99xf32, #tpu.memory_space<smem>>
    %c2_480 = arith.constant 2 : index
    %c5_481 = arith.constant 5 : index
    %c0_482 = arith.constant 0 : index
    %832 = vector.load %arg4[%c2_480, %c5_481, %c0_482] : memref<14x32x16xf32, #tpu.memory_space<vmem>>, vector<1x16x16xf32>
    %833 = vector.shape_cast %832 : vector<1x16x16xf32> to vector<16x16xf32>
    %834 = vector.broadcast %831 : f32 to vector<16x16xf32>
    %835 = arith.mulf %834, %833 : vector<16x16xf32>
    %836 = arith.addf %830, %835 : vector<16x16xf32>
    %c9_483 = arith.constant 9 : index
    %837 = memref.load %arg2[%c9_483] : memref<99xf32, #tpu.memory_space<smem>>
    %c2_484 = arith.constant 2 : index
    %c6_485 = arith.constant 6 : index
    %c0_486 = arith.constant 0 : index
    %838 = vector.load %arg4[%c2_484, %c6_485, %c0_486] : memref<14x32x16xf32, #tpu.memory_space<vmem>>, vector<1x16x16xf32>
    %839 = vector.shape_cast %838 : vector<1x16x16xf32> to vector<16x16xf32>
    %840 = vector.broadcast %837 : f32 to vector<16x16xf32>
    %841 = arith.mulf %840, %839 : vector<16x16xf32>
    %842 = arith.addf %836, %841 : vector<16x16xf32>
    %c16_487 = arith.constant 16 : index
    %843 = memref.load %arg2[%c16_487] : memref<99xf32, #tpu.memory_space<smem>>
    %c2_488 = arith.constant 2 : index
    %c7_489 = arith.constant 7 : index
    %c0_490 = arith.constant 0 : index
    %844 = vector.load %arg4[%c2_488, %c7_489, %c0_490] : memref<14x32x16xf32, #tpu.memory_space<vmem>>, vector<1x16x16xf32>
    %845 = vector.shape_cast %844 : vector<1x16x16xf32> to vector<16x16xf32>
    %846 = vector.broadcast %843 : f32 to vector<16x16xf32>
    %847 = arith.mulf %846, %845 : vector<16x16xf32>
    %848 = arith.addf %842, %847 : vector<16x16xf32>
    %c23_491 = arith.constant 23 : index
    %849 = memref.load %arg2[%c23_491] : memref<99xf32, #tpu.memory_space<smem>>
    %c2_492 = arith.constant 2 : index
    %c8_493 = arith.constant 8 : index
    %c0_494 = arith.constant 0 : index
    %850 = vector.load %arg4[%c2_492, %c8_493, %c0_494] : memref<14x32x16xf32, #tpu.memory_space<vmem>>, vector<1x16x16xf32>
    %851 = vector.shape_cast %850 : vector<1x16x16xf32> to vector<16x16xf32>
    %852 = vector.broadcast %849 : f32 to vector<16x16xf32>
    %853 = arith.mulf %852, %851 : vector<16x16xf32>
    %854 = arith.addf %848, %853 : vector<16x16xf32>
    %c30_495 = arith.constant 30 : index
    %855 = memref.load %arg2[%c30_495] : memref<99xf32, #tpu.memory_space<smem>>
    %c2_496 = arith.constant 2 : index
    %c9_497 = arith.constant 9 : index
    %c0_498 = arith.constant 0 : index
    %856 = vector.load %arg4[%c2_496, %c9_497, %c0_498] : memref<14x32x16xf32, #tpu.memory_space<vmem>>, vector<1x16x16xf32>
    %857 = vector.shape_cast %856 : vector<1x16x16xf32> to vector<16x16xf32>
    %858 = vector.broadcast %855 : f32 to vector<16x16xf32>
    %859 = arith.mulf %858, %857 : vector<16x16xf32>
    %860 = arith.addf %854, %859 : vector<16x16xf32>
    %c37_499 = arith.constant 37 : index
    %861 = memref.load %arg2[%c37_499] : memref<99xf32, #tpu.memory_space<smem>>
    %c2_500 = arith.constant 2 : index
    %c10_501 = arith.constant 10 : index
    %c0_502 = arith.constant 0 : index
    %862 = vector.load %arg4[%c2_500, %c10_501, %c0_502] : memref<14x32x16xf32, #tpu.memory_space<vmem>>, vector<1x16x16xf32>
    %863 = vector.shape_cast %862 : vector<1x16x16xf32> to vector<16x16xf32>
    %864 = vector.broadcast %861 : f32 to vector<16x16xf32>
    %865 = arith.mulf %864, %863 : vector<16x16xf32>
    %866 = arith.addf %860, %865 : vector<16x16xf32>
    %c44_503 = arith.constant 44 : index
    %867 = memref.load %arg2[%c44_503] : memref<99xf32, #tpu.memory_space<smem>>
    %c2_504 = arith.constant 2 : index
    %c11_505 = arith.constant 11 : index
    %c0_506 = arith.constant 0 : index
    %868 = vector.load %arg4[%c2_504, %c11_505, %c0_506] : memref<14x32x16xf32, #tpu.memory_space<vmem>>, vector<1x16x16xf32>
    %869 = vector.shape_cast %868 : vector<1x16x16xf32> to vector<16x16xf32>
    %870 = vector.broadcast %867 : f32 to vector<16x16xf32>
    %871 = arith.mulf %870, %869 : vector<16x16xf32>
    %872 = arith.addf %866, %871 : vector<16x16xf32>
    %c3_507 = arith.constant 3 : index
    %873 = memref.load %arg2[%c3_507] : memref<99xf32, #tpu.memory_space<smem>>
    %c3_508 = arith.constant 3 : index
    %c5_509 = arith.constant 5 : index
    %c0_510 = arith.constant 0 : index
    %874 = vector.load %arg4[%c3_508, %c5_509, %c0_510] : memref<14x32x16xf32, #tpu.memory_space<vmem>>, vector<1x16x16xf32>
    %875 = vector.shape_cast %874 : vector<1x16x16xf32> to vector<16x16xf32>
    %876 = vector.broadcast %873 : f32 to vector<16x16xf32>
    %877 = arith.mulf %876, %875 : vector<16x16xf32>
    %878 = arith.addf %872, %877 : vector<16x16xf32>
    %c10_511 = arith.constant 10 : index
    %879 = memref.load %arg2[%c10_511] : memref<99xf32, #tpu.memory_space<smem>>
    %c3_512 = arith.constant 3 : index
    %c6_513 = arith.constant 6 : index
    %c0_514 = arith.constant 0 : index
    %880 = vector.load %arg4[%c3_512, %c6_513, %c0_514] : memref<14x32x16xf32, #tpu.memory_space<vmem>>, vector<1x16x16xf32>
    %881 = vector.shape_cast %880 : vector<1x16x16xf32> to vector<16x16xf32>
    %882 = vector.broadcast %879 : f32 to vector<16x16xf32>
    %883 = arith.mulf %882, %881 : vector<16x16xf32>
    %884 = arith.addf %878, %883 : vector<16x16xf32>
    %c17_515 = arith.constant 17 : index
    %885 = memref.load %arg2[%c17_515] : memref<99xf32, #tpu.memory_space<smem>>
    %c3_516 = arith.constant 3 : index
    %c7_517 = arith.constant 7 : index
    %c0_518 = arith.constant 0 : index
    %886 = vector.load %arg4[%c3_516, %c7_517, %c0_518] : memref<14x32x16xf32, #tpu.memory_space<vmem>>, vector<1x16x16xf32>
    %887 = vector.shape_cast %886 : vector<1x16x16xf32> to vector<16x16xf32>
    %888 = vector.broadcast %885 : f32 to vector<16x16xf32>
    %889 = arith.mulf %888, %887 : vector<16x16xf32>
    %890 = arith.addf %884, %889 : vector<16x16xf32>
    %c24_519 = arith.constant 24 : index
    %891 = memref.load %arg2[%c24_519] : memref<99xf32, #tpu.memory_space<smem>>
    %c3_520 = arith.constant 3 : index
    %c8_521 = arith.constant 8 : index
    %c0_522 = arith.constant 0 : index
    %892 = vector.load %arg4[%c3_520, %c8_521, %c0_522] : memref<14x32x16xf32, #tpu.memory_space<vmem>>, vector<1x16x16xf32>
    %893 = vector.shape_cast %892 : vector<1x16x16xf32> to vector<16x16xf32>
    %894 = vector.broadcast %891 : f32 to vector<16x16xf32>
    %895 = arith.mulf %894, %893 : vector<16x16xf32>
    %896 = arith.addf %890, %895 : vector<16x16xf32>
    %c31_523 = arith.constant 31 : index
    %897 = memref.load %arg2[%c31_523] : memref<99xf32, #tpu.memory_space<smem>>
    %c3_524 = arith.constant 3 : index
    %c9_525 = arith.constant 9 : index
    %c0_526 = arith.constant 0 : index
    %898 = vector.load %arg4[%c3_524, %c9_525, %c0_526] : memref<14x32x16xf32, #tpu.memory_space<vmem>>, vector<1x16x16xf32>
    %899 = vector.shape_cast %898 : vector<1x16x16xf32> to vector<16x16xf32>
    %900 = vector.broadcast %897 : f32 to vector<16x16xf32>
    %901 = arith.mulf %900, %899 : vector<16x16xf32>
    %902 = arith.addf %896, %901 : vector<16x16xf32>
    %c38_527 = arith.constant 38 : index
    %903 = memref.load %arg2[%c38_527] : memref<99xf32, #tpu.memory_space<smem>>
    %c3_528 = arith.constant 3 : index
    %c10_529 = arith.constant 10 : index
    %c0_530 = arith.constant 0 : index
    %904 = vector.load %arg4[%c3_528, %c10_529, %c0_530] : memref<14x32x16xf32, #tpu.memory_space<vmem>>, vector<1x16x16xf32>
    %905 = vector.shape_cast %904 : vector<1x16x16xf32> to vector<16x16xf32>
    %906 = vector.broadcast %903 : f32 to vector<16x16xf32>
    %907 = arith.mulf %906, %905 : vector<16x16xf32>
    %908 = arith.addf %902, %907 : vector<16x16xf32>
    %c45_531 = arith.constant 45 : index
    %909 = memref.load %arg2[%c45_531] : memref<99xf32, #tpu.memory_space<smem>>
    %c3_532 = arith.constant 3 : index
    %c11_533 = arith.constant 11 : index
    %c0_534 = arith.constant 0 : index
    %910 = vector.load %arg4[%c3_532, %c11_533, %c0_534] : memref<14x32x16xf32, #tpu.memory_space<vmem>>, vector<1x16x16xf32>
    %911 = vector.shape_cast %910 : vector<1x16x16xf32> to vector<16x16xf32>
    %912 = vector.broadcast %909 : f32 to vector<16x16xf32>
    %913 = arith.mulf %912, %911 : vector<16x16xf32>
    %914 = arith.addf %908, %913 : vector<16x16xf32>
    %c4_535 = arith.constant 4 : index
    %915 = memref.load %arg2[%c4_535] : memref<99xf32, #tpu.memory_space<smem>>
    %c4_536 = arith.constant 4 : index
    %c5_537 = arith.constant 5 : index
    %c0_538 = arith.constant 0 : index
    %916 = vector.load %arg4[%c4_536, %c5_537, %c0_538] : memref<14x32x16xf32, #tpu.memory_space<vmem>>, vector<1x16x16xf32>
    %917 = vector.shape_cast %916 : vector<1x16x16xf32> to vector<16x16xf32>
    %918 = vector.broadcast %915 : f32 to vector<16x16xf32>
    %919 = arith.mulf %918, %917 : vector<16x16xf32>
    %920 = arith.addf %914, %919 : vector<16x16xf32>
    %c11_539 = arith.constant 11 : index
    %921 = memref.load %arg2[%c11_539] : memref<99xf32, #tpu.memory_space<smem>>
    %c4_540 = arith.constant 4 : index
    %c6_541 = arith.constant 6 : index
    %c0_542 = arith.constant 0 : index
    %922 = vector.load %arg4[%c4_540, %c6_541, %c0_542] : memref<14x32x16xf32, #tpu.memory_space<vmem>>, vector<1x16x16xf32>
    %923 = vector.shape_cast %922 : vector<1x16x16xf32> to vector<16x16xf32>
    %924 = vector.broadcast %921 : f32 to vector<16x16xf32>
    %925 = arith.mulf %924, %923 : vector<16x16xf32>
    %926 = arith.addf %920, %925 : vector<16x16xf32>
    %c18_543 = arith.constant 18 : index
    %927 = memref.load %arg2[%c18_543] : memref<99xf32, #tpu.memory_space<smem>>
    %c4_544 = arith.constant 4 : index
    %c7_545 = arith.constant 7 : index
    %c0_546 = arith.constant 0 : index
    %928 = vector.load %arg4[%c4_544, %c7_545, %c0_546] : memref<14x32x16xf32, #tpu.memory_space<vmem>>, vector<1x16x16xf32>
    %929 = vector.shape_cast %928 : vector<1x16x16xf32> to vector<16x16xf32>
    %930 = vector.broadcast %927 : f32 to vector<16x16xf32>
    %931 = arith.mulf %930, %929 : vector<16x16xf32>
    %932 = arith.addf %926, %931 : vector<16x16xf32>
    %c25_547 = arith.constant 25 : index
    %933 = memref.load %arg2[%c25_547] : memref<99xf32, #tpu.memory_space<smem>>
    %c4_548 = arith.constant 4 : index
    %c8_549 = arith.constant 8 : index
    %c0_550 = arith.constant 0 : index
    %934 = vector.load %arg4[%c4_548, %c8_549, %c0_550] : memref<14x32x16xf32, #tpu.memory_space<vmem>>, vector<1x16x16xf32>
    %935 = vector.shape_cast %934 : vector<1x16x16xf32> to vector<16x16xf32>
    %936 = vector.broadcast %933 : f32 to vector<16x16xf32>
    %937 = arith.mulf %936, %935 : vector<16x16xf32>
    %938 = arith.addf %932, %937 : vector<16x16xf32>
    %c32_551 = arith.constant 32 : index
    %939 = memref.load %arg2[%c32_551] : memref<99xf32, #tpu.memory_space<smem>>
    %c4_552 = arith.constant 4 : index
    %c9_553 = arith.constant 9 : index
    %c0_554 = arith.constant 0 : index
    %940 = vector.load %arg4[%c4_552, %c9_553, %c0_554] : memref<14x32x16xf32, #tpu.memory_space<vmem>>, vector<1x16x16xf32>
    %941 = vector.shape_cast %940 : vector<1x16x16xf32> to vector<16x16xf32>
    %942 = vector.broadcast %939 : f32 to vector<16x16xf32>
    %943 = arith.mulf %942, %941 : vector<16x16xf32>
    %944 = arith.addf %938, %943 : vector<16x16xf32>
    %c39_555 = arith.constant 39 : index
    %945 = memref.load %arg2[%c39_555] : memref<99xf32, #tpu.memory_space<smem>>
    %c4_556 = arith.constant 4 : index
    %c10_557 = arith.constant 10 : index
    %c0_558 = arith.constant 0 : index
    %946 = vector.load %arg4[%c4_556, %c10_557, %c0_558] : memref<14x32x16xf32, #tpu.memory_space<vmem>>, vector<1x16x16xf32>
    %947 = vector.shape_cast %946 : vector<1x16x16xf32> to vector<16x16xf32>
    %948 = vector.broadcast %945 : f32 to vector<16x16xf32>
    %949 = arith.mulf %948, %947 : vector<16x16xf32>
    %950 = arith.addf %944, %949 : vector<16x16xf32>
    %c46_559 = arith.constant 46 : index
    %951 = memref.load %arg2[%c46_559] : memref<99xf32, #tpu.memory_space<smem>>
    %c4_560 = arith.constant 4 : index
    %c11_561 = arith.constant 11 : index
    %c0_562 = arith.constant 0 : index
    %952 = vector.load %arg4[%c4_560, %c11_561, %c0_562] : memref<14x32x16xf32, #tpu.memory_space<vmem>>, vector<1x16x16xf32>
    %953 = vector.shape_cast %952 : vector<1x16x16xf32> to vector<16x16xf32>
    %954 = vector.broadcast %951 : f32 to vector<16x16xf32>
    %955 = arith.mulf %954, %953 : vector<16x16xf32>
    %956 = arith.addf %950, %955 : vector<16x16xf32>
    %c5_563 = arith.constant 5 : index
    %957 = memref.load %arg2[%c5_563] : memref<99xf32, #tpu.memory_space<smem>>
    %c5_564 = arith.constant 5 : index
    %c5_565 = arith.constant 5 : index
    %c0_566 = arith.constant 0 : index
    %958 = vector.load %arg4[%c5_564, %c5_565, %c0_566] : memref<14x32x16xf32, #tpu.memory_space<vmem>>, vector<1x16x16xf32>
    %959 = vector.shape_cast %958 : vector<1x16x16xf32> to vector<16x16xf32>
    %960 = vector.broadcast %957 : f32 to vector<16x16xf32>
    %961 = arith.mulf %960, %959 : vector<16x16xf32>
    %962 = arith.addf %956, %961 : vector<16x16xf32>
    %c12_567 = arith.constant 12 : index
    %963 = memref.load %arg2[%c12_567] : memref<99xf32, #tpu.memory_space<smem>>
    %c5_568 = arith.constant 5 : index
    %c6_569 = arith.constant 6 : index
    %c0_570 = arith.constant 0 : index
    %964 = vector.load %arg4[%c5_568, %c6_569, %c0_570] : memref<14x32x16xf32, #tpu.memory_space<vmem>>, vector<1x16x16xf32>
    %965 = vector.shape_cast %964 : vector<1x16x16xf32> to vector<16x16xf32>
    %966 = vector.broadcast %963 : f32 to vector<16x16xf32>
    %967 = arith.mulf %966, %965 : vector<16x16xf32>
    %968 = arith.addf %962, %967 : vector<16x16xf32>
    %c19_571 = arith.constant 19 : index
    %969 = memref.load %arg2[%c19_571] : memref<99xf32, #tpu.memory_space<smem>>
    %c5_572 = arith.constant 5 : index
    %c7_573 = arith.constant 7 : index
    %c0_574 = arith.constant 0 : index
    %970 = vector.load %arg4[%c5_572, %c7_573, %c0_574] : memref<14x32x16xf32, #tpu.memory_space<vmem>>, vector<1x16x16xf32>
    %971 = vector.shape_cast %970 : vector<1x16x16xf32> to vector<16x16xf32>
    %972 = vector.broadcast %969 : f32 to vector<16x16xf32>
    %973 = arith.mulf %972, %971 : vector<16x16xf32>
    %974 = arith.addf %968, %973 : vector<16x16xf32>
    %c26_575 = arith.constant 26 : index
    %975 = memref.load %arg2[%c26_575] : memref<99xf32, #tpu.memory_space<smem>>
    %c5_576 = arith.constant 5 : index
    %c8_577 = arith.constant 8 : index
    %c0_578 = arith.constant 0 : index
    %976 = vector.load %arg4[%c5_576, %c8_577, %c0_578] : memref<14x32x16xf32, #tpu.memory_space<vmem>>, vector<1x16x16xf32>
    %977 = vector.shape_cast %976 : vector<1x16x16xf32> to vector<16x16xf32>
    %978 = vector.broadcast %975 : f32 to vector<16x16xf32>
    %979 = arith.mulf %978, %977 : vector<16x16xf32>
    %980 = arith.addf %974, %979 : vector<16x16xf32>
    %c33_579 = arith.constant 33 : index
    %981 = memref.load %arg2[%c33_579] : memref<99xf32, #tpu.memory_space<smem>>
    %c5_580 = arith.constant 5 : index
    %c9_581 = arith.constant 9 : index
    %c0_582 = arith.constant 0 : index
    %982 = vector.load %arg4[%c5_580, %c9_581, %c0_582] : memref<14x32x16xf32, #tpu.memory_space<vmem>>, vector<1x16x16xf32>
    %983 = vector.shape_cast %982 : vector<1x16x16xf32> to vector<16x16xf32>
    %984 = vector.broadcast %981 : f32 to vector<16x16xf32>
    %985 = arith.mulf %984, %983 : vector<16x16xf32>
    %986 = arith.addf %980, %985 : vector<16x16xf32>
    %c40_583 = arith.constant 40 : index
    %987 = memref.load %arg2[%c40_583] : memref<99xf32, #tpu.memory_space<smem>>
    %c5_584 = arith.constant 5 : index
    %c10_585 = arith.constant 10 : index
    %c0_586 = arith.constant 0 : index
    %988 = vector.load %arg4[%c5_584, %c10_585, %c0_586] : memref<14x32x16xf32, #tpu.memory_space<vmem>>, vector<1x16x16xf32>
    %989 = vector.shape_cast %988 : vector<1x16x16xf32> to vector<16x16xf32>
    %990 = vector.broadcast %987 : f32 to vector<16x16xf32>
    %991 = arith.mulf %990, %989 : vector<16x16xf32>
    %992 = arith.addf %986, %991 : vector<16x16xf32>
    %c47_587 = arith.constant 47 : index
    %993 = memref.load %arg2[%c47_587] : memref<99xf32, #tpu.memory_space<smem>>
    %c5_588 = arith.constant 5 : index
    %c11_589 = arith.constant 11 : index
    %c0_590 = arith.constant 0 : index
    %994 = vector.load %arg4[%c5_588, %c11_589, %c0_590] : memref<14x32x16xf32, #tpu.memory_space<vmem>>, vector<1x16x16xf32>
    %995 = vector.shape_cast %994 : vector<1x16x16xf32> to vector<16x16xf32>
    %996 = vector.broadcast %993 : f32 to vector<16x16xf32>
    %997 = arith.mulf %996, %995 : vector<16x16xf32>
    %998 = arith.addf %992, %997 : vector<16x16xf32>
    %c6_591 = arith.constant 6 : index
    %999 = memref.load %arg2[%c6_591] : memref<99xf32, #tpu.memory_space<smem>>
    %c6_592 = arith.constant 6 : index
    %c5_593 = arith.constant 5 : index
    %c0_594 = arith.constant 0 : index
    %1000 = vector.load %arg4[%c6_592, %c5_593, %c0_594] : memref<14x32x16xf32, #tpu.memory_space<vmem>>, vector<1x16x16xf32>
    %1001 = vector.shape_cast %1000 : vector<1x16x16xf32> to vector<16x16xf32>
    %1002 = vector.broadcast %999 : f32 to vector<16x16xf32>
    %1003 = arith.mulf %1002, %1001 : vector<16x16xf32>
    %1004 = arith.addf %998, %1003 : vector<16x16xf32>
    %c13_595 = arith.constant 13 : index
    %1005 = memref.load %arg2[%c13_595] : memref<99xf32, #tpu.memory_space<smem>>
    %c6_596 = arith.constant 6 : index
    %c6_597 = arith.constant 6 : index
    %c0_598 = arith.constant 0 : index
    %1006 = vector.load %arg4[%c6_596, %c6_597, %c0_598] : memref<14x32x16xf32, #tpu.memory_space<vmem>>, vector<1x16x16xf32>
    %1007 = vector.shape_cast %1006 : vector<1x16x16xf32> to vector<16x16xf32>
    %1008 = vector.broadcast %1005 : f32 to vector<16x16xf32>
    %1009 = arith.mulf %1008, %1007 : vector<16x16xf32>
    %1010 = arith.addf %1004, %1009 : vector<16x16xf32>
    %c20_599 = arith.constant 20 : index
    %1011 = memref.load %arg2[%c20_599] : memref<99xf32, #tpu.memory_space<smem>>
    %c6_600 = arith.constant 6 : index
    %c7_601 = arith.constant 7 : index
    %c0_602 = arith.constant 0 : index
    %1012 = vector.load %arg4[%c6_600, %c7_601, %c0_602] : memref<14x32x16xf32, #tpu.memory_space<vmem>>, vector<1x16x16xf32>
    %1013 = vector.shape_cast %1012 : vector<1x16x16xf32> to vector<16x16xf32>
    %1014 = vector.broadcast %1011 : f32 to vector<16x16xf32>
    %1015 = arith.mulf %1014, %1013 : vector<16x16xf32>
    %1016 = arith.addf %1010, %1015 : vector<16x16xf32>
    %c27_603 = arith.constant 27 : index
    %1017 = memref.load %arg2[%c27_603] : memref<99xf32, #tpu.memory_space<smem>>
    %c6_604 = arith.constant 6 : index
    %c8_605 = arith.constant 8 : index
    %c0_606 = arith.constant 0 : index
    %1018 = vector.load %arg4[%c6_604, %c8_605, %c0_606] : memref<14x32x16xf32, #tpu.memory_space<vmem>>, vector<1x16x16xf32>
    %1019 = vector.shape_cast %1018 : vector<1x16x16xf32> to vector<16x16xf32>
    %1020 = vector.broadcast %1017 : f32 to vector<16x16xf32>
    %1021 = arith.mulf %1020, %1019 : vector<16x16xf32>
    %1022 = arith.addf %1016, %1021 : vector<16x16xf32>
    %c34_607 = arith.constant 34 : index
    %1023 = memref.load %arg2[%c34_607] : memref<99xf32, #tpu.memory_space<smem>>
    %c6_608 = arith.constant 6 : index
    %c9_609 = arith.constant 9 : index
    %c0_610 = arith.constant 0 : index
    %1024 = vector.load %arg4[%c6_608, %c9_609, %c0_610] : memref<14x32x16xf32, #tpu.memory_space<vmem>>, vector<1x16x16xf32>
    %1025 = vector.shape_cast %1024 : vector<1x16x16xf32> to vector<16x16xf32>
    %1026 = vector.broadcast %1023 : f32 to vector<16x16xf32>
    %1027 = arith.mulf %1026, %1025 : vector<16x16xf32>
    %1028 = arith.addf %1022, %1027 : vector<16x16xf32>
    %c41_611 = arith.constant 41 : index
    %1029 = memref.load %arg2[%c41_611] : memref<99xf32, #tpu.memory_space<smem>>
    %c6_612 = arith.constant 6 : index
    %c10_613 = arith.constant 10 : index
    %c0_614 = arith.constant 0 : index
    %1030 = vector.load %arg4[%c6_612, %c10_613, %c0_614] : memref<14x32x16xf32, #tpu.memory_space<vmem>>, vector<1x16x16xf32>
    %1031 = vector.shape_cast %1030 : vector<1x16x16xf32> to vector<16x16xf32>
    %1032 = vector.broadcast %1029 : f32 to vector<16x16xf32>
    %1033 = arith.mulf %1032, %1031 : vector<16x16xf32>
    %1034 = arith.addf %1028, %1033 : vector<16x16xf32>
    %c48_615 = arith.constant 48 : index
    %1035 = memref.load %arg2[%c48_615] : memref<99xf32, #tpu.memory_space<smem>>
    %c6_616 = arith.constant 6 : index
    %c11_617 = arith.constant 11 : index
    %c0_618 = arith.constant 0 : index
    %1036 = vector.load %arg4[%c6_616, %c11_617, %c0_618] : memref<14x32x16xf32, #tpu.memory_space<vmem>>, vector<1x16x16xf32>
    %1037 = vector.shape_cast %1036 : vector<1x16x16xf32> to vector<16x16xf32>
    %1038 = vector.broadcast %1035 : f32 to vector<16x16xf32>
    %1039 = arith.mulf %1038, %1037 : vector<16x16xf32>
    %1040 = arith.addf %1034, %1039 : vector<16x16xf32>
    %c49_619 = arith.constant 49 : index
    %1041 = memref.load %arg2[%c49_619] : memref<99xf32, #tpu.memory_space<smem>>
    %c7_620 = arith.constant 7 : index
    %c5_621 = arith.constant 5 : index
    %c0_622 = arith.constant 0 : index
    %1042 = vector.load %arg4[%c7_620, %c5_621, %c0_622] : memref<14x32x16xf32, #tpu.memory_space<vmem>>, vector<1x16x16xf32>
    %1043 = vector.shape_cast %1042 : vector<1x16x16xf32> to vector<16x16xf32>
    %1044 = vector.broadcast %1041 : f32 to vector<16x16xf32>
    %1045 = arith.mulf %1044, %1043 : vector<16x16xf32>
    %1046 = arith.addf %1040, %1045 : vector<16x16xf32>
    %c56_623 = arith.constant 56 : index
    %1047 = memref.load %arg2[%c56_623] : memref<99xf32, #tpu.memory_space<smem>>
    %c7_624 = arith.constant 7 : index
    %c6_625 = arith.constant 6 : index
    %c0_626 = arith.constant 0 : index
    %1048 = vector.load %arg4[%c7_624, %c6_625, %c0_626] : memref<14x32x16xf32, #tpu.memory_space<vmem>>, vector<1x16x16xf32>
    %1049 = vector.shape_cast %1048 : vector<1x16x16xf32> to vector<16x16xf32>
    %1050 = vector.broadcast %1047 : f32 to vector<16x16xf32>
    %1051 = arith.mulf %1050, %1049 : vector<16x16xf32>
    %1052 = arith.addf %1046, %1051 : vector<16x16xf32>
    %c63_627 = arith.constant 63 : index
    %1053 = memref.load %arg2[%c63_627] : memref<99xf32, #tpu.memory_space<smem>>
    %c7_628 = arith.constant 7 : index
    %c7_629 = arith.constant 7 : index
    %c0_630 = arith.constant 0 : index
    %1054 = vector.load %arg4[%c7_628, %c7_629, %c0_630] : memref<14x32x16xf32, #tpu.memory_space<vmem>>, vector<1x16x16xf32>
    %1055 = vector.shape_cast %1054 : vector<1x16x16xf32> to vector<16x16xf32>
    %1056 = vector.broadcast %1053 : f32 to vector<16x16xf32>
    %1057 = arith.mulf %1056, %1055 : vector<16x16xf32>
    %1058 = arith.addf %1052, %1057 : vector<16x16xf32>
    %c70_631 = arith.constant 70 : index
    %1059 = memref.load %arg2[%c70_631] : memref<99xf32, #tpu.memory_space<smem>>
    %c7_632 = arith.constant 7 : index
    %c8_633 = arith.constant 8 : index
    %c0_634 = arith.constant 0 : index
    %1060 = vector.load %arg4[%c7_632, %c8_633, %c0_634] : memref<14x32x16xf32, #tpu.memory_space<vmem>>, vector<1x16x16xf32>
    %1061 = vector.shape_cast %1060 : vector<1x16x16xf32> to vector<16x16xf32>
    %1062 = vector.broadcast %1059 : f32 to vector<16x16xf32>
    %1063 = arith.mulf %1062, %1061 : vector<16x16xf32>
    %1064 = arith.addf %1058, %1063 : vector<16x16xf32>
    %c77_635 = arith.constant 77 : index
    %1065 = memref.load %arg2[%c77_635] : memref<99xf32, #tpu.memory_space<smem>>
    %c7_636 = arith.constant 7 : index
    %c9_637 = arith.constant 9 : index
    %c0_638 = arith.constant 0 : index
    %1066 = vector.load %arg4[%c7_636, %c9_637, %c0_638] : memref<14x32x16xf32, #tpu.memory_space<vmem>>, vector<1x16x16xf32>
    %1067 = vector.shape_cast %1066 : vector<1x16x16xf32> to vector<16x16xf32>
    %1068 = vector.broadcast %1065 : f32 to vector<16x16xf32>
    %1069 = arith.mulf %1068, %1067 : vector<16x16xf32>
    %1070 = arith.addf %1064, %1069 : vector<16x16xf32>
    %c84_639 = arith.constant 84 : index
    %1071 = memref.load %arg2[%c84_639] : memref<99xf32, #tpu.memory_space<smem>>
    %c7_640 = arith.constant 7 : index
    %c10_641 = arith.constant 10 : index
    %c0_642 = arith.constant 0 : index
    %1072 = vector.load %arg4[%c7_640, %c10_641, %c0_642] : memref<14x32x16xf32, #tpu.memory_space<vmem>>, vector<1x16x16xf32>
    %1073 = vector.shape_cast %1072 : vector<1x16x16xf32> to vector<16x16xf32>
    %1074 = vector.broadcast %1071 : f32 to vector<16x16xf32>
    %1075 = arith.mulf %1074, %1073 : vector<16x16xf32>
    %1076 = arith.addf %1070, %1075 : vector<16x16xf32>
    %c91_643 = arith.constant 91 : index
    %1077 = memref.load %arg2[%c91_643] : memref<99xf32, #tpu.memory_space<smem>>
    %c7_644 = arith.constant 7 : index
    %c11_645 = arith.constant 11 : index
    %c0_646 = arith.constant 0 : index
    %1078 = vector.load %arg4[%c7_644, %c11_645, %c0_646] : memref<14x32x16xf32, #tpu.memory_space<vmem>>, vector<1x16x16xf32>
    %1079 = vector.shape_cast %1078 : vector<1x16x16xf32> to vector<16x16xf32>
    %1080 = vector.broadcast %1077 : f32 to vector<16x16xf32>
    %1081 = arith.mulf %1080, %1079 : vector<16x16xf32>
    %1082 = arith.addf %1076, %1081 : vector<16x16xf32>
    %c50_647 = arith.constant 50 : index
    %1083 = memref.load %arg2[%c50_647] : memref<99xf32, #tpu.memory_space<smem>>
    %c8_648 = arith.constant 8 : index
    %c5_649 = arith.constant 5 : index
    %c0_650 = arith.constant 0 : index
    %1084 = vector.load %arg4[%c8_648, %c5_649, %c0_650] : memref<14x32x16xf32, #tpu.memory_space<vmem>>, vector<1x16x16xf32>
    %1085 = vector.shape_cast %1084 : vector<1x16x16xf32> to vector<16x16xf32>
    %1086 = vector.broadcast %1083 : f32 to vector<16x16xf32>
    %1087 = arith.mulf %1086, %1085 : vector<16x16xf32>
    %1088 = arith.addf %1082, %1087 : vector<16x16xf32>
    %c57_651 = arith.constant 57 : index
    %1089 = memref.load %arg2[%c57_651] : memref<99xf32, #tpu.memory_space<smem>>
    %c8_652 = arith.constant 8 : index
    %c6_653 = arith.constant 6 : index
    %c0_654 = arith.constant 0 : index
    %1090 = vector.load %arg4[%c8_652, %c6_653, %c0_654] : memref<14x32x16xf32, #tpu.memory_space<vmem>>, vector<1x16x16xf32>
    %1091 = vector.shape_cast %1090 : vector<1x16x16xf32> to vector<16x16xf32>
    %1092 = vector.broadcast %1089 : f32 to vector<16x16xf32>
    %1093 = arith.mulf %1092, %1091 : vector<16x16xf32>
    %1094 = arith.addf %1088, %1093 : vector<16x16xf32>
    %c64_655 = arith.constant 64 : index
    %1095 = memref.load %arg2[%c64_655] : memref<99xf32, #tpu.memory_space<smem>>
    %c8_656 = arith.constant 8 : index
    %c7_657 = arith.constant 7 : index
    %c0_658 = arith.constant 0 : index
    %1096 = vector.load %arg4[%c8_656, %c7_657, %c0_658] : memref<14x32x16xf32, #tpu.memory_space<vmem>>, vector<1x16x16xf32>
    %1097 = vector.shape_cast %1096 : vector<1x16x16xf32> to vector<16x16xf32>
    %1098 = vector.broadcast %1095 : f32 to vector<16x16xf32>
    %1099 = arith.mulf %1098, %1097 : vector<16x16xf32>
    %1100 = arith.addf %1094, %1099 : vector<16x16xf32>
    %c71_659 = arith.constant 71 : index
    %1101 = memref.load %arg2[%c71_659] : memref<99xf32, #tpu.memory_space<smem>>
    %c8_660 = arith.constant 8 : index
    %c8_661 = arith.constant 8 : index
    %c0_662 = arith.constant 0 : index
    %1102 = vector.load %arg4[%c8_660, %c8_661, %c0_662] : memref<14x32x16xf32, #tpu.memory_space<vmem>>, vector<1x16x16xf32>
    %1103 = vector.shape_cast %1102 : vector<1x16x16xf32> to vector<16x16xf32>
    %1104 = vector.broadcast %1101 : f32 to vector<16x16xf32>
    %1105 = arith.mulf %1104, %1103 : vector<16x16xf32>
    %1106 = arith.addf %1100, %1105 : vector<16x16xf32>
    %c78_663 = arith.constant 78 : index
    %1107 = memref.load %arg2[%c78_663] : memref<99xf32, #tpu.memory_space<smem>>
    %c8_664 = arith.constant 8 : index
    %c9_665 = arith.constant 9 : index
    %c0_666 = arith.constant 0 : index
    %1108 = vector.load %arg4[%c8_664, %c9_665, %c0_666] : memref<14x32x16xf32, #tpu.memory_space<vmem>>, vector<1x16x16xf32>
    %1109 = vector.shape_cast %1108 : vector<1x16x16xf32> to vector<16x16xf32>
    %1110 = vector.broadcast %1107 : f32 to vector<16x16xf32>
    %1111 = arith.mulf %1110, %1109 : vector<16x16xf32>
    %1112 = arith.addf %1106, %1111 : vector<16x16xf32>
    %c85_667 = arith.constant 85 : index
    %1113 = memref.load %arg2[%c85_667] : memref<99xf32, #tpu.memory_space<smem>>
    %c8_668 = arith.constant 8 : index
    %c10_669 = arith.constant 10 : index
    %c0_670 = arith.constant 0 : index
    %1114 = vector.load %arg4[%c8_668, %c10_669, %c0_670] : memref<14x32x16xf32, #tpu.memory_space<vmem>>, vector<1x16x16xf32>
    %1115 = vector.shape_cast %1114 : vector<1x16x16xf32> to vector<16x16xf32>
    %1116 = vector.broadcast %1113 : f32 to vector<16x16xf32>
    %1117 = arith.mulf %1116, %1115 : vector<16x16xf32>
    %1118 = arith.addf %1112, %1117 : vector<16x16xf32>
    %c92_671 = arith.constant 92 : index
    %1119 = memref.load %arg2[%c92_671] : memref<99xf32, #tpu.memory_space<smem>>
    %c8_672 = arith.constant 8 : index
    %c11_673 = arith.constant 11 : index
    %c0_674 = arith.constant 0 : index
    %1120 = vector.load %arg4[%c8_672, %c11_673, %c0_674] : memref<14x32x16xf32, #tpu.memory_space<vmem>>, vector<1x16x16xf32>
    %1121 = vector.shape_cast %1120 : vector<1x16x16xf32> to vector<16x16xf32>
    %1122 = vector.broadcast %1119 : f32 to vector<16x16xf32>
    %1123 = arith.mulf %1122, %1121 : vector<16x16xf32>
    %1124 = arith.addf %1118, %1123 : vector<16x16xf32>
    %c51_675 = arith.constant 51 : index
    %1125 = memref.load %arg2[%c51_675] : memref<99xf32, #tpu.memory_space<smem>>
    %c9_676 = arith.constant 9 : index
    %c5_677 = arith.constant 5 : index
    %c0_678 = arith.constant 0 : index
    %1126 = vector.load %arg4[%c9_676, %c5_677, %c0_678] : memref<14x32x16xf32, #tpu.memory_space<vmem>>, vector<1x16x16xf32>
    %1127 = vector.shape_cast %1126 : vector<1x16x16xf32> to vector<16x16xf32>
    %1128 = vector.broadcast %1125 : f32 to vector<16x16xf32>
    %1129 = arith.mulf %1128, %1127 : vector<16x16xf32>
    %1130 = arith.addf %1124, %1129 : vector<16x16xf32>
    %c58_679 = arith.constant 58 : index
    %1131 = memref.load %arg2[%c58_679] : memref<99xf32, #tpu.memory_space<smem>>
    %c9_680 = arith.constant 9 : index
    %c6_681 = arith.constant 6 : index
    %c0_682 = arith.constant 0 : index
    %1132 = vector.load %arg4[%c9_680, %c6_681, %c0_682] : memref<14x32x16xf32, #tpu.memory_space<vmem>>, vector<1x16x16xf32>
    %1133 = vector.shape_cast %1132 : vector<1x16x16xf32> to vector<16x16xf32>
    %1134 = vector.broadcast %1131 : f32 to vector<16x16xf32>
    %1135 = arith.mulf %1134, %1133 : vector<16x16xf32>
    %1136 = arith.addf %1130, %1135 : vector<16x16xf32>
    %c65_683 = arith.constant 65 : index
    %1137 = memref.load %arg2[%c65_683] : memref<99xf32, #tpu.memory_space<smem>>
    %c9_684 = arith.constant 9 : index
    %c7_685 = arith.constant 7 : index
    %c0_686 = arith.constant 0 : index
    %1138 = vector.load %arg4[%c9_684, %c7_685, %c0_686] : memref<14x32x16xf32, #tpu.memory_space<vmem>>, vector<1x16x16xf32>
    %1139 = vector.shape_cast %1138 : vector<1x16x16xf32> to vector<16x16xf32>
    %1140 = vector.broadcast %1137 : f32 to vector<16x16xf32>
    %1141 = arith.mulf %1140, %1139 : vector<16x16xf32>
    %1142 = arith.addf %1136, %1141 : vector<16x16xf32>
    %c72_687 = arith.constant 72 : index
    %1143 = memref.load %arg2[%c72_687] : memref<99xf32, #tpu.memory_space<smem>>
    %c9_688 = arith.constant 9 : index
    %c8_689 = arith.constant 8 : index
    %c0_690 = arith.constant 0 : index
    %1144 = vector.load %arg4[%c9_688, %c8_689, %c0_690] : memref<14x32x16xf32, #tpu.memory_space<vmem>>, vector<1x16x16xf32>
    %1145 = vector.shape_cast %1144 : vector<1x16x16xf32> to vector<16x16xf32>
    %1146 = vector.broadcast %1143 : f32 to vector<16x16xf32>
    %1147 = arith.mulf %1146, %1145 : vector<16x16xf32>
    %1148 = arith.addf %1142, %1147 : vector<16x16xf32>
    %c79_691 = arith.constant 79 : index
    %1149 = memref.load %arg2[%c79_691] : memref<99xf32, #tpu.memory_space<smem>>
    %c9_692 = arith.constant 9 : index
    %c9_693 = arith.constant 9 : index
    %c0_694 = arith.constant 0 : index
    %1150 = vector.load %arg4[%c9_692, %c9_693, %c0_694] : memref<14x32x16xf32, #tpu.memory_space<vmem>>, vector<1x16x16xf32>
    %1151 = vector.shape_cast %1150 : vector<1x16x16xf32> to vector<16x16xf32>
    %1152 = vector.broadcast %1149 : f32 to vector<16x16xf32>
    %1153 = arith.mulf %1152, %1151 : vector<16x16xf32>
    %1154 = arith.addf %1148, %1153 : vector<16x16xf32>
    %c86_695 = arith.constant 86 : index
    %1155 = memref.load %arg2[%c86_695] : memref<99xf32, #tpu.memory_space<smem>>
    %c9_696 = arith.constant 9 : index
    %c10_697 = arith.constant 10 : index
    %c0_698 = arith.constant 0 : index
    %1156 = vector.load %arg4[%c9_696, %c10_697, %c0_698] : memref<14x32x16xf32, #tpu.memory_space<vmem>>, vector<1x16x16xf32>
    %1157 = vector.shape_cast %1156 : vector<1x16x16xf32> to vector<16x16xf32>
    %1158 = vector.broadcast %1155 : f32 to vector<16x16xf32>
    %1159 = arith.mulf %1158, %1157 : vector<16x16xf32>
    %1160 = arith.addf %1154, %1159 : vector<16x16xf32>
    %c93_699 = arith.constant 93 : index
    %1161 = memref.load %arg2[%c93_699] : memref<99xf32, #tpu.memory_space<smem>>
    %c9_700 = arith.constant 9 : index
    %c11_701 = arith.constant 11 : index
    %c0_702 = arith.constant 0 : index
    %1162 = vector.load %arg4[%c9_700, %c11_701, %c0_702] : memref<14x32x16xf32, #tpu.memory_space<vmem>>, vector<1x16x16xf32>
    %1163 = vector.shape_cast %1162 : vector<1x16x16xf32> to vector<16x16xf32>
    %1164 = vector.broadcast %1161 : f32 to vector<16x16xf32>
    %1165 = arith.mulf %1164, %1163 : vector<16x16xf32>
    %1166 = arith.addf %1160, %1165 : vector<16x16xf32>
    %c52_703 = arith.constant 52 : index
    %1167 = memref.load %arg2[%c52_703] : memref<99xf32, #tpu.memory_space<smem>>
    %c10_704 = arith.constant 10 : index
    %c5_705 = arith.constant 5 : index
    %c0_706 = arith.constant 0 : index
    %1168 = vector.load %arg4[%c10_704, %c5_705, %c0_706] : memref<14x32x16xf32, #tpu.memory_space<vmem>>, vector<1x16x16xf32>
    %1169 = vector.shape_cast %1168 : vector<1x16x16xf32> to vector<16x16xf32>
    %1170 = vector.broadcast %1167 : f32 to vector<16x16xf32>
    %1171 = arith.mulf %1170, %1169 : vector<16x16xf32>
    %1172 = arith.addf %1166, %1171 : vector<16x16xf32>
    %c59_707 = arith.constant 59 : index
    %1173 = memref.load %arg2[%c59_707] : memref<99xf32, #tpu.memory_space<smem>>
    %c10_708 = arith.constant 10 : index
    %c6_709 = arith.constant 6 : index
    %c0_710 = arith.constant 0 : index
    %1174 = vector.load %arg4[%c10_708, %c6_709, %c0_710] : memref<14x32x16xf32, #tpu.memory_space<vmem>>, vector<1x16x16xf32>
    %1175 = vector.shape_cast %1174 : vector<1x16x16xf32> to vector<16x16xf32>
    %1176 = vector.broadcast %1173 : f32 to vector<16x16xf32>
    %1177 = arith.mulf %1176, %1175 : vector<16x16xf32>
    %1178 = arith.addf %1172, %1177 : vector<16x16xf32>
    %c66_711 = arith.constant 66 : index
    %1179 = memref.load %arg2[%c66_711] : memref<99xf32, #tpu.memory_space<smem>>
    %c10_712 = arith.constant 10 : index
    %c7_713 = arith.constant 7 : index
    %c0_714 = arith.constant 0 : index
    %1180 = vector.load %arg4[%c10_712, %c7_713, %c0_714] : memref<14x32x16xf32, #tpu.memory_space<vmem>>, vector<1x16x16xf32>
    %1181 = vector.shape_cast %1180 : vector<1x16x16xf32> to vector<16x16xf32>
    %1182 = vector.broadcast %1179 : f32 to vector<16x16xf32>
    %1183 = arith.mulf %1182, %1181 : vector<16x16xf32>
    %1184 = arith.addf %1178, %1183 : vector<16x16xf32>
    %c73_715 = arith.constant 73 : index
    %1185 = memref.load %arg2[%c73_715] : memref<99xf32, #tpu.memory_space<smem>>
    %c10_716 = arith.constant 10 : index
    %c8_717 = arith.constant 8 : index
    %c0_718 = arith.constant 0 : index
    %1186 = vector.load %arg4[%c10_716, %c8_717, %c0_718] : memref<14x32x16xf32, #tpu.memory_space<vmem>>, vector<1x16x16xf32>
    %1187 = vector.shape_cast %1186 : vector<1x16x16xf32> to vector<16x16xf32>
    %1188 = vector.broadcast %1185 : f32 to vector<16x16xf32>
    %1189 = arith.mulf %1188, %1187 : vector<16x16xf32>
    %1190 = arith.addf %1184, %1189 : vector<16x16xf32>
    %c80_719 = arith.constant 80 : index
    %1191 = memref.load %arg2[%c80_719] : memref<99xf32, #tpu.memory_space<smem>>
    %c10_720 = arith.constant 10 : index
    %c9_721 = arith.constant 9 : index
    %c0_722 = arith.constant 0 : index
    %1192 = vector.load %arg4[%c10_720, %c9_721, %c0_722] : memref<14x32x16xf32, #tpu.memory_space<vmem>>, vector<1x16x16xf32>
    %1193 = vector.shape_cast %1192 : vector<1x16x16xf32> to vector<16x16xf32>
    %1194 = vector.broadcast %1191 : f32 to vector<16x16xf32>
    %1195 = arith.mulf %1194, %1193 : vector<16x16xf32>
    %1196 = arith.addf %1190, %1195 : vector<16x16xf32>
    %c87_723 = arith.constant 87 : index
    %1197 = memref.load %arg2[%c87_723] : memref<99xf32, #tpu.memory_space<smem>>
    %c10_724 = arith.constant 10 : index
    %c10_725 = arith.constant 10 : index
    %c0_726 = arith.constant 0 : index
    %1198 = vector.load %arg4[%c10_724, %c10_725, %c0_726] : memref<14x32x16xf32, #tpu.memory_space<vmem>>, vector<1x16x16xf32>
    %1199 = vector.shape_cast %1198 : vector<1x16x16xf32> to vector<16x16xf32>
    %1200 = vector.broadcast %1197 : f32 to vector<16x16xf32>
    %1201 = arith.mulf %1200, %1199 : vector<16x16xf32>
    %1202 = arith.addf %1196, %1201 : vector<16x16xf32>
    %c94_727 = arith.constant 94 : index
    %1203 = memref.load %arg2[%c94_727] : memref<99xf32, #tpu.memory_space<smem>>
    %c10_728 = arith.constant 10 : index
    %c11_729 = arith.constant 11 : index
    %c0_730 = arith.constant 0 : index
    %1204 = vector.load %arg4[%c10_728, %c11_729, %c0_730] : memref<14x32x16xf32, #tpu.memory_space<vmem>>, vector<1x16x16xf32>
    %1205 = vector.shape_cast %1204 : vector<1x16x16xf32> to vector<16x16xf32>
    %1206 = vector.broadcast %1203 : f32 to vector<16x16xf32>
    %1207 = arith.mulf %1206, %1205 : vector<16x16xf32>
    %1208 = arith.addf %1202, %1207 : vector<16x16xf32>
    %c53_731 = arith.constant 53 : index
    %1209 = memref.load %arg2[%c53_731] : memref<99xf32, #tpu.memory_space<smem>>
    %c11_732 = arith.constant 11 : index
    %c5_733 = arith.constant 5 : index
    %c0_734 = arith.constant 0 : index
    %1210 = vector.load %arg4[%c11_732, %c5_733, %c0_734] : memref<14x32x16xf32, #tpu.memory_space<vmem>>, vector<1x16x16xf32>
    %1211 = vector.shape_cast %1210 : vector<1x16x16xf32> to vector<16x16xf32>
    %1212 = vector.broadcast %1209 : f32 to vector<16x16xf32>
    %1213 = arith.mulf %1212, %1211 : vector<16x16xf32>
    %1214 = arith.addf %1208, %1213 : vector<16x16xf32>
    %c60_735 = arith.constant 60 : index
    %1215 = memref.load %arg2[%c60_735] : memref<99xf32, #tpu.memory_space<smem>>
    %c11_736 = arith.constant 11 : index
    %c6_737 = arith.constant 6 : index
    %c0_738 = arith.constant 0 : index
    %1216 = vector.load %arg4[%c11_736, %c6_737, %c0_738] : memref<14x32x16xf32, #tpu.memory_space<vmem>>, vector<1x16x16xf32>
    %1217 = vector.shape_cast %1216 : vector<1x16x16xf32> to vector<16x16xf32>
    %1218 = vector.broadcast %1215 : f32 to vector<16x16xf32>
    %1219 = arith.mulf %1218, %1217 : vector<16x16xf32>
    %1220 = arith.addf %1214, %1219 : vector<16x16xf32>
    %c67_739 = arith.constant 67 : index
    %1221 = memref.load %arg2[%c67_739] : memref<99xf32, #tpu.memory_space<smem>>
    %c11_740 = arith.constant 11 : index
    %c7_741 = arith.constant 7 : index
    %c0_742 = arith.constant 0 : index
    %1222 = vector.load %arg4[%c11_740, %c7_741, %c0_742] : memref<14x32x16xf32, #tpu.memory_space<vmem>>, vector<1x16x16xf32>
    %1223 = vector.shape_cast %1222 : vector<1x16x16xf32> to vector<16x16xf32>
    %1224 = vector.broadcast %1221 : f32 to vector<16x16xf32>
    %1225 = arith.mulf %1224, %1223 : vector<16x16xf32>
    %1226 = arith.addf %1220, %1225 : vector<16x16xf32>
    %c74_743 = arith.constant 74 : index
    %1227 = memref.load %arg2[%c74_743] : memref<99xf32, #tpu.memory_space<smem>>
    %c11_744 = arith.constant 11 : index
    %c8_745 = arith.constant 8 : index
    %c0_746 = arith.constant 0 : index
    %1228 = vector.load %arg4[%c11_744, %c8_745, %c0_746] : memref<14x32x16xf32, #tpu.memory_space<vmem>>, vector<1x16x16xf32>
    %1229 = vector.shape_cast %1228 : vector<1x16x16xf32> to vector<16x16xf32>
    %1230 = vector.broadcast %1227 : f32 to vector<16x16xf32>
    %1231 = arith.mulf %1230, %1229 : vector<16x16xf32>
    %1232 = arith.addf %1226, %1231 : vector<16x16xf32>
    %c81_747 = arith.constant 81 : index
    %1233 = memref.load %arg2[%c81_747] : memref<99xf32, #tpu.memory_space<smem>>
    %c11_748 = arith.constant 11 : index
    %c9_749 = arith.constant 9 : index
    %c0_750 = arith.constant 0 : index
    %1234 = vector.load %arg4[%c11_748, %c9_749, %c0_750] : memref<14x32x16xf32, #tpu.memory_space<vmem>>, vector<1x16x16xf32>
    %1235 = vector.shape_cast %1234 : vector<1x16x16xf32> to vector<16x16xf32>
    %1236 = vector.broadcast %1233 : f32 to vector<16x16xf32>
    %1237 = arith.mulf %1236, %1235 : vector<16x16xf32>
    %1238 = arith.addf %1232, %1237 : vector<16x16xf32>
    %c88_751 = arith.constant 88 : index
    %1239 = memref.load %arg2[%c88_751] : memref<99xf32, #tpu.memory_space<smem>>
    %c11_752 = arith.constant 11 : index
    %c10_753 = arith.constant 10 : index
    %c0_754 = arith.constant 0 : index
    %1240 = vector.load %arg4[%c11_752, %c10_753, %c0_754] : memref<14x32x16xf32, #tpu.memory_space<vmem>>, vector<1x16x16xf32>
    %1241 = vector.shape_cast %1240 : vector<1x16x16xf32> to vector<16x16xf32>
    %1242 = vector.broadcast %1239 : f32 to vector<16x16xf32>
    %1243 = arith.mulf %1242, %1241 : vector<16x16xf32>
    %1244 = arith.addf %1238, %1243 : vector<16x16xf32>
    %c95_755 = arith.constant 95 : index
    %1245 = memref.load %arg2[%c95_755] : memref<99xf32, #tpu.memory_space<smem>>
    %c11_756 = arith.constant 11 : index
    %c11_757 = arith.constant 11 : index
    %c0_758 = arith.constant 0 : index
    %1246 = vector.load %arg4[%c11_756, %c11_757, %c0_758] : memref<14x32x16xf32, #tpu.memory_space<vmem>>, vector<1x16x16xf32>
    %1247 = vector.shape_cast %1246 : vector<1x16x16xf32> to vector<16x16xf32>
    %1248 = vector.broadcast %1245 : f32 to vector<16x16xf32>
    %1249 = arith.mulf %1248, %1247 : vector<16x16xf32>
    %1250 = arith.addf %1244, %1249 : vector<16x16xf32>
    %c54_759 = arith.constant 54 : index
    %1251 = memref.load %arg2[%c54_759] : memref<99xf32, #tpu.memory_space<smem>>
    %c12_760 = arith.constant 12 : index
    %c5_761 = arith.constant 5 : index
    %c0_762 = arith.constant 0 : index
    %1252 = vector.load %arg4[%c12_760, %c5_761, %c0_762] : memref<14x32x16xf32, #tpu.memory_space<vmem>>, vector<1x16x16xf32>
    %1253 = vector.shape_cast %1252 : vector<1x16x16xf32> to vector<16x16xf32>
    %1254 = vector.broadcast %1251 : f32 to vector<16x16xf32>
    %1255 = arith.mulf %1254, %1253 : vector<16x16xf32>
    %1256 = arith.addf %1250, %1255 : vector<16x16xf32>
    %c61_763 = arith.constant 61 : index
    %1257 = memref.load %arg2[%c61_763] : memref<99xf32, #tpu.memory_space<smem>>
    %c12_764 = arith.constant 12 : index
    %c6_765 = arith.constant 6 : index
    %c0_766 = arith.constant 0 : index
    %1258 = vector.load %arg4[%c12_764, %c6_765, %c0_766] : memref<14x32x16xf32, #tpu.memory_space<vmem>>, vector<1x16x16xf32>
    %1259 = vector.shape_cast %1258 : vector<1x16x16xf32> to vector<16x16xf32>
    %1260 = vector.broadcast %1257 : f32 to vector<16x16xf32>
    %1261 = arith.mulf %1260, %1259 : vector<16x16xf32>
    %1262 = arith.addf %1256, %1261 : vector<16x16xf32>
    %c68_767 = arith.constant 68 : index
    %1263 = memref.load %arg2[%c68_767] : memref<99xf32, #tpu.memory_space<smem>>
    %c12_768 = arith.constant 12 : index
    %c7_769 = arith.constant 7 : index
    %c0_770 = arith.constant 0 : index
    %1264 = vector.load %arg4[%c12_768, %c7_769, %c0_770] : memref<14x32x16xf32, #tpu.memory_space<vmem>>, vector<1x16x16xf32>
    %1265 = vector.shape_cast %1264 : vector<1x16x16xf32> to vector<16x16xf32>
    %1266 = vector.broadcast %1263 : f32 to vector<16x16xf32>
    %1267 = arith.mulf %1266, %1265 : vector<16x16xf32>
    %1268 = arith.addf %1262, %1267 : vector<16x16xf32>
    %c75_771 = arith.constant 75 : index
    %1269 = memref.load %arg2[%c75_771] : memref<99xf32, #tpu.memory_space<smem>>
    %c12_772 = arith.constant 12 : index
    %c8_773 = arith.constant 8 : index
    %c0_774 = arith.constant 0 : index
    %1270 = vector.load %arg4[%c12_772, %c8_773, %c0_774] : memref<14x32x16xf32, #tpu.memory_space<vmem>>, vector<1x16x16xf32>
    %1271 = vector.shape_cast %1270 : vector<1x16x16xf32> to vector<16x16xf32>
    %1272 = vector.broadcast %1269 : f32 to vector<16x16xf32>
    %1273 = arith.mulf %1272, %1271 : vector<16x16xf32>
    %1274 = arith.addf %1268, %1273 : vector<16x16xf32>
    %c82_775 = arith.constant 82 : index
    %1275 = memref.load %arg2[%c82_775] : memref<99xf32, #tpu.memory_space<smem>>
    %c12_776 = arith.constant 12 : index
    %c9_777 = arith.constant 9 : index
    %c0_778 = arith.constant 0 : index
    %1276 = vector.load %arg4[%c12_776, %c9_777, %c0_778] : memref<14x32x16xf32, #tpu.memory_space<vmem>>, vector<1x16x16xf32>
    %1277 = vector.shape_cast %1276 : vector<1x16x16xf32> to vector<16x16xf32>
    %1278 = vector.broadcast %1275 : f32 to vector<16x16xf32>
    %1279 = arith.mulf %1278, %1277 : vector<16x16xf32>
    %1280 = arith.addf %1274, %1279 : vector<16x16xf32>
    %c89_779 = arith.constant 89 : index
    %1281 = memref.load %arg2[%c89_779] : memref<99xf32, #tpu.memory_space<smem>>
    %c12_780 = arith.constant 12 : index
    %c10_781 = arith.constant 10 : index
    %c0_782 = arith.constant 0 : index
    %1282 = vector.load %arg4[%c12_780, %c10_781, %c0_782] : memref<14x32x16xf32, #tpu.memory_space<vmem>>, vector<1x16x16xf32>
    %1283 = vector.shape_cast %1282 : vector<1x16x16xf32> to vector<16x16xf32>
    %1284 = vector.broadcast %1281 : f32 to vector<16x16xf32>
    %1285 = arith.mulf %1284, %1283 : vector<16x16xf32>
    %1286 = arith.addf %1280, %1285 : vector<16x16xf32>
    %c96_783 = arith.constant 96 : index
    %1287 = memref.load %arg2[%c96_783] : memref<99xf32, #tpu.memory_space<smem>>
    %c12_784 = arith.constant 12 : index
    %c11_785 = arith.constant 11 : index
    %c0_786 = arith.constant 0 : index
    %1288 = vector.load %arg4[%c12_784, %c11_785, %c0_786] : memref<14x32x16xf32, #tpu.memory_space<vmem>>, vector<1x16x16xf32>
    %1289 = vector.shape_cast %1288 : vector<1x16x16xf32> to vector<16x16xf32>
    %1290 = vector.broadcast %1287 : f32 to vector<16x16xf32>
    %1291 = arith.mulf %1290, %1289 : vector<16x16xf32>
    %1292 = arith.addf %1286, %1291 : vector<16x16xf32>
    %c55_787 = arith.constant 55 : index
    %1293 = memref.load %arg2[%c55_787] : memref<99xf32, #tpu.memory_space<smem>>
    %c13_788 = arith.constant 13 : index
    %c5_789 = arith.constant 5 : index
    %c0_790 = arith.constant 0 : index
    %1294 = vector.load %arg4[%c13_788, %c5_789, %c0_790] : memref<14x32x16xf32, #tpu.memory_space<vmem>>, vector<1x16x16xf32>
    %1295 = vector.shape_cast %1294 : vector<1x16x16xf32> to vector<16x16xf32>
    %1296 = vector.broadcast %1293 : f32 to vector<16x16xf32>
    %1297 = arith.mulf %1296, %1295 : vector<16x16xf32>
    %1298 = arith.addf %1292, %1297 : vector<16x16xf32>
    %c62_791 = arith.constant 62 : index
    %1299 = memref.load %arg2[%c62_791] : memref<99xf32, #tpu.memory_space<smem>>
    %c13_792 = arith.constant 13 : index
    %c6_793 = arith.constant 6 : index
    %c0_794 = arith.constant 0 : index
    %1300 = vector.load %arg4[%c13_792, %c6_793, %c0_794] : memref<14x32x16xf32, #tpu.memory_space<vmem>>, vector<1x16x16xf32>
    %1301 = vector.shape_cast %1300 : vector<1x16x16xf32> to vector<16x16xf32>
    %1302 = vector.broadcast %1299 : f32 to vector<16x16xf32>
    %1303 = arith.mulf %1302, %1301 : vector<16x16xf32>
    %1304 = arith.addf %1298, %1303 : vector<16x16xf32>
    %c69_795 = arith.constant 69 : index
    %1305 = memref.load %arg2[%c69_795] : memref<99xf32, #tpu.memory_space<smem>>
    %c13_796 = arith.constant 13 : index
    %c7_797 = arith.constant 7 : index
    %c0_798 = arith.constant 0 : index
    %1306 = vector.load %arg4[%c13_796, %c7_797, %c0_798] : memref<14x32x16xf32, #tpu.memory_space<vmem>>, vector<1x16x16xf32>
    %1307 = vector.shape_cast %1306 : vector<1x16x16xf32> to vector<16x16xf32>
    %1308 = vector.broadcast %1305 : f32 to vector<16x16xf32>
    %1309 = arith.mulf %1308, %1307 : vector<16x16xf32>
    %1310 = arith.addf %1304, %1309 : vector<16x16xf32>
    %c76_799 = arith.constant 76 : index
    %1311 = memref.load %arg2[%c76_799] : memref<99xf32, #tpu.memory_space<smem>>
    %c13_800 = arith.constant 13 : index
    %c8_801 = arith.constant 8 : index
    %c0_802 = arith.constant 0 : index
    %1312 = vector.load %arg4[%c13_800, %c8_801, %c0_802] : memref<14x32x16xf32, #tpu.memory_space<vmem>>, vector<1x16x16xf32>
    %1313 = vector.shape_cast %1312 : vector<1x16x16xf32> to vector<16x16xf32>
    %1314 = vector.broadcast %1311 : f32 to vector<16x16xf32>
    %1315 = arith.mulf %1314, %1313 : vector<16x16xf32>
    %1316 = arith.addf %1310, %1315 : vector<16x16xf32>
    %c83_803 = arith.constant 83 : index
    %1317 = memref.load %arg2[%c83_803] : memref<99xf32, #tpu.memory_space<smem>>
    %c13_804 = arith.constant 13 : index
    %c9_805 = arith.constant 9 : index
    %c0_806 = arith.constant 0 : index
    %1318 = vector.load %arg4[%c13_804, %c9_805, %c0_806] : memref<14x32x16xf32, #tpu.memory_space<vmem>>, vector<1x16x16xf32>
    %1319 = vector.shape_cast %1318 : vector<1x16x16xf32> to vector<16x16xf32>
    %1320 = vector.broadcast %1317 : f32 to vector<16x16xf32>
    %1321 = arith.mulf %1320, %1319 : vector<16x16xf32>
    %1322 = arith.addf %1316, %1321 : vector<16x16xf32>
    %c90_807 = arith.constant 90 : index
    %1323 = memref.load %arg2[%c90_807] : memref<99xf32, #tpu.memory_space<smem>>
    %c13_808 = arith.constant 13 : index
    %c10_809 = arith.constant 10 : index
    %c0_810 = arith.constant 0 : index
    %1324 = vector.load %arg4[%c13_808, %c10_809, %c0_810] : memref<14x32x16xf32, #tpu.memory_space<vmem>>, vector<1x16x16xf32>
    %1325 = vector.shape_cast %1324 : vector<1x16x16xf32> to vector<16x16xf32>
    %1326 = vector.broadcast %1323 : f32 to vector<16x16xf32>
    %1327 = arith.mulf %1326, %1325 : vector<16x16xf32>
    %1328 = arith.addf %1322, %1327 : vector<16x16xf32>
    %c97_811 = arith.constant 97 : index
    %1329 = memref.load %arg2[%c97_811] : memref<99xf32, #tpu.memory_space<smem>>
    %c13_812 = arith.constant 13 : index
    %c11_813 = arith.constant 11 : index
    %c0_814 = arith.constant 0 : index
    %1330 = vector.load %arg4[%c13_812, %c11_813, %c0_814] : memref<14x32x16xf32, #tpu.memory_space<vmem>>, vector<1x16x16xf32>
    %1331 = vector.shape_cast %1330 : vector<1x16x16xf32> to vector<16x16xf32>
    %1332 = vector.broadcast %1329 : f32 to vector<16x16xf32>
    %1333 = arith.mulf %1332, %1331 : vector<16x16xf32>
    %1334 = arith.addf %1328, %1333 : vector<16x16xf32>
    %1335 = arith.negf %1334 : vector<16x16xf32>
    %1336 = math.exp %1335 : vector<16x16xf32>
    %cst_815 = arith.constant 1.000000e+00 : f32
    %1337 = vector.broadcast %cst_815 : f32 to vector<16x16xf32>
    %1338 = arith.addf %1337, %1336 : vector<16x16xf32>
    %1339 = arith.divf %1337, %1338 : vector<16x16xf32>
    %c1_816 = arith.constant 1 : index
    %c0_817 = arith.constant 0 : index
    %c0_818 = arith.constant 0 : index
    %1340 = vector.load %arg3[%c1_816, %c0_817, %c0_818] : memref<2x16x16xf32, #tpu.memory_space<vmem>>, vector<1x16x16xf32>
    %1341 = vector.shape_cast %1340 : vector<1x16x16xf32> to vector<16x16xf32>
    %1342 = vector.shape_cast %1339 : vector<16x16xf32> to vector<1x16x16xf32>
    tpu.vector_store %arg3[%c1_816, %c0_817, %c0_818], %1342 {strides = array<i32>} : memref<2x16x16xf32, #tpu.memory_space<vmem>>, vector<1x16x16xf32>,
    return
  }
  func.func @transform_0(%arg0: i32) -> (i32, i32, i32, i32) {
    %c0_i32 = arith.constant 0 : i32
    %c0_i32_0 = arith.constant 0 : i32
    %c0_i32_1 = arith.constant 0 : i32
    %c0_i32_2 = arith.constant 0 : i32
    return %arg0, %c0_i32, %c0_i32_0, %c0_i32_1 : i32, i32, i32, i32
  }
  func.func @transform_1(%arg0: i32) -> i32 {
    %c0_i32 = arith.constant 0 : i32
    %c0_i32_0 = arith.constant 0 : i32
    return %c0_i32 : i32
  }
  func.func @transform_2(%arg0: i32) -> (i32, i32, i32) {
    %c0_i32 = arith.constant 0 : i32
    %c0_i32_0 = arith.constant 0 : i32
    %c0_i32_1 = arith.constant 0 : i32
    return %arg0, %c0_i32, %c0_i32_0 : i32, i32, i32
  }
}

</mosaic_0001>

<llo_original>
// kernel: tpu_custom_call.1
$region0: #{tpu_custom_call.1}
  #allocation0 [shape = 'u32[]', space=smem, size = 0x4, offset = 0x4, fixed_abs, tag = 'smem constant byte address 0x4 - core index']
  #allocation1 [shape = 'u32[144,128]{1,0:T(1,128)}', space=vmem, size = 0x12000, scoped, tag = 'internal scratch']
  #allocation2 [shape = 'f32[14,32,16]{2,1,0:T(8,128)}', space=vmem, size = 0x38000, scoped, tag = 'scratch operand']
  %s0 = inlined_call_operand.hbm [shape: f32[2,4,16,16], index: 0, kind: input, shape index: {}]
  %s1 = inlined_call_operand.vmem [shape: f32[99], index: 1, kind: input, shape index: {}]
  %s2 = inlined_call_operand.hbm [shape: f32[2,16,16], index: 2, kind: output, shape index: {}]
  %s3 = sld [smem:[#allocation0]]
  $region26: #{tpu_custom_call.1} parent=0
    _
  %s5 = ssub.s32 1, %s3
  %s6 = scalar_select 0, %s5, %s3
  $region1: #{tpu_custom_call.1} parent=0
    #allocation3 [shape = 'u8[65536]{0}', space=vmem, size = 0x10000, scoped, tag = 'input window, operand 0, single buffered']
    #allocation4 [shape = 's32[1]{0}', space=sflag, size = 0x4, scoped, tag = 'scoped memory for tpu_custom_call.1']
    #allocation5 [shape = 's32[1]{0}', space=sflag, size = 0x4, scoped, tag = 'scoped memory for tpu_custom_call.1']
    #allocation6 [shape = 's32[1]{0}', space=sflag, size = 0x4, scoped, tag = 'scoped memory for tpu_custom_call.1']
    #allocation7 [shape = 'u8[512]{0}', space=smem, size = 0x200, scoped, tag = 'input window, operand 1, single buffered']
    #allocation8 [shape = 'u8[16384]{0}', space=vmem, size = 0x4000, scoped, tag = 'output window, operand 0, single buffered']
    %7 = vsyncpa [#allocation4], 0
    %8 = vsyncpa [#allocation6], 0
    %9 = vsyncpa [#allocation5], 0
    // Predicated region
    $region2: #{tpu_custom_call.1} parent=1 // pred_check
      _
    $region3: #{tpu_custom_call.1} parent=1 // pred_check_branch
      %11 = sbr.rel (0) target = $region5
    $region4: #{tpu_custom_call.1} parent=1 // pred_region
      %s13 = ssub.s32 2048, 2048
      %14 = vsyncadd [#allocation4], %s13
      %s15 = sshll.u32 [#allocation3], 4
      %s16 = int_to_ptr.vmem [resolvable:$true] %s15
      %21 = dma.hbm_to_vmem [thread:$0]  %s0, 2048, %s16, [#allocation4], 128, 128, 8
    $region5: #{tpu_custom_call.1} parent=1 // pred_fallthru
      _
    // Predicated region
    $region6: #{tpu_custom_call.1} parent=1 // pred_check
      _
    $region7: #{tpu_custom_call.1} parent=1 // pred_check_branch
      %23 = sbr.rel (0) target = $region9
    $region8: #{tpu_custom_call.1} parent=1 // pred_region
      %s25 = ssub.s32 16, 16
      %26 = vsyncadd [#allocation6], %s25
      %s28 = sshll.u32 %s1, 4
      %s29 = int_to_ptr.vmem [resolvable:$true] %s28
      %31 = dma.vmem_to_smem %s29, 16, [#allocation7], [#allocation6]
    $region9: #{tpu_custom_call.1} parent=1 // pred_fallthru
      _
    // Predicated region
    $region10: #{tpu_custom_call.1} parent=1 // pred_check
      _
    $region11: #{tpu_custom_call.1} parent=1 // pred_check_branch
      %33 = sbr.rel (0) target = $region13
    $region12: #{tpu_custom_call.1} parent=1 // pred_region
      %34 = dma.done [#allocation4], 2048
    $region13: #{tpu_custom_call.1} parent=1 // pred_fallthru
      _
    // Predicated region
    $region14: #{tpu_custom_call.1} parent=1 // pred_check
      _
    $region15: #{tpu_custom_call.1} parent=1 // pred_check_branch
      %36 = sbr.rel (0) target = $region17
    $region16: #{tpu_custom_call.1} parent=1 // pred_region
      %37 = dma.done [#allocation6], 16
    $region17: #{tpu_custom_call.1} parent=1 // pred_fallthru
      _
    %38 = sfence
    %s39 = sld [smem:[#allocation7 + $0x62]]
    %vm40 = vcmask 130048
    %41 = vst.msk [vmem:[#allocation2] sm:$0xff] %vm40, 0.0
    %42 = vst.msk [vmem:[#allocation2 + $0x20] sm:$0xff] %vm40, 0.0
    %43 = vst.msk [vmem:[#allocation2 + $0x40] sm:$0xff] %vm40, 0.0
    %44 = vst.msk [vmem:[#allocation2 + $0x60] sm:$0xff] %vm40, 0.0
    %45 = vst.msk [vmem:[#allocation2 + $0x80] sm:$0xff] %vm40, 0.0
    %46 = vst.msk [vmem:[#allocation2 + $0xa0] sm:$0xff] %vm40, 0.0
    %47 = vst.msk [vmem:[#allocation2 + $0xc0] sm:$0xff] %vm40, 0.0
    %48 = vst.msk [vmem:[#allocation2 + $0xe0] sm:$0xff] %vm40, 0.0
    %49 = vst.msk [vmem:[#allocation2 + $0x100] sm:$0xff] %vm40, 0.0
    %50 = vst.msk [vmem:[#allocation2 + $0x120] sm:$0xff] %vm40, 0.0
    %51 = vst.msk [vmem:[#allocation2 + $0x140] sm:$0xff] %vm40, 0.0
    %52 = vst.msk [vmem:[#allocation2 + $0x160] sm:$0xff] %vm40, 0.0
    %53 = vst.msk [vmem:[#allocation2 + $0x180] sm:$0xff] %vm40, 0.0
    %54 = vst.msk [vmem:[#allocation2 + $0x1a0] sm:$0xff] %vm40, 0.0
    %55 = vst.msk [vmem:[#allocation2 + $0x18] sm:$0xff] %vm40, 0.0
    %56 = vst.msk [vmem:[#allocation2 + $0x38] sm:$0xff] %vm40, 0.0
    %57 = vst.msk [vmem:[#allocation2 + $0x58] sm:$0xff] %vm40, 0.0
    %58 = vst.msk [vmem:[#allocation2 + $0x78] sm:$0xff] %vm40, 0.0
    %59 = vst.msk [vmem:[#allocation2 + $0x98] sm:$0xff] %vm40, 0.0
    %60 = vst.msk [vmem:[#allocation2 + $0xb8] sm:$0xff] %vm40, 0.0
    %61 = vst.msk [vmem:[#allocation2 + $0xd8] sm:$0xff] %vm40, 0.0
    %62 = vst.msk [vmem:[#allocation2 + $0xf8] sm:$0xff] %vm40, 0.0
    %63 = vst.msk [vmem:[#allocation2 + $0x118] sm:$0xff] %vm40, 0.0
    %64 = vst.msk [vmem:[#allocation2 + $0x138] sm:$0xff] %vm40, 0.0
    %65 = vst.msk [vmem:[#allocation2 + $0x158] sm:$0xff] %vm40, 0.0
    %66 = vst.msk [vmem:[#allocation2 + $0x178] sm:$0xff] %vm40, 0.0
    %67 = vst.msk [vmem:[#allocation2 + $0x198] sm:$0xff] %vm40, 0.0
    %68 = vst.msk [vmem:[#allocation2 + $0x1b8] sm:$0xff] %vm40, 0.0
    %v69 = vld [vmem:[#allocation3] sm:$0xff]
    %v70 = vld [vmem:[#allocation3 + $0x8] sm:$0xff]
    %s71 = scalar_lea.vmem [#allocation3], 16
    %v72 = vld [vmem:[%s71] sm:$0xff]
    %v73 = vld [vmem:[%s71 + $0x8] sm:$0xff]
    %v74 = vadd.f32 %v69, %v72
    %v75 = vadd.f32 %v70, %v73
    %v76 = vmax.f32 %v69, %v72
    %v77 = vmax.f32 %v70, %v73
    %s78 = scalar_lea.vmem [#allocation3], 32
    %v79 = vld [vmem:[%s78] sm:$0xff]
    %v80 = vld [vmem:[%s78 + $0x8] sm:$0xff]
    %v81 = vadd.f32 %v74, %v79
    %v82 = vadd.f32 %v75, %v80
    %v83 = vmax.f32 %v76, %v79
    %v84 = vmax.f32 %v77, %v80
    %s85 = scalar_lea.vmem [#allocation3], 48
    %v86 = vld [vmem:[%s85] sm:$0xff]
    %v87 = vld [vmem:[%s85 + $0x8] sm:$0xff]
    %v88 = vadd.f32 %v81, %v86
    %v89 = vadd.f32 %v82, %v87
    %v90 = vmax.f32 %v83, %v86
    %v91 = vmax.f32 %v84, %v87
    %v92 = vmul.f32 %v88, 0.25
    %v93 = vmul.f32 %v89, 0.25
    %96 = vrot.lane.b32.xlu0 %v92, 3
    %v97 = vpop.permute.xlu0 %96
    %98 = vrot.lane.b32.xlu0 %v93, 3
    %v99 = vpop.permute.xlu0 %98
    %vm102 = vcmask 23552
    %v103 = vsel %vm102, 0.0, %v97
    %v104 = vsel %vm102, 0.0, %v99
    %vm105 = vcmask 154624
    %v106 = vsel %vm105, %v103, 0.0
    %v107 = vsel %vm105, %v104, 0.0
    %108 = vst.msk [vmem:[#allocation2 + $0x8] sm:$0xff] %vm40, %v106
    %109 = vst.msk [vmem:[#allocation2 + $0x10] sm:$0xff] %vm40, %v107
    %112 = vrot.lane.b32.xlu0 %v106, 127
    %v113 = vpop.permute.xlu0 %112
    %114 = vrot.lane.b32.xlu0 %v107, 127
    %v115 = vpop.permute.xlu0 %114
    %s118 = scalar_lea.vmem [#allocation2], 32
    %119 = vst.msk [vmem:[%s118 + $0x8] sm:$0xff] %vm40, %v113
    %120 = vst.msk [vmem:[%s118 + $0x10] sm:$0xff] %vm40, %v115
    %121 = vrot.lane.b32.xlu0 %v106, 126
    %v122 = vpop.permute.xlu0 %121
    %123 = vrot.lane.b32.xlu0 %v107, 126
    %v124 = vpop.permute.xlu0 %123
    %s127 = scalar_lea.vmem [#allocation2], 64
    %128 = vst.msk [vmem:[%s127 + $0x8] sm:$0xff] %vm40, %v122
    %129 = vst.msk [vmem:[%s127 + $0x10] sm:$0xff] %vm40, %v124
    %s130 = scalar_lea.vmem [#allocation2], 96
    %131 = vst.msk [vmem:[%s130 + $0x8] sm:$0xff] %vm40, %v92
    %132 = vst.msk [vmem:[%s130 + $0x10] sm:$0xff] %vm40, %v93
    %133 = vrot.lane.b32.xlu0 %v106, 124
    %v134 = vpop.permute.xlu0 %133
    %135 = vrot.lane.b32.xlu0 %v107, 124
    %v136 = vpop.permute.xlu0 %135
    %s139 = scalar_lea.vmem [#allocation2], 128
    %140 = vst.msk [vmem:[%s139 + $0x8] sm:$0xff] %vm40, %v134
    %141 = vst.msk [vmem:[%s139 + $0x10] sm:$0xff] %vm40, %v136
    %142 = vrot.lane.b32.xlu0 %v106, 123
    %v143 = vpop.permute.xlu0 %142
    %144 = vrot.lane.b32.xlu0 %v107, 123
    %v145 = vpop.permute.xlu0 %144
    %s148 = scalar_lea.vmem [#allocation2], 160
    %149 = vst.msk [vmem:[%s148 + $0x8] sm:$0xff] %vm40, %v143
    %150 = vst.msk [vmem:[%s148 + $0x10] sm:$0xff] %vm40, %v145
    %151 = vrot.lane.b32.xlu0 %v106, 122
    %v152 = vpop.permute.xlu0 %151
    %153 = vrot.lane.b32.xlu0 %v107, 122
    %v154 = vpop.permute.xlu0 %153
    %s157 = scalar_lea.vmem [#allocation2], 192
    %158 = vst.msk [vmem:[%s157 + $0x8] sm:$0xff] %vm40, %v152
    %159 = vst.msk [vmem:[%s157 + $0x10] sm:$0xff] %vm40, %v154
    %162 = vrot.lane.b32.xlu0 %v90, 3
    %v163 = vpop.permute.xlu0 %162
    %164 = vrot.lane.b32.xlu0 %v91, 3
    %v165 = vpop.permute.xlu0 %164
    %v168 = vsel %vm102, 0.0, %v163
    %v169 = vsel %vm102, 0.0, %v165
    %v170 = vsel %vm105, %v168, 0.0
    %v171 = vsel %vm105, %v169, 0.0
    %s172 = scalar_lea.vmem [#allocation2], 224
    %173 = vst.msk [vmem:[%s172 + $0x8] sm:$0xff] %vm40, %v170
    %174 = vst.msk [vmem:[%s172 + $0x10] sm:$0xff] %vm40, %v171
    %177 = vrot.lane.b32.xlu0 %v170, 127
    %v178 = vpop.permute.xlu0 %177
    %179 = vrot.lane.b32.xlu0 %v171, 127
    %v180 = vpop.permute.xlu0 %179
    %s183 = scalar_lea.vmem [#allocation2], 256
    %184 = vst.msk [vmem:[%s183 + $0x8] sm:$0xff] %vm40, %v178
    %185 = vst.msk [vmem:[%s183 + $0x10] sm:$0xff] %vm40, %v180
    %186 = vrot.lane.b32.xlu0 %v170, 126
    %v187 = vpop.permute.xlu0 %186
    %188 = vrot.lane.b32.xlu0 %v171, 126
    %v189 = vpop.permute.xlu0 %188
    %s192 = scalar_lea.vmem [#allocation2], 288
    %193 = vst.msk [vmem:[%s192 + $0x8] sm:$0xff] %vm40, %v187
    %194 = vst.msk [vmem:[%s192 + $0x10] sm:$0xff] %vm40, %v189
    %s195 = scalar_lea.vmem [#allocation2], 320
    %196 = vst.msk [vmem:[%s195 + $0x8] sm:$0xff] %vm40, %v90
    %197 = vst.msk [vmem:[%s195 + $0x10] sm:$0xff] %vm40, %v91
    %198 = vrot.lane.b32.xlu0 %v170, 124
    %v199 = vpop.permute.xlu0 %198
    %200 = vrot.lane.b32.xlu0 %v171, 124
    %v201 = vpop.permute.xlu0 %200
    %s204 = scalar_lea.vmem [#allocation2], 352
    %205 = vst.msk [vmem:[%s204 + $0x8] sm:$0xff] %vm40, %v199
    %206 = vst.msk [vmem:[%s204 + $0x10] sm:$0xff] %vm40, %v201
    %207 = vrot.lane.b32.xlu0 %v170, 123
    %v208 = vpop.permute.xlu0 %207
    %209 = vrot.lane.b32.xlu0 %v171, 123
    %v210 = vpop.permute.xlu0 %209
    %s213 = scalar_lea.vmem [#allocation2], 384
    %214 = vst.msk [vmem:[%s213 + $0x8] sm:$0xff] %vm40, %v208
    %215 = vst.msk [vmem:[%s213 + $0x10] sm:$0xff] %vm40, %v210
    %216 = vrot.lane.b32.xlu0 %v170, 122
    %v217 = vpop.permute.xlu0 %216
    %218 = vrot.lane.b32.xlu0 %v171, 122
    %v219 = vpop.permute.xlu0 %218
    %s222 = scalar_lea.vmem [#allocation2], 416
    %223 = vst.msk [vmem:[%s222 + $0x8] sm:$0xff] %vm40, %v217
    %224 = vst.msk [vmem:[%s222 + $0x10] sm:$0xff] %vm40, %v219
    %v225 = vstv %s39
    %s226 = sld [smem:[#allocation7]]
    %v227 = vld [vmem:[#allocation2 + $0x5] sm:$0xff]
    %v228 = vld [vmem:[#allocation2 + $0xd] sm:$0xff]
    %v229 = vstv %s226
    %v230 = vmul.f32 %v229, %v227
    %v231 = vmul.f32 %v229, %v228
    %v232 = vadd.f32 %v225, %v230
    %v233 = vadd.f32 %v225, %v231
    %s234 = sld [smem:[#allocation7 + $0x7]]
    %v235 = vld [vmem:[#allocation2 + $0x6] sm:$0xff]
    %v236 = vld [vmem:[#allocation2 + $0xe] sm:$0xff]
    %v237 = vstv %s234
    %v238 = vmul.f32 %v237, %v235
    %v239 = vmul.f32 %v237, %v236
    %v240 = vadd.f32 %v232, %v238
    %v241 = vadd.f32 %v233, %v239
    %s242 = sld [smem:[#allocation7 + $0xe]]
    %v243 = vld [vmem:[#allocation2 + $0x7] sm:$0xff]
    %v244 = vld [vmem:[#allocation2 + $0xf] sm:$0xff]
    %v245 = vstv %s242
    %v246 = vmul.f32 %v245, %v243
    %v247 = vmul.f32 %v245, %v244
    %v248 = vadd.f32 %v240, %v246
    %v249 = vadd.f32 %v241, %v247
    %s250 = sld [smem:[#allocation7 + $0x15]]
    %v251 = vld [vmem:[#allocation2 + $0x8] sm:$0xff]
    %v252 = vld [vmem:[#allocation2 + $0x10] sm:$0xff]
    %v253 = vstv %s250
    %v254 = vmul.f32 %v253, %v251
    %v255 = vmul.f32 %v253, %v252
    %v256 = vadd.f32 %v248, %v254
    %v257 = vadd.f32 %v249, %v255
    %s258 = sld [smem:[#allocation7 + $0x1c]]
    %v259 = vld [vmem:[#allocation2 + $0x9] sm:$0xff]
    %v260 = vld [vmem:[#allocation2 + $0x11] sm:$0xff]
    %v261 = vstv %s258
    %v262 = vmul.f32 %v261, %v259
    %v263 = vmul.f32 %v261, %v260
    %v264 = vadd.f32 %v256, %v262
    %v265 = vadd.f32 %v257, %v263
    %s266 = sld [smem:[#allocation7 + $0x23]]
    %v267 = vld [vmem:[#allocation2 + $0xa] sm:$0xff]
    %v268 = vld [vmem:[#allocation2 + $0x12] sm:$0xff]
    %v269 = vstv %s266
    %v270 = vmul.f32 %v269, %v267
    %v271 = vmul.f32 %v269, %v268
    %v272 = vadd.f32 %v264, %v270
    %v273 = vadd.f32 %v265, %v271
    %s274 = sld [smem:[#allocation7 + $0x2a]]
    %v275 = vld [vmem:[#allocation2 + $0xb] sm:$0xff]
    %v276 = vld [vmem:[#allocation2 + $0x13] sm:$0xff]
    %v277 = vstv %s274
    %v278 = vmul.f32 %v277, %v275
    %v279 = vmul.f32 %v277, %v276
    %v280 = vadd.f32 %v272, %v278
    %v281 = vadd.f32 %v273, %v279
    %s282 = sld [smem:[#allocation7 + $0x1]]
    %v283 = vld [vmem:[%s118 + $0x5] sm:$0xff]
    %v284 = vld [vmem:[%s118 + $0xd] sm:$0xff]
    %v285 = vstv %s282
    %v286 = vmul.f32 %v285, %v283
    %v287 = vmul.f32 %v285, %v284
    %v288 = vadd.f32 %v280, %v286
    %v289 = vadd.f32 %v281, %v287
    %s290 = sld [smem:[#allocation7 + $0x8]]
    %v291 = vld [vmem:[%s118 + $0x6] sm:$0xff]
    %v292 = vld [vmem:[%s118 + $0xe] sm:$0xff]
    %v293 = vstv %s290
    %v294 = vmul.f32 %v293, %v291
    %v295 = vmul.f32 %v293, %v292
    %v296 = vadd.f32 %v288, %v294
    %v297 = vadd.f32 %v289, %v295
    %s298 = sld [smem:[#allocation7 + $0xf]]
    %v299 = vld [vmem:[%s118 + $0x7] sm:$0xff]
    %v300 = vld [vmem:[%s118 + $0xf] sm:$0xff]
    %v301 = vstv %s298
    %v302 = vmul.f32 %v301, %v299
    %v303 = vmul.f32 %v301, %v300
    %v304 = vadd.f32 %v296, %v302
    %v305 = vadd.f32 %v297, %v303
    %s306 = sld [smem:[#allocation7 + $0x16]]
    %v307 = vld [vmem:[%s118 + $0x8] sm:$0xff]
    %v308 = vld [vmem:[%s118 + $0x10] sm:$0xff]
    %v309 = vstv %s306
    %v310 = vmul.f32 %v309, %v307
    %v311 = vmul.f32 %v309, %v308
    %v312 = vadd.f32 %v304, %v310
    %v313 = vadd.f32 %v305, %v311
    %s314 = sld [smem:[#allocation7 + $0x1d]]
    %v315 = vld [vmem:[%s118 + $0x9] sm:$0xff]
    %v316 = vld [vmem:[%s118 + $0x11] sm:$0xff]
    %v317 = vstv %s314
    %v318 = vmul.f32 %v317, %v315
    %v319 = vmul.f32 %v317, %v316
    %v320 = vadd.f32 %v312, %v318
    %v321 = vadd.f32 %v313, %v319
    %s322 = sld [smem:[#allocation7 + $0x24]]
    %v323 = vld [vmem:[%s118 + $0xa] sm:$0xff]
    %v324 = vld [vmem:[%s118 + $0x12] sm:$0xff]
    %v325 = vstv %s322
    %v326 = vmul.f32 %v325, %v323
    %v327 = vmul.f32 %v325, %v324
    %v328 = vadd.f32 %v320, %v326
    %v329 = vadd.f32 %v321, %v327
    %s330 = sld [smem:[#allocation7 + $0x2b]]
    %v331 = vld [vmem:[%s118 + $0xb] sm:$0xff]
    %v332 = vld [vmem:[%s118 + $0x13] sm:$0xff]
    %v333 = vstv %s330
    %v334 = vmul.f32 %v333, %v331
    %v335 = vmul.f32 %v333, %v332
    %v336 = vadd.f32 %v328, %v334
    %v337 = vadd.f32 %v329, %v335
    %s338 = sld [smem:[#allocation7 + $0x2]]
    %v339 = vld [vmem:[%s127 + $0x5] sm:$0xff]
    %v340 = vld [vmem:[%s127 + $0xd] sm:$0xff]
    %v341 = vstv %s338
    %v342 = vmul.f32 %v341, %v339
    %v343 = vmul.f32 %v341, %v340
    %v344 = vadd.f32 %v336, %v342
    %v345 = vadd.f32 %v337, %v343
    %s346 = sld [smem:[#allocation7 + $0x9]]
    %v347 = vld [vmem:[%s127 + $0x6] sm:$0xff]
    %v348 = vld [vmem:[%s127 + $0xe] sm:$0xff]
    %v349 = vstv %s346
    %v350 = vmul.f32 %v349, %v347
    %v351 = vmul.f32 %v349, %v348
    %v352 = vadd.f32 %v344, %v350
    %v353 = vadd.f32 %v345, %v351
    %s354 = sld [smem:[#allocation7 + $0x10]]
    %v355 = vld [vmem:[%s127 + $0x7] sm:$0xff]
    %v356 = vld [vmem:[%s127 + $0xf] sm:$0xff]
    %v357 = vstv %s354
    %v358 = vmul.f32 %v357, %v355
    %v359 = vmul.f32 %v357, %v356
    %v360 = vadd.f32 %v352, %v358
    %v361 = vadd.f32 %v353, %v359
    %s362 = sld [smem:[#allocation7 + $0x17]]
    %v363 = vld [vmem:[%s127 + $0x8] sm:$0xff]
    %v364 = vld [vmem:[%s127 + $0x10] sm:$0xff]
    %v365 = vstv %s362
    %v366 = vmul.f32 %v365, %v363
    %v367 = vmul.f32 %v365, %v364
    %v368 = vadd.f32 %v360, %v366
    %v369 = vadd.f32 %v361, %v367
    %s370 = sld [smem:[#allocation7 + $0x1e]]
    %v371 = vld [vmem:[%s127 + $0x9] sm:$0xff]
    %v372 = vld [vmem:[%s127 + $0x11] sm:$0xff]
    %v373 = vstv %s370
    %v374 = vmul.f32 %v373, %v371
    %v375 = vmul.f32 %v373, %v372
    %v376 = vadd.f32 %v368, %v374
    %v377 = vadd.f32 %v369, %v375
    %s378 = sld [smem:[#allocation7 + $0x25]]
    %v379 = vld [vmem:[%s127 + $0xa] sm:$0xff]
    %v380 = vld [vmem:[%s127 + $0x12] sm:$0xff]
    %v381 = vstv %s378
    %v382 = vmul.f32 %v381, %v379
    %v383 = vmul.f32 %v381, %v380
    %v384 = vadd.f32 %v376, %v382
    %v385 = vadd.f32 %v377, %v383
    %s386 = sld [smem:[#allocation7 + $0x2c]]
    %v387 = vld [vmem:[%s127 + $0xb] sm:$0xff]
    %v388 = vld [vmem:[%s127 + $0x13] sm:$0xff]
    %v389 = vstv %s386
    %v390 = vmul.f32 %v389, %v387
    %v391 = vmul.f32 %v389, %v388
    %v392 = vadd.f32 %v384, %v390
    %v393 = vadd.f32 %v385, %v391
    %s394 = sld [smem:[#allocation7 + $0x3]]
    %v395 = vld [vmem:[%s130 + $0x5] sm:$0xff]
    %v396 = vld [vmem:[%s130 + $0xd] sm:$0xff]
    %v397 = vstv %s394
    %v398 = vmul.f32 %v397, %v395
    %v399 = vmul.f32 %v397, %v396
    %v400 = vadd.f32 %v392, %v398
    %v401 = vadd.f32 %v393, %v399
    %s402 = sld [smem:[#allocation7 + $0xa]]
    %v403 = vld [vmem:[%s130 + $0x6] sm:$0xff]
    %v404 = vld [vmem:[%s130 + $0xe] sm:$0xff]
    %v405 = vstv %s402
    %v406 = vmul.f32 %v405, %v403
    %v407 = vmul.f32 %v405, %v404
    %v408 = vadd.f32 %v400, %v406
    %v409 = vadd.f32 %v401, %v407
    %s410 = sld [smem:[#allocation7 + $0x11]]
    %v411 = vld [vmem:[%s130 + $0x7] sm:$0xff]
    %v412 = vld [vmem:[%s130 + $0xf] sm:$0xff]
    %v413 = vstv %s410
    %v414 = vmul.f32 %v413, %v411
    %v415 = vmul.f32 %v413, %v412
    %v416 = vadd.f32 %v408, %v414
    %v417 = vadd.f32 %v409, %v415
    %s418 = sld [smem:[#allocation7 + $0x18]]
    %v419 = vld [vmem:[%s130 + $0x8] sm:$0xff]
    %v420 = vld [vmem:[%s130 + $0x10] sm:$0xff]
    %v421 = vstv %s418
    %v422 = vmul.f32 %v421, %v419
    %v423 = vmul.f32 %v421, %v420
    %v424 = vadd.f32 %v416, %v422
    %v425 = vadd.f32 %v417, %v423
    %s426 = sld [smem:[#allocation7 + $0x1f]]
    %v427 = vld [vmem:[%s130 + $0x9] sm:$0xff]
    %v428 = vld [vmem:[%s130 + $0x11] sm:$0xff]
    %v429 = vstv %s426
    %v430 = vmul.f32 %v429, %v427
    %v431 = vmul.f32 %v429, %v428
    %v432 = vadd.f32 %v424, %v430
    %v433 = vadd.f32 %v425, %v431
    %s434 = sld [smem:[#allocation7 + $0x26]]
    %v435 = vld [vmem:[%s130 + $0xa] sm:$0xff]
    %v436 = vld [vmem:[%s130 + $0x12] sm:$0xff]
    %v437 = vstv %s434
    %v438 = vmul.f32 %v437, %v435
    %v439 = vmul.f32 %v437, %v436
    %v440 = vadd.f32 %v432, %v438
    %v441 = vadd.f32 %v433, %v439
    %s442 = sld [smem:[#allocation7 + $0x2d]]
    %v443 = vld [vmem:[%s130 + $0xb] sm:$0xff]
    %v444 = vld [vmem:[%s130 + $0x13] sm:$0xff]
    %v445 = vstv %s442
    %v446 = vmul.f32 %v445, %v443
    %v447 = vmul.f32 %v445, %v444
    %v448 = vadd.f32 %v440, %v446
    %v449 = vadd.f32 %v441, %v447
    %s450 = sld [smem:[#allocation7 + $0x4]]
    %v451 = vld [vmem:[%s139 + $0x5] sm:$0xff]
    %v452 = vld [vmem:[%s139 + $0xd] sm:$0xff]
    %v453 = vstv %s450
    %v454 = vmul.f32 %v453, %v451
    %v455 = vmul.f32 %v453, %v452
    %v456 = vadd.f32 %v448, %v454
    %v457 = vadd.f32 %v449, %v455
    %s458 = sld [smem:[#allocation7 + $0xb]]
    %v459 = vld [vmem:[%s139 + $0x6] sm:$0xff]
    %v460 = vld [vmem:[%s139 + $0xe] sm:$0xff]
    %v461 = vstv %s458
    %v462 = vmul.f32 %v461, %v459
    %v463 = vmul.f32 %v461, %v460
    %v464 = vadd.f32 %v456, %v462
    %v465 = vadd.f32 %v457, %v463
    %s466 = sld [smem:[#allocation7 + $0x12]]
    %v467 = vld [vmem:[%s139 + $0x7] sm:$0xff]
    %v468 = vld [vmem:[%s139 + $0xf] sm:$0xff]
    %v469 = vstv %s466
    %v470 = vmul.f32 %v469, %v467
    %v471 = vmul.f32 %v469, %v468
    %v472 = vadd.f32 %v464, %v470
    %v473 = vadd.f32 %v465, %v471
    %s474 = sld [smem:[#allocation7 + $0x19]]
    %v475 = vld [vmem:[%s139 + $0x8] sm:$0xff]
    %v476 = vld [vmem:[%s139 + $0x10] sm:$0xff]
    %v477 = vstv %s474
    %v478 = vmul.f32 %v477, %v475
    %v479 = vmul.f32 %v477, %v476
    %v480 = vadd.f32 %v472, %v478
    %v481 = vadd.f32 %v473, %v479
    %s482 = sld [smem:[#allocation7 + $0x20]]
    %v483 = vld [vmem:[%s139 + $0x9] sm:$0xff]
    %v484 = vld [vmem:[%s139 + $0x11] sm:$0xff]
    %v485 = vstv %s482
    %v486 = vmul.f32 %v485, %v483
    %v487 = vmul.f32 %v485, %v484
    %v488 = vadd.f32 %v480, %v486
    %v489 = vadd.f32 %v481, %v487
    %s490 = sld [smem:[#allocation7 + $0x27]]
    %v491 = vld [vmem:[%s139 + $0xa] sm:$0xff]
    %v492 = vld [vmem:[%s139 + $0x12] sm:$0xff]
    %v493 = vstv %s490
    %v494 = vmul.f32 %v493, %v491
    %v495 = vmul.f32 %v493, %v492
    %v496 = vadd.f32 %v488, %v494
    %v497 = vadd.f32 %v489, %v495
    %s498 = sld [smem:[#allocation7 + $0x2e]]
    %v499 = vld [vmem:[%s139 + $0xb] sm:$0xff]
    %v500 = vld [vmem:[%s139 + $0x13] sm:$0xff]
    %v501 = vstv %s498
    %v502 = vmul.f32 %v501, %v499
    %v503 = vmul.f32 %v501, %v500
    %v504 = vadd.f32 %v496, %v502
    %v505 = vadd.f32 %v497, %v503
    %s506 = sld [smem:[#allocation7 + $0x5]]
    %v507 = vld [vmem:[%s148 + $0x5] sm:$0xff]
    %v508 = vld [vmem:[%s148 + $0xd] sm:$0xff]
    %v509 = vstv %s506
    %v510 = vmul.f32 %v509, %v507
    %v511 = vmul.f32 %v509, %v508
    %v512 = vadd.f32 %v504, %v510
    %v513 = vadd.f32 %v505, %v511
    %s514 = sld [smem:[#allocation7 + $0xc]]
    %v515 = vld [vmem:[%s148 + $0x6] sm:$0xff]
    %v516 = vld [vmem:[%s148 + $0xe] sm:$0xff]
    %v517 = vstv %s514
    %v518 = vmul.f32 %v517, %v515
    %v519 = vmul.f32 %v517, %v516
    %v520 = vadd.f32 %v512, %v518
    %v521 = vadd.f32 %v513, %v519
    %s522 = sld [smem:[#allocation7 + $0x13]]
    %v523 = vld [vmem:[%s148 + $0x7] sm:$0xff]
    %v524 = vld [vmem:[%s148 + $0xf] sm:$0xff]
    %v525 = vstv %s522
    %v526 = vmul.f32 %v525, %v523
    %v527 = vmul.f32 %v525, %v524
    %v528 = vadd.f32 %v520, %v526
    %v529 = vadd.f32 %v521, %v527
    %s530 = sld [smem:[#allocation7 + $0x1a]]
    %v531 = vld [vmem:[%s148 + $0x8] sm:$0xff]
    %v532 = vld [vmem:[%s148 + $0x10] sm:$0xff]
    %v533 = vstv %s530
    %v534 = vmul.f32 %v533, %v531
    %v535 = vmul.f32 %v533, %v532
    %v536 = vadd.f32 %v528, %v534
    %v537 = vadd.f32 %v529, %v535
    %s538 = sld [smem:[#allocation7 + $0x21]]
    %v539 = vld [vmem:[%s148 + $0x9] sm:$0xff]
    %v540 = vld [vmem:[%s148 + $0x11] sm:$0xff]
    %v541 = vstv %s538
    %v542 = vmul.f32 %v541, %v539
    %v543 = vmul.f32 %v541, %v540
    %v544 = vadd.f32 %v536, %v542
    %v545 = vadd.f32 %v537, %v543
    %s546 = sld [smem:[#allocation7 + $0x28]]
    %v547 = vld [vmem:[%s148 + $0xa] sm:$0xff]
    %v548 = vld [vmem:[%s148 + $0x12] sm:$0xff]
    %v549 = vstv %s546
    %v550 = vmul.f32 %v549, %v547
    %v551 = vmul.f32 %v549, %v548
    %v552 = vadd.f32 %v544, %v550
    %v553 = vadd.f32 %v545, %v551
    %s554 = sld [smem:[#allocation7 + $0x2f]]
    %v555 = vld [vmem:[%s148 + $0xb] sm:$0xff]
    %v556 = vld [vmem:[%s148 + $0x13] sm:$0xff]
    %v557 = vstv %s554
    %v558 = vmul.f32 %v557, %v555
    %v559 = vmul.f32 %v557, %v556
    %v560 = vadd.f32 %v552, %v558
    %v561 = vadd.f32 %v553, %v559
    %s562 = sld [smem:[#allocation7 + $0x6]]
    %v563 = vld [vmem:[%s157 + $0x5] sm:$0xff]
    %v564 = vld [vmem:[%s157 + $0xd] sm:$0xff]
    %v565 = vstv %s562
    %v566 = vmul.f32 %v565, %v563
    %v567 = vmul.f32 %v565, %v564
    %v568 = vadd.f32 %v560, %v566
    %v569 = vadd.f32 %v561, %v567
    %s570 = sld [smem:[#allocation7 + $0xd]]
    %v571 = vld [vmem:[%s157 + $0x6] sm:$0xff]
    %v572 = vld [vmem:[%s157 + $0xe] sm:$0xff]
    %v573 = vstv %s570
    %v574 = vmul.f32 %v573, %v571
    %v575 = vmul.f32 %v573, %v572
    %v576 = vadd.f32 %v568, %v574
    %v577 = vadd.f32 %v569, %v575
    %s578 = sld [smem:[#allocation7 + $0x14]]
    %v579 = vld [vmem:[%s157 + $0x7] sm:$0xff]
    %v580 = vld [vmem:[%s157 + $0xf] sm:$0xff]
    %v581 = vstv %s578
    %v582 = vmul.f32 %v581, %v579
    %v583 = vmul.f32 %v581, %v580
    %v584 = vadd.f32 %v576, %v582
    %v585 = vadd.f32 %v577, %v583
    %s586 = sld [smem:[#allocation7 + $0x1b]]
    %v587 = vld [vmem:[%s157 + $0x8] sm:$0xff]
    %v588 = vld [vmem:[%s157 + $0x10] sm:$0xff]
    %v589 = vstv %s586
    %v590 = vmul.f32 %v589, %v587
    %v591 = vmul.f32 %v589, %v588
    %v592 = vadd.f32 %v584, %v590
    %v593 = vadd.f32 %v585, %v591
    %s594 = sld [smem:[#allocation7 + $0x22]]
    %v595 = vld [vmem:[%s157 + $0x9] sm:$0xff]
    %v596 = vld [vmem:[%s157 + $0x11] sm:$0xff]
    %v597 = vstv %s594
    %v598 = vmul.f32 %v597, %v595
    %v599 = vmul.f32 %v597, %v596
    %v600 = vadd.f32 %v592, %v598
    %v601 = vadd.f32 %v593, %v599
    %s602 = sld [smem:[#allocation7 + $0x29]]
    %v603 = vld [vmem:[%s157 + $0xa] sm:$0xff]
    %v604 = vld [vmem:[%s157 + $0x12] sm:$0xff]
    %v605 = vstv %s602
    %v606 = vmul.f32 %v605, %v603
    %v607 = vmul.f32 %v605, %v604
    %v608 = vadd.f32 %v600, %v606
    %v609 = vadd.f32 %v601, %v607
    %s610 = sld [smem:[#allocation7 + $0x30]]
    %v611 = vld [vmem:[%s157 + $0xb] sm:$0xff]
    %v612 = vld [vmem:[%s157 + $0x13] sm:$0xff]
    %v613 = vstv %s610
    %v614 = vmul.f32 %v613, %v611
    %v615 = vmul.f32 %v613, %v612
    %v616 = vadd.f32 %v608, %v614
    %v617 = vadd.f32 %v609, %v615
    %s618 = sld [smem:[#allocation7 + $0x31]]
    %v619 = vld [vmem:[%s172 + $0x5] sm:$0xff]
    %v620 = vld [vmem:[%s172 + $0xd] sm:$0xff]
    %v621 = vstv %s618
    %v622 = vmul.f32 %v621, %v619
    %v623 = vmul.f32 %v621, %v620
    %v624 = vadd.f32 %v616, %v622
    %v625 = vadd.f32 %v617, %v623
    %s626 = sld [smem:[#allocation7 + $0x38]]
    %v627 = vld [vmem:[%s172 + $0x6] sm:$0xff]
    %v628 = vld [vmem:[%s172 + $0xe] sm:$0xff]
    %v629 = vstv %s626
    %v630 = vmul.f32 %v629, %v627
    %v631 = vmul.f32 %v629, %v628
    %v632 = vadd.f32 %v624, %v630
    %v633 = vadd.f32 %v625, %v631
    %s634 = sld [smem:[#allocation7 + $0x3f]]
    %v635 = vld [vmem:[%s172 + $0x7] sm:$0xff]
    %v636 = vld [vmem:[%s172 + $0xf] sm:$0xff]
    %v637 = vstv %s634
    %v638 = vmul.f32 %v637, %v635
    %v639 = vmul.f32 %v637, %v636
    %v640 = vadd.f32 %v632, %v638
    %v641 = vadd.f32 %v633, %v639
    %s642 = sld [smem:[#allocation7 + $0x46]]
    %v643 = vld [vmem:[%s172 + $0x8] sm:$0xff]
    %v644 = vld [vmem:[%s172 + $0x10] sm:$0xff]
    %v645 = vstv %s642
    %v646 = vmul.f32 %v645, %v643
    %v647 = vmul.f32 %v645, %v644
    %v648 = vadd.f32 %v640, %v646
    %v649 = vadd.f32 %v641, %v647
    %s650 = sld [smem:[#allocation7 + $0x4d]]
    %v651 = vld [vmem:[%s172 + $0x9] sm:$0xff]
    %v652 = vld [vmem:[%s172 + $0x11] sm:$0xff]
    %v653 = vstv %s650
    %v654 = vmul.f32 %v653, %v651
    %v655 = vmul.f32 %v653, %v652
    %v656 = vadd.f32 %v648, %v654
    %v657 = vadd.f32 %v649, %v655
    %s658 = sld [smem:[#allocation7 + $0x54]]
    %v659 = vld [vmem:[%s172 + $0xa] sm:$0xff]
    %v660 = vld [vmem:[%s172 + $0x12] sm:$0xff]
    %v661 = vstv %s658
    %v662 = vmul.f32 %v661, %v659
    %v663 = vmul.f32 %v661, %v660
    %v664 = vadd.f32 %v656, %v662
    %v665 = vadd.f32 %v657, %v663
    %s666 = sld [smem:[#allocation7 + $0x5b]]
    %v667 = vld [vmem:[%s172 + $0xb] sm:$0xff]
    %v668 = vld [vmem:[%s172 + $0x13] sm:$0xff]
    %v669 = vstv %s666
    %v670 = vmul.f32 %v669, %v667
    %v671 = vmul.f32 %v669, %v668
    %v672 = vadd.f32 %v664, %v670
    %v673 = vadd.f32 %v665, %v671
    %s674 = sld [smem:[#allocation7 + $0x32]]
    %v675 = vld [vmem:[%s183 + $0x5] sm:$0xff]
    %v676 = vld [vmem:[%s183 + $0xd] sm:$0xff]
    %v677 = vstv %s674
    %v678 = vmul.f32 %v677, %v675
    %v679 = vmul.f32 %v677, %v676
    %v680 = vadd.f32 %v672, %v678
    %v681 = vadd.f32 %v673, %v679
    %s682 = sld [smem:[#allocation7 + $0x39]]
    %v683 = vld [vmem:[%s183 + $0x6] sm:$0xff]
    %v684 = vld [vmem:[%s183 + $0xe] sm:$0xff]
    %v685 = vstv %s682
    %v686 = vmul.f32 %v685, %v683
    %v687 = vmul.f32 %v685, %v684
    %v688 = vadd.f32 %v680, %v686
    %v689 = vadd.f32 %v681, %v687
    %s690 = sld [smem:[#allocation7 + $0x40]]
    %v691 = vld [vmem:[%s183 + $0x7] sm:$0xff]
    %v692 = vld [vmem:[%s183 + $0xf] sm:$0xff]
    %v693 = vstv %s690
    %v694 = vmul.f32 %v693, %v691
    %v695 = vmul.f32 %v693, %v692
    %v696 = vadd.f32 %v688, %v694
    %v697 = vadd.f32 %v689, %v695
    %s698 = sld [smem:[#allocation7 + $0x47]]
    %v699 = vld [vmem:[%s183 + $0x8] sm:$0xff]
    %v700 = vld [vmem:[%s183 + $0x10] sm:$0xff]
    %v701 = vstv %s698
    %v702 = vmul.f32 %v701, %v699
    %v703 = vmul.f32 %v701, %v700
    %v704 = vadd.f32 %v696, %v702
    %v705 = vadd.f32 %v697, %v703
    %s706 = sld [smem:[#allocation7 + $0x4e]]
    %v707 = vld [vmem:[%s183 + $0x9] sm:$0xff]
    %v708 = vld [vmem:[%s183 + $0x11] sm:$0xff]
    %v709 = vstv %s706
    %v710 = vmul.f32 %v709, %v707
    %v711 = vmul.f32 %v709, %v708
    %v712 = vadd.f32 %v704, %v710
    %v713 = vadd.f32 %v705, %v711
    %s714 = sld [smem:[#allocation7 + $0x55]]
    %v715 = vld [vmem:[%s183 + $0xa] sm:$0xff]
    %v716 = vld [vmem:[%s183 + $0x12] sm:$0xff]
    %v717 = vstv %s714
    %v718 = vmul.f32 %v717, %v715
    %v719 = vmul.f32 %v717, %v716
    %v720 = vadd.f32 %v712, %v718
    %v721 = vadd.f32 %v713, %v719
    %s722 = sld [smem:[#allocation7 + $0x5c]]
    %v723 = vld [vmem:[%s183 + $0xb] sm:$0xff]
    %v724 = vld [vmem:[%s183 + $0x13] sm:$0xff]
    %v725 = vstv %s722
    %v726 = vmul.f32 %v725, %v723
    %v727 = vmul.f32 %v725, %v724
    %v728 = vadd.f32 %v720, %v726
    %v729 = vadd.f32 %v721, %v727
    %s730 = sld [smem:[#allocation7 + $0x33]]
    %v731 = vld [vmem:[%s192 + $0x5] sm:$0xff]
    %v732 = vld [vmem:[%s192 + $0xd] sm:$0xff]
    %v733 = vstv %s730
    %v734 = vmul.f32 %v733, %v731
    %v735 = vmul.f32 %v733, %v732
    %v736 = vadd.f32 %v728, %v734
    %v737 = vadd.f32 %v729, %v735
    %s738 = sld [smem:[#allocation7 + $0x3a]]
    %v739 = vld [vmem:[%s192 + $0x6] sm:$0xff]
    %v740 = vld [vmem:[%s192 + $0xe] sm:$0xff]
    %v741 = vstv %s738
    %v742 = vmul.f32 %v741, %v739
    %v743 = vmul.f32 %v741, %v740
    %v744 = vadd.f32 %v736, %v742
    %v745 = vadd.f32 %v737, %v743
    %s746 = sld [smem:[#allocation7 + $0x41]]
    %v747 = vld [vmem:[%s192 + $0x7] sm:$0xff]
    %v748 = vld [vmem:[%s192 + $0xf] sm:$0xff]
    %v749 = vstv %s746
    %v750 = vmul.f32 %v749, %v747
    %v751 = vmul.f32 %v749, %v748
    %v752 = vadd.f32 %v744, %v750
    %v753 = vadd.f32 %v745, %v751
    %s754 = sld [smem:[#allocation7 + $0x48]]
    %v755 = vld [vmem:[%s192 + $0x8] sm:$0xff]
    %v756 = vld [vmem:[%s192 + $0x10] sm:$0xff]
    %v757 = vstv %s754
    %v758 = vmul.f32 %v757, %v755
    %v759 = vmul.f32 %v757, %v756
    %v760 = vadd.f32 %v752, %v758
    %v761 = vadd.f32 %v753, %v759
    %s762 = sld [smem:[#allocation7 + $0x4f]]
    %v763 = vld [vmem:[%s192 + $0x9] sm:$0xff]
    %v764 = vld [vmem:[%s192 + $0x11] sm:$0xff]
    %v765 = vstv %s762
    %v766 = vmul.f32 %v765, %v763
    %v767 = vmul.f32 %v765, %v764
    %v768 = vadd.f32 %v760, %v766
    %v769 = vadd.f32 %v761, %v767
    %s770 = sld [smem:[#allocation7 + $0x56]]
    %v771 = vld [vmem:[%s192 + $0xa] sm:$0xff]
    %v772 = vld [vmem:[%s192 + $0x12] sm:$0xff]
    %v773 = vstv %s770
    %v774 = vmul.f32 %v773, %v771
    %v775 = vmul.f32 %v773, %v772
    %v776 = vadd.f32 %v768, %v774
    %v777 = vadd.f32 %v769, %v775
    %s778 = sld [smem:[#allocation7 + $0x5d]]
    %v779 = vld [vmem:[%s192 + $0xb] sm:$0xff]
    %v780 = vld [vmem:[%s192 + $0x13] sm:$0xff]
    %v781 = vstv %s778
    %v782 = vmul.f32 %v781, %v779
    %v783 = vmul.f32 %v781, %v780
    %v784 = vadd.f32 %v776, %v782
    %v785 = vadd.f32 %v777, %v783
    %s786 = sld [smem:[#allocation7 + $0x34]]
    %v787 = vld [vmem:[%s195 + $0x5] sm:$0xff]
    %v788 = vld [vmem:[%s195 + $0xd] sm:$0xff]
    %v789 = vstv %s786
    %v790 = vmul.f32 %v789, %v787
    %v791 = vmul.f32 %v789, %v788
    %v792 = vadd.f32 %v784, %v790
    %v793 = vadd.f32 %v785, %v791
    %s794 = sld [smem:[#allocation7 + $0x3b]]
    %v795 = vld [vmem:[%s195 + $0x6] sm:$0xff]
    %v796 = vld [vmem:[%s195 + $0xe] sm:$0xff]
    %v797 = vstv %s794
    %v798 = vmul.f32 %v797, %v795
    %v799 = vmul.f32 %v797, %v796
    %v800 = vadd.f32 %v792, %v798
    %v801 = vadd.f32 %v793, %v799
    %s802 = sld [smem:[#allocation7 + $0x42]]
    %v803 = vld [vmem:[%s195 + $0x7] sm:$0xff]
    %v804 = vld [vmem:[%s195 + $0xf] sm:$0xff]
    %v805 = vstv %s802
    %v806 = vmul.f32 %v805, %v803
    %v807 = vmul.f32 %v805, %v804
    %v808 = vadd.f32 %v800, %v806
    %v809 = vadd.f32 %v801, %v807
    %s810 = sld [smem:[#allocation7 + $0x49]]
    %v811 = vld [vmem:[%s195 + $0x8] sm:$0xff]
    %v812 = vld [vmem:[%s195 + $0x10] sm:$0xff]
    %v813 = vstv %s810
    %v814 = vmul.f32 %v813, %v811
    %v815 = vmul.f32 %v813, %v812
    %v816 = vadd.f32 %v808, %v814
    %v817 = vadd.f32 %v809, %v815
    %s818 = sld [smem:[#allocation7 + $0x50]]
    %v819 = vld [vmem:[%s195 + $0x9] sm:$0xff]
    %v820 = vld [vmem:[%s195 + $0x11] sm:$0xff]
    %v821 = vstv %s818
    %v822 = vmul.f32 %v821, %v819
    %v823 = vmul.f32 %v821, %v820
    %v824 = vadd.f32 %v816, %v822
    %v825 = vadd.f32 %v817, %v823
    %s826 = sld [smem:[#allocation7 + $0x57]]
    %v827 = vld [vmem:[%s195 + $0xa] sm:$0xff]
    %v828 = vld [vmem:[%s195 + $0x12] sm:$0xff]
    %v829 = vstv %s826
    %v830 = vmul.f32 %v829, %v827
    %v831 = vmul.f32 %v829, %v828
    %v832 = vadd.f32 %v824, %v830
    %v833 = vadd.f32 %v825, %v831
    %s834 = sld [smem:[#allocation7 + $0x5e]]
    %v835 = vld [vmem:[%s195 + $0xb] sm:$0xff]
    %v836 = vld [vmem:[%s195 + $0x13] sm:$0xff]
    %v837 = vstv %s834
    %v838 = vmul.f32 %v837, %v835
    %v839 = vmul.f32 %v837, %v836
    %v840 = vadd.f32 %v832, %v838
    %v841 = vadd.f32 %v833, %v839
    %s842 = sld [smem:[#allocation7 + $0x35]]
    %v843 = vld [vmem:[%s204 + $0x5] sm:$0xff]
    %v844 = vld [vmem:[%s204 + $0xd] sm:$0xff]
    %v845 = vstv %s842
    %v846 = vmul.f32 %v845, %v843
    %v847 = vmul.f32 %v845, %v844
    %v848 = vadd.f32 %v840, %v846
    %v849 = vadd.f32 %v841, %v847
    %s850 = sld [smem:[#allocation7 + $0x3c]]
    %v851 = vld [vmem:[%s204 + $0x6] sm:$0xff]
    %v852 = vld [vmem:[%s204 + $0xe] sm:$0xff]
    %v853 = vstv %s850
    %v854 = vmul.f32 %v853, %v851
    %v855 = vmul.f32 %v853, %v852
    %v856 = vadd.f32 %v848, %v854
    %v857 = vadd.f32 %v849, %v855
    %s858 = sld [smem:[#allocation7 + $0x43]]
    %v859 = vld [vmem:[%s204 + $0x7] sm:$0xff]
    %v860 = vld [vmem:[%s204 + $0xf] sm:$0xff]
    %v861 = vstv %s858
    %v862 = vmul.f32 %v861, %v859
    %v863 = vmul.f32 %v861, %v860
    %v864 = vadd.f32 %v856, %v862
    %v865 = vadd.f32 %v857, %v863
    %s866 = sld [smem:[#allocation7 + $0x4a]]
    %v867 = vld [vmem:[%s204 + $0x8] sm:$0xff]
    %v868 = vld [vmem:[%s204 + $0x10] sm:$0xff]
    %v869 = vstv %s866
    %v870 = vmul.f32 %v869, %v867
    %v871 = vmul.f32 %v869, %v868
    %v872 = vadd.f32 %v864, %v870
    %v873 = vadd.f32 %v865, %v871
    %s874 = sld [smem:[#allocation7 + $0x51]]
    %v875 = vld [vmem:[%s204 + $0x9] sm:$0xff]
    %v876 = vld [vmem:[%s204 + $0x11] sm:$0xff]
    %v877 = vstv %s874
    %v878 = vmul.f32 %v877, %v875
    %v879 = vmul.f32 %v877, %v876
    %v880 = vadd.f32 %v872, %v878
    %v881 = vadd.f32 %v873, %v879
    %s882 = sld [smem:[#allocation7 + $0x58]]
    %v883 = vld [vmem:[%s204 + $0xa] sm:$0xff]
    %v884 = vld [vmem:[%s204 + $0x12] sm:$0xff]
    %v885 = vstv %s882
    %v886 = vmul.f32 %v885, %v883
    %v887 = vmul.f32 %v885, %v884
    %v888 = vadd.f32 %v880, %v886
    %v889 = vadd.f32 %v881, %v887
    %s890 = sld [smem:[#allocation7 + $0x5f]]
    %v891 = vld [vmem:[%s204 + $0xb] sm:$0xff]
    %v892 = vld [vmem:[%s204 + $0x13] sm:$0xff]
    %v893 = vstv %s890
    %v894 = vmul.f32 %v893, %v891
    %v895 = vmul.f32 %v893, %v892
    %v896 = vadd.f32 %v888, %v894
    %v897 = vadd.f32 %v889, %v895
    %s898 = sld [smem:[#allocation7 + $0x36]]
    %v899 = vld [vmem:[%s213 + $0x5] sm:$0xff]
    %v900 = vld [vmem:[%s213 + $0xd] sm:$0xff]
    %v901 = vstv %s898
    %v902 = vmul.f32 %v901, %v899
    %v903 = vmul.f32 %v901, %v900
    %v904 = vadd.f32 %v896, %v902
    %v905 = vadd.f32 %v897, %v903
    %s906 = sld [smem:[#allocation7 + $0x3d]]
    %v907 = vld [vmem:[%s213 + $0x6] sm:$0xff]
    %v908 = vld [vmem:[%s213 + $0xe] sm:$0xff]
    %v909 = vstv %s906
    %v910 = vmul.f32 %v909, %v907
    %v911 = vmul.f32 %v909, %v908
    %v912 = vadd.f32 %v904, %v910
    %v913 = vadd.f32 %v905, %v911
    %s914 = sld [smem:[#allocation7 + $0x44]]
    %v915 = vld [vmem:[%s213 + $0x7] sm:$0xff]
    %v916 = vld [vmem:[%s213 + $0xf] sm:$0xff]
    %v917 = vstv %s914
    %v918 = vmul.f32 %v917, %v915
    %v919 = vmul.f32 %v917, %v916
    %v920 = vadd.f32 %v912, %v918
    %v921 = vadd.f32 %v913, %v919
    %s922 = sld [smem:[#allocation7 + $0x4b]]
    %v923 = vld [vmem:[%s213 + $0x8] sm:$0xff]
    %v924 = vld [vmem:[%s213 + $0x10] sm:$0xff]
    %v925 = vstv %s922
    %v926 = vmul.f32 %v925, %v923
    %v927 = vmul.f32 %v925, %v924
    %v928 = vadd.f32 %v920, %v926
    %v929 = vadd.f32 %v921, %v927
    %s930 = sld [smem:[#allocation7 + $0x52]]
    %v931 = vld [vmem:[%s213 + $0x9] sm:$0xff]
    %v932 = vld [vmem:[%s213 + $0x11] sm:$0xff]
    %v933 = vstv %s930
    %v934 = vmul.f32 %v933, %v931
    %v935 = vmul.f32 %v933, %v932
    %v936 = vadd.f32 %v928, %v934
    %v937 = vadd.f32 %v929, %v935
    %s938 = sld [smem:[#allocation7 + $0x59]]
    %v939 = vld [vmem:[%s213 + $0xa] sm:$0xff]
    %v940 = vld [vmem:[%s213 + $0x12] sm:$0xff]
    %v941 = vstv %s938
    %v942 = vmul.f32 %v941, %v939
    %v943 = vmul.f32 %v941, %v940
    %v944 = vadd.f32 %v936, %v942
    %v945 = vadd.f32 %v937, %v943
    %s946 = sld [smem:[#allocation7 + $0x60]]
    %v947 = vld [vmem:[%s213 + $0xb] sm:$0xff]
    %v948 = vld [vmem:[%s213 + $0x13] sm:$0xff]
    %v949 = vstv %s946
    %v950 = vmul.f32 %v949, %v947
    %v951 = vmul.f32 %v949, %v948
    %v952 = vadd.f32 %v944, %v950
    %v953 = vadd.f32 %v945, %v951
    %s954 = sld [smem:[#allocation7 + $0x37]]
    %v955 = vld [vmem:[%s222 + $0x5] sm:$0xff]
    %v956 = vld [vmem:[%s222 + $0xd] sm:$0xff]
    %v957 = vstv %s954
    %v958 = vmul.f32 %v957, %v955
    %v959 = vmul.f32 %v957, %v956
    %v960 = vadd.f32 %v952, %v958
    %v961 = vadd.f32 %v953, %v959
    %s962 = sld [smem:[#allocation7 + $0x3e]]
    %v963 = vld [vmem:[%s222 + $0x6] sm:$0xff]
    %v964 = vld [vmem:[%s222 + $0xe] sm:$0xff]
    %v965 = vstv %s962
    %v966 = vmul.f32 %v965, %v963
    %v967 = vmul.f32 %v965, %v964
    %v968 = vadd.f32 %v960, %v966
    %v969 = vadd.f32 %v961, %v967
    %s970 = sld [smem:[#allocation7 + $0x45]]
    %v971 = vld [vmem:[%s222 + $0x7] sm:$0xff]
    %v972 = vld [vmem:[%s222 + $0xf] sm:$0xff]
    %v973 = vstv %s970
    %v974 = vmul.f32 %v973, %v971
    %v975 = vmul.f32 %v973, %v972
    %v976 = vadd.f32 %v968, %v974
    %v977 = vadd.f32 %v969, %v975
    %s978 = sld [smem:[#allocation7 + $0x4c]]
    %v979 = vld [vmem:[%s222 + $0x8] sm:$0xff]
    %v980 = vld [vmem:[%s222 + $0x10] sm:$0xff]
    %v981 = vstv %s978
    %v982 = vmul.f32 %v981, %v979
    %v983 = vmul.f32 %v981, %v980
    %v984 = vadd.f32 %v976, %v982
    %v985 = vadd.f32 %v977, %v983
    %s986 = sld [smem:[#allocation7 + $0x53]]
    %v987 = vld [vmem:[%s222 + $0x9] sm:$0xff]
    %v988 = vld [vmem:[%s222 + $0x11] sm:$0xff]
    %v989 = vstv %s986
    %v990 = vmul.f32 %v989, %v987
    %v991 = vmul.f32 %v989, %v988
    %v992 = vadd.f32 %v984, %v990
    %v993 = vadd.f32 %v985, %v991
    %s994 = sld [smem:[#allocation7 + $0x5a]]
    %v995 = vld [vmem:[%s222 + $0xa] sm:$0xff]
    %v996 = vld [vmem:[%s222 + $0x12] sm:$0xff]
    %v997 = vstv %s994
    %v998 = vmul.f32 %v997, %v995
    %v999 = vmul.f32 %v997, %v996
    %v1000 = vadd.f32 %v992, %v998
    %v1001 = vadd.f32 %v993, %v999
    %s1002 = sld [smem:[#allocation7 + $0x61]]
    %v1003 = vld [vmem:[%s222 + $0xb] sm:$0xff]
    %v1004 = vld [vmem:[%s222 + $0x13] sm:$0xff]
    %v1005 = vstv %s1002
    %v1006 = vmul.f32 %v1005, %v1003
    %v1007 = vmul.f32 %v1005, %v1004
    %v1008 = vadd.f32 %v1000, %v1006
    %v1009 = vadd.f32 %v1001, %v1007
    %v1010 = vxor.u32 %v1008, 2147483648
    %v1011 = vxor.u32 %v1009, 2147483648
    %v1012 = vmul.f32 %v1010, 1.442695
    %v1013 = vpow.pop %v1012
    %v1014 = vmul.f32 %v1011, 1.442695
    %v1015 = vpow.pop %v1014
    %v1016 = vadd.f32 %v1013, 1.0
    %v1017 = vadd.f32 %v1015, 1.0
    %v1018 = vrcp.pop %v1016
    %v1019 = vmul.f32 1.0, %v1018
    %v1020 = vrcp.pop %v1017
    %v1021 = vmul.f32 1.0, %v1020
    %1022 = vst.msk [vmem:[#allocation8] sm:$0xff] %vm40, %v1019
    %1023 = vst.msk [vmem:[#allocation8 + $0x8] sm:$0xff] %vm40, %v1021
    %s1024 = scalar_lea.vmem [#allocation3], 64
    %v1025 = vld [vmem:[%s1024] sm:$0xff]
    %v1026 = vld [vmem:[%s1024 + $0x8] sm:$0xff]
    %s1027 = scalar_lea.vmem [#allocation3], 80
    %v1028 = vld [vmem:[%s1027] sm:$0xff]
    %v1029 = vld [vmem:[%s1027 + $0x8] sm:$0xff]
    %v1030 = vadd.f32 %v1025, %v1028
    %v1031 = vadd.f32 %v1026, %v1029
    %v1032 = vmax.f32 %v1025, %v1028
    %v1033 = vmax.f32 %v1026, %v1029
    %s1034 = scalar_lea.vmem [#allocation3], 96
    %v1035 = vld [vmem:[%s1034] sm:$0xff]
    %v1036 = vld [vmem:[%s1034 + $0x8] sm:$0xff]
    %v1037 = vadd.f32 %v1030, %v1035
    %v1038 = vadd.f32 %v1031, %v1036
    %v1039 = vmax.f32 %v1032, %v1035
    %v1040 = vmax.f32 %v1033, %v1036
    %s1041 = scalar_lea.vmem [#allocation3], 112
    %v1042 = vld [vmem:[%s1041] sm:$0xff]
    %v1043 = vld [vmem:[%s1041 + $0x8] sm:$0xff]
    %v1044 = vadd.f32 %v1037, %v1042
    %v1045 = vadd.f32 %v1038, %v1043
    %v1046 = vmax.f32 %v1039, %v1042
    %v1047 = vmax.f32 %v1040, %v1043
    %v1048 = vmul.f32 %v1044, 0.25
    %v1049 = vmul.f32 %v1045, 0.25
    %1052 = vrot.lane.b32.xlu0 %v1048, 3
    %v1053 = vpop.permute.xlu0 %1052
    %1054 = vrot.lane.b32.xlu0 %v1049, 3
    %v1055 = vpop.permute.xlu0 %1054
    %v1058 = vsel %vm102, 0.0, %v1053
    %v1059 = vsel %vm102, 0.0, %v1055
    %v1060 = vsel %vm105, %v1058, 0.0
    %v1061 = vsel %vm105, %v1059, 0.0
    %1062 = vst.msk [vmem:[#allocation2 + $0x8] sm:$0xff] %vm40, %v1060
    %1063 = vst.msk [vmem:[#allocation2 + $0x10] sm:$0xff] %vm40, %v1061
    %1066 = vrot.lane.b32.xlu0 %v1060, 127
    %v1067 = vpop.permute.xlu0 %1066
    %1068 = vrot.lane.b32.xlu0 %v1061, 127
    %v1069 = vpop.permute.xlu0 %1068
    %1072 = vst.msk [vmem:[%s118 + $0x8] sm:$0xff] %vm40, %v1067
    %1073 = vst.msk [vmem:[%s118 + $0x10] sm:$0xff] %vm40, %v1069
    %1074 = vrot.lane.b32.xlu0 %v1060, 126
    %v1075 = vpop.permute.xlu0 %1074
    %1076 = vrot.lane.b32.xlu0 %v1061, 126
    %v1077 = vpop.permute.xlu0 %1076
    %1080 = vst.msk [vmem:[%s127 + $0x8] sm:$0xff] %vm40, %v1075
    %1081 = vst.msk [vmem:[%s127 + $0x10] sm:$0xff] %vm40, %v1077
    %1082 = vst.msk [vmem:[%s130 + $0x8] sm:$0xff] %vm40, %v1048
    %1083 = vst.msk [vmem:[%s130 + $0x10] sm:$0xff] %vm40, %v1049
    %1084 = vrot.lane.b32.xlu0 %v1060, 124
    %v1085 = vpop.permute.xlu0 %1084
    %1086 = vrot.lane.b32.xlu0 %v1061, 124
    %v1087 = vpop.permute.xlu0 %1086
    %1090 = vst.msk [vmem:[%s139 + $0x8] sm:$0xff] %vm40, %v1085
    %1091 = vst.msk [vmem:[%s139 + $0x10] sm:$0xff] %vm40, %v1087
    %1092 = vrot.lane.b32.xlu0 %v1060, 123
    %v1093 = vpop.permute.xlu0 %1092
    %1094 = vrot.lane.b32.xlu0 %v1061, 123
    %v1095 = vpop.permute.xlu0 %1094
    %1098 = vst.msk [vmem:[%s148 + $0x8] sm:$0xff] %vm40, %v1093
    %1099 = vst.msk [vmem:[%s148 + $0x10] sm:$0xff] %vm40, %v1095
    %1100 = vrot.lane.b32.xlu0 %v1060, 122
    %v1101 = vpop.permute.xlu0 %1100
    %1102 = vrot.lane.b32.xlu0 %v1061, 122
    %v1103 = vpop.permute.xlu0 %1102
    %1106 = vst.msk [vmem:[%s157 + $0x8] sm:$0xff] %vm40, %v1101
    %1107 = vst.msk [vmem:[%s157 + $0x10] sm:$0xff] %vm40, %v1103
    %1110 = vrot.lane.b32.xlu0 %v1046, 3
    %v1111 = vpop.permute.xlu0 %1110
    %1112 = vrot.lane.b32.xlu0 %v1047, 3
    %v1113 = vpop.permute.xlu0 %1112
    %v1116 = vsel %vm102, 0.0, %v1111
    %v1117 = vsel %vm102, 0.0, %v1113
    %v1118 = vsel %vm105, %v1116, 0.0
    %v1119 = vsel %vm105, %v1117, 0.0
    %1120 = vst.msk [vmem:[%s172 + $0x8] sm:$0xff] %vm40, %v1118
    %1121 = vst.msk [vmem:[%s172 + $0x10] sm:$0xff] %vm40, %v1119
    %1124 = vrot.lane.b32.xlu0 %v1118, 127
    %v1125 = vpop.permute.xlu0 %1124
    %1126 = vrot.lane.b32.xlu0 %v1119, 127
    %v1127 = vpop.permute.xlu0 %1126
    %1130 = vst.msk [vmem:[%s183 + $0x8] sm:$0xff] %vm40, %v1125
    %1131 = vst.msk [vmem:[%s183 + $0x10] sm:$0xff] %vm40, %v1127
    %1132 = vrot.lane.b32.xlu0 %v1118, 126
    %v1133 = vpop.permute.xlu0 %1132
    %1134 = vrot.lane.b32.xlu0 %v1119, 126
    %v1135 = vpop.permute.xlu0 %1134
    %1138 = vst.msk [vmem:[%s192 + $0x8] sm:$0xff] %vm40, %v1133
    %1139 = vst.msk [vmem:[%s192 + $0x10] sm:$0xff] %vm40, %v1135
    %1140 = vst.msk [vmem:[%s195 + $0x8] sm:$0xff] %vm40, %v1046
    %1141 = vst.msk [vmem:[%s195 + $0x10] sm:$0xff] %vm40, %v1047
    %1142 = vrot.lane.b32.xlu0 %v1118, 124
    %v1143 = vpop.permute.xlu0 %1142
    %1144 = vrot.lane.b32.xlu0 %v1119, 124
    %v1145 = vpop.permute.xlu0 %1144
    %1148 = vst.msk [vmem:[%s204 + $0x8] sm:$0xff] %vm40, %v1143
    %1149 = vst.msk [vmem:[%s204 + $0x10] sm:$0xff] %vm40, %v1145
    %1150 = vrot.lane.b32.xlu0 %v1118, 123
    %v1151 = vpop.permute.xlu0 %1150
    %1152 = vrot.lane.b32.xlu0 %v1119, 123
    %v1153 = vpop.permute.xlu0 %1152
    %1156 = vst.msk [vmem:[%s213 + $0x8] sm:$0xff] %vm40, %v1151
    %1157 = vst.msk [vmem:[%s213 + $0x10] sm:$0xff] %vm40, %v1153
    %1158 = vrot.lane.b32.xlu0 %v1118, 122
    %v1159 = vpop.permute.xlu0 %1158
    %1160 = vrot.lane.b32.xlu0 %v1119, 122
    %v1161 = vpop.permute.xlu0 %1160
    %1164 = vst.msk [vmem:[%s222 + $0x8] sm:$0xff] %vm40, %v1159
    %1165 = vst.msk [vmem:[%s222 + $0x10] sm:$0xff] %vm40, %v1161
    %s1166 = sld [smem:[#allocation7]]
    %v1167 = vld [vmem:[#allocation2 + $0x5] sm:$0xff]
    %v1168 = vld [vmem:[#allocation2 + $0xd] sm:$0xff]
    %v1169 = vstv %s1166
    %v1170 = vmul.f32 %v1169, %v1167
    %v1171 = vmul.f32 %v1169, %v1168
    %v1172 = vadd.f32 %v225, %v1170
    %v1173 = vadd.f32 %v225, %v1171
    %s1174 = sld [smem:[#allocation7 + $0x7]]
    %v1175 = vld [vmem:[#allocation2 + $0x6] sm:$0xff]
    %v1176 = vld [vmem:[#allocation2 + $0xe] sm:$0xff]
    %v1177 = vstv %s1174
    %v1178 = vmul.f32 %v1177, %v1175
    %v1179 = vmul.f32 %v1177, %v1176
    %v1180 = vadd.f32 %v1172, %v1178
    %v1181 = vadd.f32 %v1173, %v1179
    %s1182 = sld [smem:[#allocation7 + $0xe]]
    %v1183 = vld [vmem:[#allocation2 + $0x7] sm:$0xff]
    %v1184 = vld [vmem:[#allocation2 + $0xf] sm:$0xff]
    %v1185 = vstv %s1182
    %v1186 = vmul.f32 %v1185, %v1183
    %v1187 = vmul.f32 %v1185, %v1184
    %v1188 = vadd.f32 %v1180, %v1186
    %v1189 = vadd.f32 %v1181, %v1187
    %s1190 = sld [smem:[#allocation7 + $0x15]]
    %v1191 = vld [vmem:[#allocation2 + $0x8] sm:$0xff]
    %v1192 = vld [vmem:[#allocation2 + $0x10] sm:$0xff]
    %v1193 = vstv %s1190
    %v1194 = vmul.f32 %v1193, %v1191
    %v1195 = vmul.f32 %v1193, %v1192
    %v1196 = vadd.f32 %v1188, %v1194
    %v1197 = vadd.f32 %v1189, %v1195
    %s1198 = sld [smem:[#allocation7 + $0x1c]]
    %v1199 = vld [vmem:[#allocation2 + $0x9] sm:$0xff]
    %v1200 = vld [vmem:[#allocation2 + $0x11] sm:$0xff]
    %v1201 = vstv %s1198
    %v1202 = vmul.f32 %v1201, %v1199
    %v1203 = vmul.f32 %v1201, %v1200
    %v1204 = vadd.f32 %v1196, %v1202
    %v1205 = vadd.f32 %v1197, %v1203
    %s1206 = sld [smem:[#allocation7 + $0x23]]
    %v1207 = vld [vmem:[#allocation2 + $0xa] sm:$0xff]
    %v1208 = vld [vmem:[#allocation2 + $0x12] sm:$0xff]
    %v1209 = vstv %s1206
    %v1210 = vmul.f32 %v1209, %v1207
    %v1211 = vmul.f32 %v1209, %v1208
    %v1212 = vadd.f32 %v1204, %v1210
    %v1213 = vadd.f32 %v1205, %v1211
    %s1214 = sld [smem:[#allocation7 + $0x2a]]
    %v1215 = vld [vmem:[#allocation2 + $0xb] sm:$0xff]
    %v1216 = vld [vmem:[#allocation2 + $0x13] sm:$0xff]
    %v1217 = vstv %s1214
    %v1218 = vmul.f32 %v1217, %v1215
    %v1219 = vmul.f32 %v1217, %v1216
    %v1220 = vadd.f32 %v1212, %v1218
    %v1221 = vadd.f32 %v1213, %v1219
    %s1222 = sld [smem:[#allocation7 + $0x1]]
    %v1223 = vld [vmem:[%s118 + $0x5] sm:$0xff]
    %v1224 = vld [vmem:[%s118 + $0xd] sm:$0xff]
    %v1225 = vstv %s1222
    %v1226 = vmul.f32 %v1225, %v1223
    %v1227 = vmul.f32 %v1225, %v1224
    %v1228 = vadd.f32 %v1220, %v1226
    %v1229 = vadd.f32 %v1221, %v1227
    %s1230 = sld [smem:[#allocation7 + $0x8]]
    %v1231 = vld [vmem:[%s118 + $0x6] sm:$0xff]
    %v1232 = vld [vmem:[%s118 + $0xe] sm:$0xff]
    %v1233 = vstv %s1230
    %v1234 = vmul.f32 %v1233, %v1231
    %v1235 = vmul.f32 %v1233, %v1232
    %v1236 = vadd.f32 %v1228, %v1234
    %v1237 = vadd.f32 %v1229, %v1235
    %s1238 = sld [smem:[#allocation7 + $0xf]]
    %v1239 = vld [vmem:[%s118 + $0x7] sm:$0xff]
    %v1240 = vld [vmem:[%s118 + $0xf] sm:$0xff]
    %v1241 = vstv %s1238
    %v1242 = vmul.f32 %v1241, %v1239
    %v1243 = vmul.f32 %v1241, %v1240
    %v1244 = vadd.f32 %v1236, %v1242
    %v1245 = vadd.f32 %v1237, %v1243
    %s1246 = sld [smem:[#allocation7 + $0x16]]
    %v1247 = vld [vmem:[%s118 + $0x8] sm:$0xff]
    %v1248 = vld [vmem:[%s118 + $0x10] sm:$0xff]
    %v1249 = vstv %s1246
    %v1250 = vmul.f32 %v1249, %v1247
    %v1251 = vmul.f32 %v1249, %v1248
    %v1252 = vadd.f32 %v1244, %v1250
    %v1253 = vadd.f32 %v1245, %v1251
    %s1254 = sld [smem:[#allocation7 + $0x1d]]
    %v1255 = vld [vmem:[%s118 + $0x9] sm:$0xff]
    %v1256 = vld [vmem:[%s118 + $0x11] sm:$0xff]
    %v1257 = vstv %s1254
    %v1258 = vmul.f32 %v1257, %v1255
    %v1259 = vmul.f32 %v1257, %v1256
    %v1260 = vadd.f32 %v1252, %v1258
    %v1261 = vadd.f32 %v1253, %v1259
    %s1262 = sld [smem:[#allocation7 + $0x24]]
    %v1263 = vld [vmem:[%s118 + $0xa] sm:$0xff]
    %v1264 = vld [vmem:[%s118 + $0x12] sm:$0xff]
    %v1265 = vstv %s1262
    %v1266 = vmul.f32 %v1265, %v1263
    %v1267 = vmul.f32 %v1265, %v1264
    %v1268 = vadd.f32 %v1260, %v1266
    %v1269 = vadd.f32 %v1261, %v1267
    %s1270 = sld [smem:[#allocation7 + $0x2b]]
    %v1271 = vld [vmem:[%s118 + $0xb] sm:$0xff]
    %v1272 = vld [vmem:[%s118 + $0x13] sm:$0xff]
    %v1273 = vstv %s1270
    %v1274 = vmul.f32 %v1273, %v1271
    %v1275 = vmul.f32 %v1273, %v1272
    %v1276 = vadd.f32 %v1268, %v1274
    %v1277 = vadd.f32 %v1269, %v1275
    %s1278 = sld [smem:[#allocation7 + $0x2]]
    %v1279 = vld [vmem:[%s127 + $0x5] sm:$0xff]
    %v1280 = vld [vmem:[%s127 + $0xd] sm:$0xff]
    %v1281 = vstv %s1278
    %v1282 = vmul.f32 %v1281, %v1279
    %v1283 = vmul.f32 %v1281, %v1280
    %v1284 = vadd.f32 %v1276, %v1282
    %v1285 = vadd.f32 %v1277, %v1283
    %s1286 = sld [smem:[#allocation7 + $0x9]]
    %v1287 = vld [vmem:[%s127 + $0x6] sm:$0xff]
    %v1288 = vld [vmem:[%s127 + $0xe] sm:$0xff]
    %v1289 = vstv %s1286
    %v1290 = vmul.f32 %v1289, %v1287
    %v1291 = vmul.f32 %v1289, %v1288
    %v1292 = vadd.f32 %v1284, %v1290
    %v1293 = vadd.f32 %v1285, %v1291
    %s1294 = sld [smem:[#allocation7 + $0x10]]
    %v1295 = vld [vmem:[%s127 + $0x7] sm:$0xff]
    %v1296 = vld [vmem:[%s127 + $0xf] sm:$0xff]
    %v1297 = vstv %s1294
    %v1298 = vmul.f32 %v1297, %v1295
    %v1299 = vmul.f32 %v1297, %v1296
    %v1300 = vadd.f32 %v1292, %v1298
    %v1301 = vadd.f32 %v1293, %v1299
    %s1302 = sld [smem:[#allocation7 + $0x17]]
    %v1303 = vld [vmem:[%s127 + $0x8] sm:$0xff]
    %v1304 = vld [vmem:[%s127 + $0x10] sm:$0xff]
    %v1305 = vstv %s1302
    %v1306 = vmul.f32 %v1305, %v1303
    %v1307 = vmul.f32 %v1305, %v1304
    %v1308 = vadd.f32 %v1300, %v1306
    %v1309 = vadd.f32 %v1301, %v1307
    %s1310 = sld [smem:[#allocation7 + $0x1e]]
    %v1311 = vld [vmem:[%s127 + $0x9] sm:$0xff]
    %v1312 = vld [vmem:[%s127 + $0x11] sm:$0xff]
    %v1313 = vstv %s1310
    %v1314 = vmul.f32 %v1313, %v1311
    %v1315 = vmul.f32 %v1313, %v1312
    %v1316 = vadd.f32 %v1308, %v1314
    %v1317 = vadd.f32 %v1309, %v1315
    %s1318 = sld [smem:[#allocation7 + $0x25]]
    %v1319 = vld [vmem:[%s127 + $0xa] sm:$0xff]
    %v1320 = vld [vmem:[%s127 + $0x12] sm:$0xff]
    %v1321 = vstv %s1318
    %v1322 = vmul.f32 %v1321, %v1319
    %v1323 = vmul.f32 %v1321, %v1320
    %v1324 = vadd.f32 %v1316, %v1322
    %v1325 = vadd.f32 %v1317, %v1323
    %s1326 = sld [smem:[#allocation7 + $0x2c]]
    %v1327 = vld [vmem:[%s127 + $0xb] sm:$0xff]
    %v1328 = vld [vmem:[%s127 + $0x13] sm:$0xff]
    %v1329 = vstv %s1326
    %v1330 = vmul.f32 %v1329, %v1327
    %v1331 = vmul.f32 %v1329, %v1328
    %v1332 = vadd.f32 %v1324, %v1330
    %v1333 = vadd.f32 %v1325, %v1331
    %s1334 = sld [smem:[#allocation7 + $0x3]]
    %v1335 = vld [vmem:[%s130 + $0x5] sm:$0xff]
    %v1336 = vld [vmem:[%s130 + $0xd] sm:$0xff]
    %v1337 = vstv %s1334
    %v1338 = vmul.f32 %v1337, %v1335
    %v1339 = vmul.f32 %v1337, %v1336
    %v1340 = vadd.f32 %v1332, %v1338
    %v1341 = vadd.f32 %v1333, %v1339
    %s1342 = sld [smem:[#allocation7 + $0xa]]
    %v1343 = vld [vmem:[%s130 + $0x6] sm:$0xff]
    %v1344 = vld [vmem:[%s130 + $0xe] sm:$0xff]
    %v1345 = vstv %s1342
    %v1346 = vmul.f32 %v1345, %v1343
    %v1347 = vmul.f32 %v1345, %v1344
    %v1348 = vadd.f32 %v1340, %v1346
    %v1349 = vadd.f32 %v1341, %v1347
    %s1350 = sld [smem:[#allocation7 + $0x11]]
    %v1351 = vld [vmem:[%s130 + $0x7] sm:$0xff]
    %v1352 = vld [vmem:[%s130 + $0xf] sm:$0xff]
    %v1353 = vstv %s1350
    %v1354 = vmul.f32 %v1353, %v1351
    %v1355 = vmul.f32 %v1353, %v1352
    %v1356 = vadd.f32 %v1348, %v1354
    %v1357 = vadd.f32 %v1349, %v1355
    %s1358 = sld [smem:[#allocation7 + $0x18]]
    %v1359 = vld [vmem:[%s130 + $0x8] sm:$0xff]
    %v1360 = vld [vmem:[%s130 + $0x10] sm:$0xff]
    %v1361 = vstv %s1358
    %v1362 = vmul.f32 %v1361, %v1359
    %v1363 = vmul.f32 %v1361, %v1360
    %v1364 = vadd.f32 %v1356, %v1362
    %v1365 = vadd.f32 %v1357, %v1363
    %s1366 = sld [smem:[#allocation7 + $0x1f]]
    %v1367 = vld [vmem:[%s130 + $0x9] sm:$0xff]
    %v1368 = vld [vmem:[%s130 + $0x11] sm:$0xff]
    %v1369 = vstv %s1366
    %v1370 = vmul.f32 %v1369, %v1367
    %v1371 = vmul.f32 %v1369, %v1368
    %v1372 = vadd.f32 %v1364, %v1370
    %v1373 = vadd.f32 %v1365, %v1371
    %s1374 = sld [smem:[#allocation7 + $0x26]]
    %v1375 = vld [vmem:[%s130 + $0xa] sm:$0xff]
    %v1376 = vld [vmem:[%s130 + $0x12] sm:$0xff]
    %v1377 = vstv %s1374
    %v1378 = vmul.f32 %v1377, %v1375
    %v1379 = vmul.f32 %v1377, %v1376
    %v1380 = vadd.f32 %v1372, %v1378
    %v1381 = vadd.f32 %v1373, %v1379
    %s1382 = sld [smem:[#allocation7 + $0x2d]]
    %v1383 = vld [vmem:[%s130 + $0xb] sm:$0xff]
    %v1384 = vld [vmem:[%s130 + $0x13] sm:$0xff]
    %v1385 = vstv %s1382
    %v1386 = vmul.f32 %v1385, %v1383
    %v1387 = vmul.f32 %v1385, %v1384
    %v1388 = vadd.f32 %v1380, %v1386
    %v1389 = vadd.f32 %v1381, %v1387
    %s1390 = sld [smem:[#allocation7 + $0x4]]
    %v1391 = vld [vmem:[%s139 + $0x5] sm:$0xff]
    %v1392 = vld [vmem:[%s139 + $0xd] sm:$0xff]
    %v1393 = vstv %s1390
    %v1394 = vmul.f32 %v1393, %v1391
    %v1395 = vmul.f32 %v1393, %v1392
    %v1396 = vadd.f32 %v1388, %v1394
    %v1397 = vadd.f32 %v1389, %v1395
    %s1398 = sld [smem:[#allocation7 + $0xb]]
    %v1399 = vld [vmem:[%s139 + $0x6] sm:$0xff]
    %v1400 = vld [vmem:[%s139 + $0xe] sm:$0xff]
    %v1401 = vstv %s1398
    %v1402 = vmul.f32 %v1401, %v1399
    %v1403 = vmul.f32 %v1401, %v1400
    %v1404 = vadd.f32 %v1396, %v1402
    %v1405 = vadd.f32 %v1397, %v1403
    %s1406 = sld [smem:[#allocation7 + $0x12]]
    %v1407 = vld [vmem:[%s139 + $0x7] sm:$0xff]
    %v1408 = vld [vmem:[%s139 + $0xf] sm:$0xff]
    %v1409 = vstv %s1406
    %v1410 = vmul.f32 %v1409, %v1407
    %v1411 = vmul.f32 %v1409, %v1408
    %v1412 = vadd.f32 %v1404, %v1410
    %v1413 = vadd.f32 %v1405, %v1411
    %s1414 = sld [smem:[#allocation7 + $0x19]]
    %v1415 = vld [vmem:[%s139 + $0x8] sm:$0xff]
    %v1416 = vld [vmem:[%s139 + $0x10] sm:$0xff]
    %v1417 = vstv %s1414
    %v1418 = vmul.f32 %v1417, %v1415
    %v1419 = vmul.f32 %v1417, %v1416
    %v1420 = vadd.f32 %v1412, %v1418
    %v1421 = vadd.f32 %v1413, %v1419
    %s1422 = sld [smem:[#allocation7 + $0x20]]
    %v1423 = vld [vmem:[%s139 + $0x9] sm:$0xff]
    %v1424 = vld [vmem:[%s139 + $0x11] sm:$0xff]
    %v1425 = vstv %s1422
    %v1426 = vmul.f32 %v1425, %v1423
    %v1427 = vmul.f32 %v1425, %v1424
    %v1428 = vadd.f32 %v1420, %v1426
    %v1429 = vadd.f32 %v1421, %v1427
    %s1430 = sld [smem:[#allocation7 + $0x27]]
    %v1431 = vld [vmem:[%s139 + $0xa] sm:$0xff]
    %v1432 = vld [vmem:[%s139 + $0x12] sm:$0xff]
    %v1433 = vstv %s1430
    %v1434 = vmul.f32 %v1433, %v1431
    %v1435 = vmul.f32 %v1433, %v1432
    %v1436 = vadd.f32 %v1428, %v1434
    %v1437 = vadd.f32 %v1429, %v1435
    %s1438 = sld [smem:[#allocation7 + $0x2e]]
    %v1439 = vld [vmem:[%s139 + $0xb] sm:$0xff]
    %v1440 = vld [vmem:[%s139 + $0x13] sm:$0xff]
    %v1441 = vstv %s1438
    %v1442 = vmul.f32 %v1441, %v1439
    %v1443 = vmul.f32 %v1441, %v1440
    %v1444 = vadd.f32 %v1436, %v1442
    %v1445 = vadd.f32 %v1437, %v1443
    %s1446 = sld [smem:[#allocation7 + $0x5]]
    %v1447 = vld [vmem:[%s148 + $0x5] sm:$0xff]
    %v1448 = vld [vmem:[%s148 + $0xd] sm:$0xff]
    %v1449 = vstv %s1446
    %v1450 = vmul.f32 %v1449, %v1447
    %v1451 = vmul.f32 %v1449, %v1448
    %v1452 = vadd.f32 %v1444, %v1450
    %v1453 = vadd.f32 %v1445, %v1451
    %s1454 = sld [smem:[#allocation7 + $0xc]]
    %v1455 = vld [vmem:[%s148 + $0x6] sm:$0xff]
    %v1456 = vld [vmem:[%s148 + $0xe] sm:$0xff]
    %v1457 = vstv %s1454
    %v1458 = vmul.f32 %v1457, %v1455
    %v1459 = vmul.f32 %v1457, %v1456
    %v1460 = vadd.f32 %v1452, %v1458
    %v1461 = vadd.f32 %v1453, %v1459
    %s1462 = sld [smem:[#allocation7 + $0x13]]
    %v1463 = vld [vmem:[%s148 + $0x7] sm:$0xff]
    %v1464 = vld [vmem:[%s148 + $0xf] sm:$0xff]
    %v1465 = vstv %s1462
    %v1466 = vmul.f32 %v1465, %v1463
    %v1467 = vmul.f32 %v1465, %v1464
    %v1468 = vadd.f32 %v1460, %v1466
    %v1469 = vadd.f32 %v1461, %v1467
    %s1470 = sld [smem:[#allocation7 + $0x1a]]
    %v1471 = vld [vmem:[%s148 + $0x8] sm:$0xff]
    %v1472 = vld [vmem:[%s148 + $0x10] sm:$0xff]
    %v1473 = vstv %s1470
    %v1474 = vmul.f32 %v1473, %v1471
    %v1475 = vmul.f32 %v1473, %v1472
    %v1476 = vadd.f32 %v1468, %v1474
    %v1477 = vadd.f32 %v1469, %v1475
    %s1478 = sld [smem:[#allocation7 + $0x21]]
    %v1479 = vld [vmem:[%s148 + $0x9] sm:$0xff]
    %v1480 = vld [vmem:[%s148 + $0x11] sm:$0xff]
    %v1481 = vstv %s1478
    %v1482 = vmul.f32 %v1481, %v1479
    %v1483 = vmul.f32 %v1481, %v1480
    %v1484 = vadd.f32 %v1476, %v1482
    %v1485 = vadd.f32 %v1477, %v1483
    %s1486 = sld [smem:[#allocation7 + $0x28]]
    %v1487 = vld [vmem:[%s148 + $0xa] sm:$0xff]
    %v1488 = vld [vmem:[%s148 + $0x12] sm:$0xff]
    %v1489 = vstv %s1486
    %v1490 = vmul.f32 %v1489, %v1487
    %v1491 = vmul.f32 %v1489, %v1488
    %v1492 = vadd.f32 %v1484, %v1490
    %v1493 = vadd.f32 %v1485, %v1491
    %s1494 = sld [smem:[#allocation7 + $0x2f]]
    %v1495 = vld [vmem:[%s148 + $0xb] sm:$0xff]
    %v1496 = vld [vmem:[%s148 + $0x13] sm:$0xff]
    %v1497 = vstv %s1494
    %v1498 = vmul.f32 %v1497, %v1495
    %v1499 = vmul.f32 %v1497, %v1496
    %v1500 = vadd.f32 %v1492, %v1498
    %v1501 = vadd.f32 %v1493, %v1499
    %s1502 = sld [smem:[#allocation7 + $0x6]]
    %v1503 = vld [vmem:[%s157 + $0x5] sm:$0xff]
    %v1504 = vld [vmem:[%s157 + $0xd] sm:$0xff]
    %v1505 = vstv %s1502
    %v1506 = vmul.f32 %v1505, %v1503
    %v1507 = vmul.f32 %v1505, %v1504
    %v1508 = vadd.f32 %v1500, %v1506
    %v1509 = vadd.f32 %v1501, %v1507
    %s1510 = sld [smem:[#allocation7 + $0xd]]
    %v1511 = vld [vmem:[%s157 + $0x6] sm:$0xff]
    %v1512 = vld [vmem:[%s157 + $0xe] sm:$0xff]
    %v1513 = vstv %s1510
    %v1514 = vmul.f32 %v1513, %v1511
    %v1515 = vmul.f32 %v1513, %v1512
    %v1516 = vadd.f32 %v1508, %v1514
    %v1517 = vadd.f32 %v1509, %v1515
    %s1518 = sld [smem:[#allocation7 + $0x14]]
    %v1519 = vld [vmem:[%s157 + $0x7] sm:$0xff]
    %v1520 = vld [vmem:[%s157 + $0xf] sm:$0xff]
    %v1521 = vstv %s1518
    %v1522 = vmul.f32 %v1521, %v1519
    %v1523 = vmul.f32 %v1521, %v1520
    %v1524 = vadd.f32 %v1516, %v1522
    %v1525 = vadd.f32 %v1517, %v1523
    %s1526 = sld [smem:[#allocation7 + $0x1b]]
    %v1527 = vld [vmem:[%s157 + $0x8] sm:$0xff]
    %v1528 = vld [vmem:[%s157 + $0x10] sm:$0xff]
    %v1529 = vstv %s1526
    %v1530 = vmul.f32 %v1529, %v1527
    %v1531 = vmul.f32 %v1529, %v1528
    %v1532 = vadd.f32 %v1524, %v1530
    %v1533 = vadd.f32 %v1525, %v1531
    %s1534 = sld [smem:[#allocation7 + $0x22]]
    %v1535 = vld [vmem:[%s157 + $0x9] sm:$0xff]
    %v1536 = vld [vmem:[%s157 + $0x11] sm:$0xff]
    %v1537 = vstv %s1534
    %v1538 = vmul.f32 %v1537, %v1535
    %v1539 = vmul.f32 %v1537, %v1536
    %v1540 = vadd.f32 %v1532, %v1538
    %v1541 = vadd.f32 %v1533, %v1539
    %s1542 = sld [smem:[#allocation7 + $0x29]]
    %v1543 = vld [vmem:[%s157 + $0xa] sm:$0xff]
    %v1544 = vld [vmem:[%s157 + $0x12] sm:$0xff]
    %v1545 = vstv %s1542
    %v1546 = vmul.f32 %v1545, %v1543
    %v1547 = vmul.f32 %v1545, %v1544
    %v1548 = vadd.f32 %v1540, %v1546
    %v1549 = vadd.f32 %v1541, %v1547
    %s1550 = sld [smem:[#allocation7 + $0x30]]
    %v1551 = vld [vmem:[%s157 + $0xb] sm:$0xff]
    %v1552 = vld [vmem:[%s157 + $0x13] sm:$0xff]
    %v1553 = vstv %s1550
    %v1554 = vmul.f32 %v1553, %v1551
    %v1555 = vmul.f32 %v1553, %v1552
    %v1556 = vadd.f32 %v1548, %v1554
    %v1557 = vadd.f32 %v1549, %v1555
    %s1558 = sld [smem:[#allocation7 + $0x31]]
    %v1559 = vld [vmem:[%s172 + $0x5] sm:$0xff]
    %v1560 = vld [vmem:[%s172 + $0xd] sm:$0xff]
    %v1561 = vstv %s1558
    %v1562 = vmul.f32 %v1561, %v1559
    %v1563 = vmul.f32 %v1561, %v1560
    %v1564 = vadd.f32 %v1556, %v1562
    %v1565 = vadd.f32 %v1557, %v1563
    %s1566 = sld [smem:[#allocation7 + $0x38]]
    %v1567 = vld [vmem:[%s172 + $0x6] sm:$0xff]
    %v1568 = vld [vmem:[%s172 + $0xe] sm:$0xff]
    %v1569 = vstv %s1566
    %v1570 = vmul.f32 %v1569, %v1567
    %v1571 = vmul.f32 %v1569, %v1568
    %v1572 = vadd.f32 %v1564, %v1570
    %v1573 = vadd.f32 %v1565, %v1571
    %s1574 = sld [smem:[#allocation7 + $0x3f]]
    %v1575 = vld [vmem:[%s172 + $0x7] sm:$0xff]
    %v1576 = vld [vmem:[%s172 + $0xf] sm:$0xff]
    %v1577 = vstv %s1574
    %v1578 = vmul.f32 %v1577, %v1575
    %v1579 = vmul.f32 %v1577, %v1576
    %v1580 = vadd.f32 %v1572, %v1578
    %v1581 = vadd.f32 %v1573, %v1579
    %s1582 = sld [smem:[#allocation7 + $0x46]]
    %v1583 = vld [vmem:[%s172 + $0x8] sm:$0xff]
    %v1584 = vld [vmem:[%s172 + $0x10] sm:$0xff]
    %v1585 = vstv %s1582
    %v1586 = vmul.f32 %v1585, %v1583
    %v1587 = vmul.f32 %v1585, %v1584
    %v1588 = vadd.f32 %v1580, %v1586
    %v1589 = vadd.f32 %v1581, %v1587
    %s1590 = sld [smem:[#allocation7 + $0x4d]]
    %v1591 = vld [vmem:[%s172 + $0x9] sm:$0xff]
    %v1592 = vld [vmem:[%s172 + $0x11] sm:$0xff]
    %v1593 = vstv %s1590
    %v1594 = vmul.f32 %v1593, %v1591
    %v1595 = vmul.f32 %v1593, %v1592
    %v1596 = vadd.f32 %v1588, %v1594
    %v1597 = vadd.f32 %v1589, %v1595
    %s1598 = sld [smem:[#allocation7 + $0x54]]
    %v1599 = vld [vmem:[%s172 + $0xa] sm:$0xff]
    %v1600 = vld [vmem:[%s172 + $0x12] sm:$0xff]
    %v1601 = vstv %s1598
    %v1602 = vmul.f32 %v1601, %v1599
    %v1603 = vmul.f32 %v1601, %v1600
    %v1604 = vadd.f32 %v1596, %v1602
    %v1605 = vadd.f32 %v1597, %v1603
    %s1606 = sld [smem:[#allocation7 + $0x5b]]
    %v1607 = vld [vmem:[%s172 + $0xb] sm:$0xff]
    %v1608 = vld [vmem:[%s172 + $0x13] sm:$0xff]
    %v1609 = vstv %s1606
    %v1610 = vmul.f32 %v1609, %v1607
    %v1611 = vmul.f32 %v1609, %v1608
    %v1612 = vadd.f32 %v1604, %v1610
    %v1613 = vadd.f32 %v1605, %v1611
    %s1614 = sld [smem:[#allocation7 + $0x32]]
    %v1615 = vld [vmem:[%s183 + $0x5] sm:$0xff]
    %v1616 = vld [vmem:[%s183 + $0xd] sm:$0xff]
    %v1617 = vstv %s1614
    %v1618 = vmul.f32 %v1617, %v1615
    %v1619 = vmul.f32 %v1617, %v1616
    %v1620 = vadd.f32 %v1612, %v1618
    %v1621 = vadd.f32 %v1613, %v1619
    %s1622 = sld [smem:[#allocation7 + $0x39]]
    %v1623 = vld [vmem:[%s183 + $0x6] sm:$0xff]
    %v1624 = vld [vmem:[%s183 + $0xe] sm:$0xff]
    %v1625 = vstv %s1622
    %v1626 = vmul.f32 %v1625, %v1623
    %v1627 = vmul.f32 %v1625, %v1624
    %v1628 = vadd.f32 %v1620, %v1626
    %v1629 = vadd.f32 %v1621, %v1627
    %s1630 = sld [smem:[#allocation7 + $0x40]]
    %v1631 = vld [vmem:[%s183 + $0x7] sm:$0xff]
    %v1632 = vld [vmem:[%s183 + $0xf] sm:$0xff]
    %v1633 = vstv %s1630
    %v1634 = vmul.f32 %v1633, %v1631
    %v1635 = vmul.f32 %v1633, %v1632
    %v1636 = vadd.f32 %v1628, %v1634
    %v1637 = vadd.f32 %v1629, %v1635
    %s1638 = sld [smem:[#allocation7 + $0x47]]
    %v1639 = vld [vmem:[%s183 + $0x8] sm:$0xff]
    %v1640 = vld [vmem:[%s183 + $0x10] sm:$0xff]
    %v1641 = vstv %s1638
    %v1642 = vmul.f32 %v1641, %v1639
    %v1643 = vmul.f32 %v1641, %v1640
    %v1644 = vadd.f32 %v1636, %v1642
    %v1645 = vadd.f32 %v1637, %v1643
    %s1646 = sld [smem:[#allocation7 + $0x4e]]
    %v1647 = vld [vmem:[%s183 + $0x9] sm:$0xff]
    %v1648 = vld [vmem:[%s183 + $0x11] sm:$0xff]
    %v1649 = vstv %s1646
    %v1650 = vmul.f32 %v1649, %v1647
    %v1651 = vmul.f32 %v1649, %v1648
    %v1652 = vadd.f32 %v1644, %v1650
    %v1653 = vadd.f32 %v1645, %v1651
    %s1654 = sld [smem:[#allocation7 + $0x55]]
    %v1655 = vld [vmem:[%s183 + $0xa] sm:$0xff]
    %v1656 = vld [vmem:[%s183 + $0x12] sm:$0xff]
    %v1657 = vstv %s1654
    %v1658 = vmul.f32 %v1657, %v1655
    %v1659 = vmul.f32 %v1657, %v1656
    %v1660 = vadd.f32 %v1652, %v1658
    %v1661 = vadd.f32 %v1653, %v1659
    %s1662 = sld [smem:[#allocation7 + $0x5c]]
    %v1663 = vld [vmem:[%s183 + $0xb] sm:$0xff]
    %v1664 = vld [vmem:[%s183 + $0x13] sm:$0xff]
    %v1665 = vstv %s1662
    %v1666 = vmul.f32 %v1665, %v1663
    %v1667 = vmul.f32 %v1665, %v1664
    %v1668 = vadd.f32 %v1660, %v1666
    %v1669 = vadd.f32 %v1661, %v1667
    %s1670 = sld [smem:[#allocation7 + $0x33]]
    %v1671 = vld [vmem:[%s192 + $0x5] sm:$0xff]
    %v1672 = vld [vmem:[%s192 + $0xd] sm:$0xff]
    %v1673 = vstv %s1670
    %v1674 = vmul.f32 %v1673, %v1671
    %v1675 = vmul.f32 %v1673, %v1672
    %v1676 = vadd.f32 %v1668, %v1674
    %v1677 = vadd.f32 %v1669, %v1675
    %s1678 = sld [smem:[#allocation7 + $0x3a]]
    %v1679 = vld [vmem:[%s192 + $0x6] sm:$0xff]
    %v1680 = vld [vmem:[%s192 + $0xe] sm:$0xff]
    %v1681 = vstv %s1678
    %v1682 = vmul.f32 %v1681, %v1679
    %v1683 = vmul.f32 %v1681, %v1680
    %v1684 = vadd.f32 %v1676, %v1682
    %v1685 = vadd.f32 %v1677, %v1683
    %s1686 = sld [smem:[#allocation7 + $0x41]]
    %v1687 = vld [vmem:[%s192 + $0x7] sm:$0xff]
    %v1688 = vld [vmem:[%s192 + $0xf] sm:$0xff]
    %v1689 = vstv %s1686
    %v1690 = vmul.f32 %v1689, %v1687
    %v1691 = vmul.f32 %v1689, %v1688
    %v1692 = vadd.f32 %v1684, %v1690
    %v1693 = vadd.f32 %v1685, %v1691
    %s1694 = sld [smem:[#allocation7 + $0x48]]
    %v1695 = vld [vmem:[%s192 + $0x8] sm:$0xff]
    %v1696 = vld [vmem:[%s192 + $0x10] sm:$0xff]
    %v1697 = vstv %s1694
    %v1698 = vmul.f32 %v1697, %v1695
    %v1699 = vmul.f32 %v1697, %v1696
    %v1700 = vadd.f32 %v1692, %v1698
    %v1701 = vadd.f32 %v1693, %v1699
    %s1702 = sld [smem:[#allocation7 + $0x4f]]
    %v1703 = vld [vmem:[%s192 + $0x9] sm:$0xff]
    %v1704 = vld [vmem:[%s192 + $0x11] sm:$0xff]
    %v1705 = vstv %s1702
    %v1706 = vmul.f32 %v1705, %v1703
    %v1707 = vmul.f32 %v1705, %v1704
    %v1708 = vadd.f32 %v1700, %v1706
    %v1709 = vadd.f32 %v1701, %v1707
    %s1710 = sld [smem:[#allocation7 + $0x56]]
    %v1711 = vld [vmem:[%s192 + $0xa] sm:$0xff]
    %v1712 = vld [vmem:[%s192 + $0x12] sm:$0xff]
    %v1713 = vstv %s1710
    %v1714 = vmul.f32 %v1713, %v1711
    %v1715 = vmul.f32 %v1713, %v1712
    %v1716 = vadd.f32 %v1708, %v1714
    %v1717 = vadd.f32 %v1709, %v1715
    %s1718 = sld [smem:[#allocation7 + $0x5d]]
    %v1719 = vld [vmem:[%s192 + $0xb] sm:$0xff]
    %v1720 = vld [vmem:[%s192 + $0x13] sm:$0xff]
    %v1721 = vstv %s1718
    %v1722 = vmul.f32 %v1721, %v1719
    %v1723 = vmul.f32 %v1721, %v1720
    %v1724 = vadd.f32 %v1716, %v1722
    %v1725 = vadd.f32 %v1717, %v1723
    %s1726 = sld [smem:[#allocation7 + $0x34]]
    %v1727 = vld [vmem:[%s195 + $0x5] sm:$0xff]
    %v1728 = vld [vmem:[%s195 + $0xd] sm:$0xff]
    %v1729 = vstv %s1726
    %v1730 = vmul.f32 %v1729, %v1727
    %v1731 = vmul.f32 %v1729, %v1728
    %v1732 = vadd.f32 %v1724, %v1730
    %v1733 = vadd.f32 %v1725, %v1731
    %s1734 = sld [smem:[#allocation7 + $0x3b]]
    %v1735 = vld [vmem:[%s195 + $0x6] sm:$0xff]
    %v1736 = vld [vmem:[%s195 + $0xe] sm:$0xff]
    %v1737 = vstv %s1734
    %v1738 = vmul.f32 %v1737, %v1735
    %v1739 = vmul.f32 %v1737, %v1736
    %v1740 = vadd.f32 %v1732, %v1738
    %v1741 = vadd.f32 %v1733, %v1739
    %s1742 = sld [smem:[#allocation7 + $0x42]]
    %v1743 = vld [vmem:[%s195 + $0x7] sm:$0xff]
    %v1744 = vld [vmem:[%s195 + $0xf] sm:$0xff]
    %v1745 = vstv %s1742
    %v1746 = vmul.f32 %v1745, %v1743
    %v1747 = vmul.f32 %v1745, %v1744
    %v1748 = vadd.f32 %v1740, %v1746
    %v1749 = vadd.f32 %v1741, %v1747
    %s1750 = sld [smem:[#allocation7 + $0x49]]
    %v1751 = vld [vmem:[%s195 + $0x8] sm:$0xff]
    %v1752 = vld [vmem:[%s195 + $0x10] sm:$0xff]
    %v1753 = vstv %s1750
    %v1754 = vmul.f32 %v1753, %v1751
    %v1755 = vmul.f32 %v1753, %v1752
    %v1756 = vadd.f32 %v1748, %v1754
    %v1757 = vadd.f32 %v1749, %v1755
    %s1758 = sld [smem:[#allocation7 + $0x50]]
    %v1759 = vld [vmem:[%s195 + $0x9] sm:$0xff]
    %v1760 = vld [vmem:[%s195 + $0x11] sm:$0xff]
    %v1761 = vstv %s1758
    %v1762 = vmul.f32 %v1761, %v1759
    %v1763 = vmul.f32 %v1761, %v1760
    %v1764 = vadd.f32 %v1756, %v1762
    %v1765 = vadd.f32 %v1757, %v1763
    %s1766 = sld [smem:[#allocation7 + $0x57]]
    %v1767 = vld [vmem:[%s195 + $0xa] sm:$0xff]
    %v1768 = vld [vmem:[%s195 + $0x12] sm:$0xff]
    %v1769 = vstv %s1766
    %v1770 = vmul.f32 %v1769, %v1767
    %v1771 = vmul.f32 %v1769, %v1768
    %v1772 = vadd.f32 %v1764, %v1770
    %v1773 = vadd.f32 %v1765, %v1771
    %s1774 = sld [smem:[#allocation7 + $0x5e]]
    %v1775 = vld [vmem:[%s195 + $0xb] sm:$0xff]
    %v1776 = vld [vmem:[%s195 + $0x13] sm:$0xff]
    %v1777 = vstv %s1774
    %v1778 = vmul.f32 %v1777, %v1775
    %v1779 = vmul.f32 %v1777, %v1776
    %v1780 = vadd.f32 %v1772, %v1778
    %v1781 = vadd.f32 %v1773, %v1779
    %s1782 = sld [smem:[#allocation7 + $0x35]]
    %v1783 = vld [vmem:[%s204 + $0x5] sm:$0xff]
    %v1784 = vld [vmem:[%s204 + $0xd] sm:$0xff]
    %v1785 = vstv %s1782
    %v1786 = vmul.f32 %v1785, %v1783
    %v1787 = vmul.f32 %v1785, %v1784
    %v1788 = vadd.f32 %v1780, %v1786
    %v1789 = vadd.f32 %v1781, %v1787
    %s1790 = sld [smem:[#allocation7 + $0x3c]]
    %v1791 = vld [vmem:[%s204 + $0x6] sm:$0xff]
    %v1792 = vld [vmem:[%s204 + $0xe] sm:$0xff]
    %v1793 = vstv %s1790
    %v1794 = vmul.f32 %v1793, %v1791
    %v1795 = vmul.f32 %v1793, %v1792
    %v1796 = vadd.f32 %v1788, %v1794
    %v1797 = vadd.f32 %v1789, %v1795
    %s1798 = sld [smem:[#allocation7 + $0x43]]
    %v1799 = vld [vmem:[%s204 + $0x7] sm:$0xff]
    %v1800 = vld [vmem:[%s204 + $0xf] sm:$0xff]
    %v1801 = vstv %s1798
    %v1802 = vmul.f32 %v1801, %v1799
    %v1803 = vmul.f32 %v1801, %v1800
    %v1804 = vadd.f32 %v1796, %v1802
    %v1805 = vadd.f32 %v1797, %v1803
    %s1806 = sld [smem:[#allocation7 + $0x4a]]
    %v1807 = vld [vmem:[%s204 + $0x8] sm:$0xff]
    %v1808 = vld [vmem:[%s204 + $0x10] sm:$0xff]
    %v1809 = vstv %s1806
    %v1810 = vmul.f32 %v1809, %v1807
    %v1811 = vmul.f32 %v1809, %v1808
    %v1812 = vadd.f32 %v1804, %v1810
    %v1813 = vadd.f32 %v1805, %v1811
    %s1814 = sld [smem:[#allocation7 + $0x51]]
    %v1815 = vld [vmem:[%s204 + $0x9] sm:$0xff]
    %v1816 = vld [vmem:[%s204 + $0x11] sm:$0xff]
    %v1817 = vstv %s1814
    %v1818 = vmul.f32 %v1817, %v1815
    %v1819 = vmul.f32 %v1817, %v1816
    %v1820 = vadd.f32 %v1812, %v1818
    %v1821 = vadd.f32 %v1813, %v1819
    %s1822 = sld [smem:[#allocation7 + $0x58]]
    %v1823 = vld [vmem:[%s204 + $0xa] sm:$0xff]
    %v1824 = vld [vmem:[%s204 + $0x12] sm:$0xff]
    %v1825 = vstv %s1822
    %v1826 = vmul.f32 %v1825, %v1823
    %v1827 = vmul.f32 %v1825, %v1824
    %v1828 = vadd.f32 %v1820, %v1826
    %v1829 = vadd.f32 %v1821, %v1827
    %s1830 = sld [smem:[#allocation7 + $0x5f]]
    %v1831 = vld [vmem:[%s204 + $0xb] sm:$0xff]
    %v1832 = vld [vmem:[%s204 + $0x13] sm:$0xff]
    %v1833 = vstv %s1830
    %v1834 = vmul.f32 %v1833, %v1831
    %v1835 = vmul.f32 %v1833, %v1832
    %v1836 = vadd.f32 %v1828, %v1834
    %v1837 = vadd.f32 %v1829, %v1835
    %s1838 = sld [smem:[#allocation7 + $0x36]]
    %v1839 = vld [vmem:[%s213 + $0x5] sm:$0xff]
    %v1840 = vld [vmem:[%s213 + $0xd] sm:$0xff]
    %v1841 = vstv %s1838
    %v1842 = vmul.f32 %v1841, %v1839
    %v1843 = vmul.f32 %v1841, %v1840
    %v1844 = vadd.f32 %v1836, %v1842
    %v1845 = vadd.f32 %v1837, %v1843
    %s1846 = sld [smem:[#allocation7 + $0x3d]]
    %v1847 = vld [vmem:[%s213 + $0x6] sm:$0xff]
    %v1848 = vld [vmem:[%s213 + $0xe] sm:$0xff]
    %v1849 = vstv %s1846
    %v1850 = vmul.f32 %v1849, %v1847
    %v1851 = vmul.f32 %v1849, %v1848
    %v1852 = vadd.f32 %v1844, %v1850
    %v1853 = vadd.f32 %v1845, %v1851
    %s1854 = sld [smem:[#allocation7 + $0x44]]
    %v1855 = vld [vmem:[%s213 + $0x7] sm:$0xff]
    %v1856 = vld [vmem:[%s213 + $0xf] sm:$0xff]
    %v1857 = vstv %s1854
    %v1858 = vmul.f32 %v1857, %v1855
    %v1859 = vmul.f32 %v1857, %v1856
    %v1860 = vadd.f32 %v1852, %v1858
    %v1861 = vadd.f32 %v1853, %v1859
    %s1862 = sld [smem:[#allocation7 + $0x4b]]
    %v1863 = vld [vmem:[%s213 + $0x8] sm:$0xff]
    %v1864 = vld [vmem:[%s213 + $0x10] sm:$0xff]
    %v1865 = vstv %s1862
    %v1866 = vmul.f32 %v1865, %v1863
    %v1867 = vmul.f32 %v1865, %v1864
    %v1868 = vadd.f32 %v1860, %v1866
    %v1869 = vadd.f32 %v1861, %v1867
    %s1870 = sld [smem:[#allocation7 + $0x52]]
    %v1871 = vld [vmem:[%s213 + $0x9] sm:$0xff]
    %v1872 = vld [vmem:[%s213 + $0x11] sm:$0xff]
    %v1873 = vstv %s1870
    %v1874 = vmul.f32 %v1873, %v1871
    %v1875 = vmul.f32 %v1873, %v1872
    %v1876 = vadd.f32 %v1868, %v1874
    %v1877 = vadd.f32 %v1869, %v1875
    %s1878 = sld [smem:[#allocation7 + $0x59]]
    %v1879 = vld [vmem:[%s213 + $0xa] sm:$0xff]
    %v1880 = vld [vmem:[%s213 + $0x12] sm:$0xff]
    %v1881 = vstv %s1878
    %v1882 = vmul.f32 %v1881, %v1879
    %v1883 = vmul.f32 %v1881, %v1880
    %v1884 = vadd.f32 %v1876, %v1882
    %v1885 = vadd.f32 %v1877, %v1883
    %s1886 = sld [smem:[#allocation7 + $0x60]]
    %v1887 = vld [vmem:[%s213 + $0xb] sm:$0xff]
    %v1888 = vld [vmem:[%s213 + $0x13] sm:$0xff]
    %v1889 = vstv %s1886
    %v1890 = vmul.f32 %v1889, %v1887
    %v1891 = vmul.f32 %v1889, %v1888
    %v1892 = vadd.f32 %v1884, %v1890
    %v1893 = vadd.f32 %v1885, %v1891
    %s1894 = sld [smem:[#allocation7 + $0x37]]
    %v1895 = vld [vmem:[%s222 + $0x5] sm:$0xff]
    %v1896 = vld [vmem:[%s222 + $0xd] sm:$0xff]
    %v1897 = vstv %s1894
    %v1898 = vmul.f32 %v1897, %v1895
    %v1899 = vmul.f32 %v1897, %v1896
    %v1900 = vadd.f32 %v1892, %v1898
    %v1901 = vadd.f32 %v1893, %v1899
    %s1902 = sld [smem:[#allocation7 + $0x3e]]
    %v1903 = vld [vmem:[%s222 + $0x6] sm:$0xff]
    %v1904 = vld [vmem:[%s222 + $0xe] sm:$0xff]
    %v1905 = vstv %s1902
    %v1906 = vmul.f32 %v1905, %v1903
    %v1907 = vmul.f32 %v1905, %v1904
    %v1908 = vadd.f32 %v1900, %v1906
    %v1909 = vadd.f32 %v1901, %v1907
    %s1910 = sld [smem:[#allocation7 + $0x45]]
    %v1911 = vld [vmem:[%s222 + $0x7] sm:$0xff]
    %v1912 = vld [vmem:[%s222 + $0xf] sm:$0xff]
    %v1913 = vstv %s1910
    %v1914 = vmul.f32 %v1913, %v1911
    %v1915 = vmul.f32 %v1913, %v1912
    %v1916 = vadd.f32 %v1908, %v1914
    %v1917 = vadd.f32 %v1909, %v1915
    %s1918 = sld [smem:[#allocation7 + $0x4c]]
    %v1919 = vld [vmem:[%s222 + $0x8] sm:$0xff]
    %v1920 = vld [vmem:[%s222 + $0x10] sm:$0xff]
    %v1921 = vstv %s1918
    %v1922 = vmul.f32 %v1921, %v1919
    %v1923 = vmul.f32 %v1921, %v1920
    %v1924 = vadd.f32 %v1916, %v1922
    %v1925 = vadd.f32 %v1917, %v1923
    %s1926 = sld [smem:[#allocation7 + $0x53]]
    %v1927 = vld [vmem:[%s222 + $0x9] sm:$0xff]
    %v1928 = vld [vmem:[%s222 + $0x11] sm:$0xff]
    %v1929 = vstv %s1926
    %v1930 = vmul.f32 %v1929, %v1927
    %v1931 = vmul.f32 %v1929, %v1928
    %v1932 = vadd.f32 %v1924, %v1930
    %v1933 = vadd.f32 %v1925, %v1931
    %s1934 = sld [smem:[#allocation7 + $0x5a]]
    %v1935 = vld [vmem:[%s222 + $0xa] sm:$0xff]
    %v1936 = vld [vmem:[%s222 + $0x12] sm:$0xff]
    %v1937 = vstv %s1934
    %v1938 = vmul.f32 %v1937, %v1935
    %v1939 = vmul.f32 %v1937, %v1936
    %v1940 = vadd.f32 %v1932, %v1938
    %v1941 = vadd.f32 %v1933, %v1939
    %s1942 = sld [smem:[#allocation7 + $0x61]]
    %v1943 = vld [vmem:[%s222 + $0xb] sm:$0xff]
    %v1944 = vld [vmem:[%s222 + $0x13] sm:$0xff]
    %v1945 = vstv %s1942
    %v1946 = vmul.f32 %v1945, %v1943
    %v1947 = vmul.f32 %v1945, %v1944
    %v1948 = vadd.f32 %v1940, %v1946
    %v1949 = vadd.f32 %v1941, %v1947
    %v1950 = vxor.u32 %v1948, 2147483648
    %v1951 = vxor.u32 %v1949, 2147483648
    %v1952 = vmul.f32 %v1950, 1.442695
    %v1953 = vpow.pop %v1952
    %v1954 = vmul.f32 %v1951, 1.442695
    %v1955 = vpow.pop %v1954
    %v1956 = vadd.f32 %v1953, 1.0
    %v1957 = vadd.f32 %v1955, 1.0
    %v1958 = vrcp.pop %v1956
    %v1959 = vmul.f32 1.0, %v1958
    %v1960 = vrcp.pop %v1957
    %v1961 = vmul.f32 1.0, %v1960
    %s1962 = scalar_lea.vmem [#allocation8], 16
    %1963 = vst.msk [vmem:[%s1962] sm:$0xff] %vm40, %v1959
    %1964 = vst.msk [vmem:[%s1962 + $0x8] sm:$0xff] %vm40, %v1961
    // Predicated region
    $region18: #{tpu_custom_call.1} parent=1 // pred_check
      _
    $region19: #{tpu_custom_call.1} parent=1 // pred_check_branch
      %1966 = sbr.rel (0) target = $region21
    $region20: #{tpu_custom_call.1} parent=1 // pred_region
      %s1968 = ssub.s32 512, 512
      %1969 = vsyncadd [#allocation5], %s1968
      %s1970 = sshll.u32 [#allocation8], 4
      %s1971 = int_to_ptr.vmem [resolvable:$true] %s1970
      %1976 = dma.vmem_to_hbm [thread:$0]  %s1971, 512, %s2, [#allocation5], 128, 128, 8
    $region21: #{tpu_custom_call.1} parent=1 // pred_fallthru
      _
    // Predicated region
    $region22: #{tpu_custom_call.1} parent=1 // pred_check
      _
    $region23: #{tpu_custom_call.1} parent=1 // pred_check_branch
      %1978 = sbr.rel (0) target = $region25
    $region24: #{tpu_custom_call.1} parent=1 // pred_region
      %1979 = dma.done [#allocation5], 512
    $region25: #{tpu_custom_call.1} parent=1 // pred_fallthru
      _
    %1980 = vsyncpa [#allocation4], 1
    %1981 = vsyncpa [#allocation5], 1
    %1982 = vsyncpa [#allocation6], 1

</llo_original>
